<compile_context>
chip_gen: v7x
topology: tpu7x:2x2x1
jax: 0.10.0
libtpu: 0.0.40
codegen_flags: <defaults>
</compile_context>

<pallas_src>
import functools

import jax
import jax.numpy as jnp
from jax.experimental import pallas as pl
from jax.experimental.pallas import tpu as pltpu


def _conv_relu_pool(a3, w_flat, b):
    """Conv1d(k=3, pad=1) + bias + ReLU + MaxPool1d(2) on a channels-last tile.

    a3:     (TB, L, C) f32 activations.
    w_flat: (3*C, Cout) bf16, rows ordered [tap k=0 | k=1 | k=2], Cin-major inside a tap.
    b:      (1, Cout) f32.
    returns (TB, L//2, Cout) f32.
    """
    TB, L, C = a3.shape
    Cout = w_flat.shape[-1]

    x = a3.astype(w_flat.dtype)                  # cast to bf16 once, before im2col
    z = jnp.zeros((TB, 1, C), x.dtype)           # conv zero-padding rows

    # fused 3-tap im2col -> ONE MXU matmul of depth 3*C (bf16 operands, f32 accumulation)
    lhs = jnp.concatenate(
        [jnp.concatenate([z, x[:, : L - 1, :]], axis=1),   # x[l-1]  (tap k=0)
         x,                                                # x[l]    (tap k=1)
         jnp.concatenate([x[:, 1:, :], z], axis=1)],       # x[l+1]  (tap k=2)
        axis=-1)                                           # (TB, L, 3C)

    y = jnp.dot(lhs.reshape(TB * L, 3 * C), w_flat,
                preferred_element_type=jnp.float32)        # (TB*L, Cout)
    y = jnp.maximum(y + b, 0.0)                            # bias + ReLU (f32)

    # MaxPool1d(2): adjacent length rows -> max over the pair axis (no lane relayout)
    y = y.reshape(TB, L // 2, 2, Cout)
    return jnp.max(y, axis=2)                              # (TB, L//2, Cout)


def eeg_cnn_kernel(x_ref, w1_ref, b1_ref, w2_ref, b2_ref,
                   wf1_ref, bf1_ref, wf2_ref, bf2_ref, o_ref, *, seq_len, cin):
    TB = x_ref.shape[0]
    L = seq_len

    # unfold the lane-packed input row (L*Cin lanes) back to channels-last (TB, L, Cin)
    a = x_ref[...].reshape(TB, L, cin)

    a = _conv_relu_pool(a, w1_ref[...], b1_ref[...])       # (TB, L//2, 64)
    a = _conv_relu_pool(a, w2_ref[...], b2_ref[...])       # (TB, L//4, 128)

    # length-major flatten; fc1 rows were permuted at init to match torch's channel-major flatten
    lq, c2 = a.shape[1], a.shape[2]
    h = a.reshape(TB, lq * c2)

    wf1 = wf1_ref[...]
    h = jnp.maximum(
        jnp.dot(h.astype(wf1.dtype), wf1, preferred_element_type=jnp.float32) + bf1_ref[...],
        0.0)
    wf2 = wf2_ref[...]
    o_ref[...] = (jnp.dot(h.astype(wf2.dtype), wf2, preferred_element_type=jnp.float32)
                  + bf2_ref[...]).astype(o_ref.dtype)


def eeg_cnn_forward(x_ncl, params, *, batch_tile=8):
    """x_ncl: (B, Cin, L) float32, same NCL layout as the PyTorch module's input."""
    B, Cin, L = x_ncl.shape
    assert L % 4 == 0, "two MaxPool1d(2) stages assume L divisible by 4"
    TB = B if B <= batch_tile else batch_tile
    assert B % TB == 0 and (TB == B or TB % 8 == 0), "batch tile must divide B and be 8-aligned"

    # channels-last + lane-packed: (B, Cin, L) -> (B, L, Cin) -> (B, L*Cin).
    # One contiguous lane-dense row per example => dense DMA, no 4-lane padded input tiles.
    x_rows = jnp.transpose(x_ncl.astype(jnp.float32), (0, 2, 1)).reshape(B, L * Cin)

    w1, b1 = params["w_conv1"], params["b_conv1"]
    w2, b2 = params["w_conv2"], params["b_conv2"]
    wf1, bf1 = params["w_fc1"], params["b_fc1"]
    wf2, bf2 = params["w_fc2"], params["b_fc2"]
    num_classes = wf2.shape[-1]

    def resident(arr):  # same block every grid step -> weights stay VMEM-resident
        return pl.BlockSpec(arr.shape, lambda i: (0,) * arr.ndim)

    kernel = functools.partial(eeg_cnn_kernel, seq_len=L, cin=Cin)

    return pl.pallas_call(
        kernel,
        out_shape=jax.ShapeDtypeStruct((B, num_classes), jnp.float32),
        grid=(B // TB,),
        in_specs=[
            pl.BlockSpec((TB, L * Cin), lambda i: (i, 0)),   # x: batch-tiled, lane-dense
            resident(w1), resident(b1),
            resident(w2), resident(b2),
            resident(wf1), resident(bf1),
            resident(wf2), resident(bf2),
        ],
        out_specs=pl.BlockSpec((TB, num_classes), lambda i: (i, 0)),
        compiler_params=pltpu.CompilerParams(
            dimension_semantics=("parallel",),       # independent batch tiles (v7x: 2 TCs)
            vmem_limit_bytes=32 * 1024 * 1024,
        ),
    )(x_rows, w1, b1, w2, b2, wf1, bf1, wf2, bf2)


def eeg_cnn_reference(x_ncl, params):
    """Pure-JAX forward using the SAME packed params (f32 math) for validation."""
    x = jnp.transpose(x_ncl.astype(jnp.float32), (0, 2, 1))   # (B, L, Cin)

    def conv_relu_pool(a, w_flat, b):
        Bb, L, C = a.shape
        z = jnp.zeros((Bb, 1, C), a.dtype)
        lhs = jnp.concatenate(
            [jnp.concatenate([z, a[:, : L - 1]], axis=1), a,
             jnp.concatenate([a[:, 1:], z], axis=1)], axis=-1)
        y = jnp.einsum("blc,cd->bld", lhs, w_flat.astype(jnp.float32)) + b
        y = jnp.maximum(y, 0.0)
        return y.reshape(Bb, L // 2, 2, -1).max(axis=2)

    a = conv_relu_pool(x, params["w_conv1"], params["b_conv1"])
    a = conv_relu_pool(a, params["w_conv2"], params["b_conv2"])
    h = a.reshape(a.shape[0], -1)                              # length-major flatten
    h = jnp.maximum(h @ params["w_fc1"].astype(jnp.float32) + params["b_fc1"], 0.0)
    return h @ params["w_fc2"].astype(jnp.float32) + params["b_fc2"]


def init_params(key, input_channels, num_classes, seq_len):
    # NOTE: the PyTorch module hardcodes length 420 when sizing fc1 (flattened_size = 128*105);
    # here the same formula (128 * seq_len//4) is applied to the seq_len actually used.
    assert seq_len % 4 == 0
    ks = jax.random.split(key, 8)

    def nrm(k, shape, scale=0.05):
        return (scale * jax.random.normal(k, shape)).astype(jnp.float32)

    cin, c1, c2, hid = input_channels, 64, 128, 256
    lq = seq_len // 4
    flat = c2 * lq

    # PyTorch-shaped parameters
    w1 = nrm(ks[0], (c1, cin, 3))                   # Conv1d: (Cout, Cin, K)
    w2 = nrm(ks[1], (c2, c1, 3))
    fc1_w = nrm(ks[2], (hid, flat))                 # Linear: (out, in), in index = c*Lq + l
    fc2_w = nrm(ks[3], (num_classes, hid))

    # kernel layouts:
    # conv weights fused tap-major: row k*Cin + ci pairs with lhs = [x[l-1] | x[l] | x[l+1]]
    w1_flat = jnp.transpose(w1, (2, 1, 0)).reshape(3 * cin, c1)
    w2_flat = jnp.transpose(w2, (2, 1, 0)).reshape(3 * c1, c2)
    # fc1: permute rows once so the kernel's length-major flatten (l*C2 + c) matches
    # torch.flatten's channel-major order (c*Lq + l).
    wf1 = jnp.transpose(fc1_w, (1, 0)).reshape(c2, lq, hid)
    wf1 = jnp.transpose(wf1, (1, 0, 2)).reshape(lq * c2, hid)

    return {
        "w_conv1": w1_flat.astype(jnp.bfloat16),
        "b_conv1": nrm(ks[4], (1, c1)),
        "w_conv2": w2_flat.astype(jnp.bfloat16),
        "b_conv2": nrm(ks[5], (1, c2)),
        "w_fc1": wf1.astype(jnp.bfloat16),
        "b_fc1": nrm(ks[6], (1, hid)),
        "w_fc2": jnp.transpose(fc2_w, (1, 0)).astype(jnp.bfloat16),
        "b_fc2": nrm(ks[7], (1, num_classes)),
    }


if __name__ == "__main__":
    B, CIN, L, NUM_CLASSES = 16, 4, 32, 8            # small synthetic shapes (NCL like PyTorch)
    key = jax.random.PRNGKey(0)
    kx, kp = jax.random.split(key)
    x = jax.random.normal(kx, (B, CIN, L), dtype=jnp.float32)
    params = init_params(kp, CIN, NUM_CLASSES, L)

    out = jax.block_until_ready(jax.jit(eeg_cnn_forward)(x, params))
    assert out.shape == (B, NUM_CLASSES)

    ref = jax.block_until_ready(eeg_cnn_reference(x, params))
    err = float(jnp.max(jnp.abs(out - ref)))
    assert err < 2e-2, f"kernel vs reference max abs err = {err}"
    print("KERNEL_OK")
</pallas_src>

<mosaic_0001>
module attributes {stable_mosaic.version = 11 : i64} {
  func.func @eeg_cnn_kernel(%arg0: i32, %arg1: memref<8x128xf32, #tpu.memory_space<vmem>>, %arg2: memref<12x64xbf16, #tpu.memory_space<vmem>>, %arg3: memref<1x64xf32, #tpu.memory_space<vmem>>, %arg4: memref<192x128xbf16, #tpu.memory_space<vmem>>, %arg5: memref<1x128xf32, #tpu.memory_space<vmem>>, %arg6: memref<1024x256xbf16, #tpu.memory_space<vmem>>, %arg7: memref<1x256xf32, #tpu.memory_space<vmem>>, %arg8: memref<256x8xbf16, #tpu.memory_space<vmem>>, %arg9: memref<1x8xf32, #tpu.memory_space<vmem>>, %arg10: memref<8x8xf32, #tpu.memory_space<vmem>>) attributes {dimension_semantics = [#tpu.dimension_semantics<parallel>], iteration_bounds = array<i64: 2>, scalar_prefetch = 0 : i64, scratch_operands = 0 : i64, tpu.core_type = #tpu.core_type<tc>, window_params = [{transform_indices = @transform_0, window_bounds = array<i64: 8, 128>}, {pipeline_mode = #tpu.pipeline_mode<synchronous>, transform_indices = @transform_1, window_bounds = array<i64: 12, 64>}, {pipeline_mode = #tpu.pipeline_mode<synchronous>, transform_indices = @transform_2, window_bounds = array<i64: 1, 64>}, {pipeline_mode = #tpu.pipeline_mode<synchronous>, transform_indices = @transform_3, window_bounds = array<i64: 192, 128>}, {pipeline_mode = #tpu.pipeline_mode<synchronous>, transform_indices = @transform_4, window_bounds = array<i64: 1, 128>}, {pipeline_mode = #tpu.pipeline_mode<synchronous>, transform_indices = @transform_5, window_bounds = array<i64: 1024, 256>}, {pipeline_mode = #tpu.pipeline_mode<synchronous>, transform_indices = @transform_6, window_bounds = array<i64: 1, 256>}, {pipeline_mode = #tpu.pipeline_mode<synchronous>, transform_indices = @transform_7, window_bounds = array<i64: 256, 8>}, {pipeline_mode = #tpu.pipeline_mode<synchronous>, transform_indices = @transform_8, window_bounds = array<i64: 1, 8>}, {transform_indices = @transform_9, window_bounds = array<i64: 8, 8>}]} {
    %c0 = arith.constant 0 : index
    %c0_0 = arith.constant 0 : index
    %0 = vector.load %arg1[%c0, %c0_0] : memref<8x128xf32, #tpu.memory_space<vmem>>, vector<8x128xf32>
    %1 = vector.shape_cast %0 : vector<8x128xf32> to vector<8x32x4xf32>
    %c0_1 = arith.constant 0 : index
    %c0_2 = arith.constant 0 : index
    %2 = vector.load %arg2[%c0_1, %c0_2] : memref<12x64xbf16, #tpu.memory_space<vmem>>, vector<12x64xbf16>
    %c0_3 = arith.constant 0 : index
    %c0_4 = arith.constant 0 : index
    %3 = vector.load %arg3[%c0_3, %c0_4] : memref<1x64xf32, #tpu.memory_space<vmem>>, vector<1x64xf32>
    %4 = arith.truncf %1 : vector<8x32x4xf32> to vector<8x32x4xbf16>
    %cst = arith.constant 0.000000e+00 : bf16
    %5 = vector.broadcast %cst : bf16 to vector<8x1x4xbf16>
    %6 = vector.extract_strided_slice %4 {offsets = [0, 0, 0], sizes = [8, 31, 4], strides = [1, 1, 1]} : vector<8x32x4xbf16> to vector<8x31x4xbf16>
    %7 = tpu.concatenate %5, %6 in 1 : vector<8x1x4xbf16>, vector<8x31x4xbf16> -> vector<8x32x4xbf16>
    %8 = vector.extract_strided_slice %4 {offsets = [0, 1, 0], sizes = [8, 31, 4], strides = [1, 1, 1]} : vector<8x32x4xbf16> to vector<8x31x4xbf16>
    %9 = tpu.concatenate %8, %5 in 1 : vector<8x31x4xbf16>, vector<8x1x4xbf16> -> vector<8x32x4xbf16>
    %10 = tpu.concatenate %7, %4, %9 in 2 : vector<8x32x4xbf16>, vector<8x32x4xbf16>, vector<8x32x4xbf16> -> vector<8x32x12xbf16>
    %11 = vector.shape_cast %10 : vector<8x32x12xbf16> to vector<256x12xbf16>
    %cst_5 = arith.constant dense<0.000000e+00> : vector<256x64xf32>
    %12 = tpu.matmul %11, %2, %cst_5 {dimension_numbers = #tpu.dot_dimension_numbers<[1], [0], [0], [1], [0, 0, 1, 1], [], []>} : vector<256x12xbf16>, vector<12x64xbf16>, vector<256x64xf32> -> vector<256x64xf32>
    %13 = vector.broadcast %3 : vector<1x64xf32> to vector<256x64xf32>
    %14 = arith.addf %12, %13 : vector<256x64xf32>
    %cst_6 = arith.constant 0.000000e+00 : f32
    %15 = vector.broadcast %cst_6 : f32 to vector<256x64xf32>
    %16 = arith.maximumf %14, %15 : vector<256x64xf32>
    %17 = vector.shape_cast %16 : vector<256x64xf32> to vector<8x16x2x64xf32>
    %cst_7 = arith.constant dense<0xFF800000> : vector<8x16x64xf32>
    %18 = vector.multi_reduction <maximumf>, %17, %cst_7 [2] : vector<8x16x2x64xf32> to vector<8x16x64xf32>
    %c0_8 = arith.constant 0 : index
    %c0_9 = arith.constant 0 : index
    %19 = vector.load %arg4[%c0_8, %c0_9] : memref<192x128xbf16, #tpu.memory_space<vmem>>, vector<192x128xbf16>
    %c0_10 = arith.constant 0 : index
    %c0_11 = arith.constant 0 : index
    %20 = vector.load %arg5[%c0_10, %c0_11] : memref<1x128xf32, #tpu.memory_space<vmem>>, vector<1x128xf32>
    %21 = arith.truncf %18 : vector<8x16x64xf32> to vector<8x16x64xbf16>
    %cst_12 = arith.constant 0.000000e+00 : bf16
    %22 = vector.broadcast %cst_12 : bf16 to vector<8x1x64xbf16>
    %23 = vector.extract_strided_slice %21 {offsets = [0, 0, 0], sizes = [8, 15, 64], strides = [1, 1, 1]} : vector<8x16x64xbf16> to vector<8x15x64xbf16>
    %24 = tpu.concatenate %22, %23 in 1 : vector<8x1x64xbf16>, vector<8x15x64xbf16> -> vector<8x16x64xbf16>
    %25 = vector.extract_strided_slice %21 {offsets = [0, 1, 0], sizes = [8, 15, 64], strides = [1, 1, 1]} : vector<8x16x64xbf16> to vector<8x15x64xbf16>
    %26 = tpu.concatenate %25, %22 in 1 : vector<8x15x64xbf16>, vector<8x1x64xbf16> -> vector<8x16x64xbf16>
    %27 = tpu.concatenate %24, %21, %26 in 2 : vector<8x16x64xbf16>, vector<8x16x64xbf16>, vector<8x16x64xbf16> -> vector<8x16x192xbf16>
    %28 = vector.shape_cast %27 : vector<8x16x192xbf16> to vector<128x192xbf16>
    %cst_13 = arith.constant dense<0.000000e+00> : vector<128x128xf32>
    %29 = tpu.matmul %28, %19, %cst_13 {dimension_numbers = #tpu.dot_dimension_numbers<[1], [0], [0], [1], [0, 0, 1, 1], [], []>} : vector<128x192xbf16>, vector<192x128xbf16>, vector<128x128xf32> -> vector<128x128xf32>
    %30 = vector.broadcast %20 : vector<1x128xf32> to vector<128x128xf32>
    %31 = arith.addf %29, %30 : vector<128x128xf32>
    %cst_14 = arith.constant 0.000000e+00 : f32
    %32 = vector.broadcast %cst_14 : f32 to vector<128x128xf32>
    %33 = arith.maximumf %31, %32 : vector<128x128xf32>
    %34 = vector.shape_cast %33 : vector<128x128xf32> to vector<8x8x2x128xf32>
    %cst_15 = arith.constant dense<0xFF800000> : vector<8x8x128xf32>
    %35 = vector.multi_reduction <maximumf>, %34, %cst_15 [2] : vector<8x8x2x128xf32> to vector<8x8x128xf32>
    %36 = vector.shape_cast %35 : vector<8x8x128xf32> to vector<8x1024xf32>
    %c0_16 = arith.constant 0 : index
    %c0_17 = arith.constant 0 : index
    %37 = vector.load %arg6[%c0_16, %c0_17] : memref<1024x256xbf16, #tpu.memory_space<vmem>>, vector<1024x256xbf16>
    %38 = arith.truncf %36 : vector<8x1024xf32> to vector<8x1024xbf16>
    %cst_18 = arith.constant dense<0.000000e+00> : vector<8x256xf32>
    %39 = tpu.matmul %38, %37, %cst_18 {dimension_numbers = #tpu.dot_dimension_numbers<[1], [0], [0], [1], [0, 0, 1, 1], [], []>} : vector<8x1024xbf16>, vector<1024x256xbf16>, vector<8x256xf32> -> vector<8x256xf32>
    %c0_19 = arith.constant 0 : index
    %c0_20 = arith.constant 0 : index
    %40 = vector.load %arg7[%c0_19, %c0_20] : memref<1x256xf32, #tpu.memory_space<vmem>>, vector<1x256xf32>
    %41 = vector.broadcast %40 : vector<1x256xf32> to vector<8x256xf32>
    %42 = arith.addf %39, %41 : vector<8x256xf32>
    %cst_21 = arith.constant 0.000000e+00 : f32
    %43 = vector.broadcast %cst_21 : f32 to vector<8x256xf32>
    %44 = arith.maximumf %42, %43 : vector<8x256xf32>
    %c0_22 = arith.constant 0 : index
    %c0_23 = arith.constant 0 : index
    %45 = vector.load %arg8[%c0_22, %c0_23] : memref<256x8xbf16, #tpu.memory_space<vmem>>, vector<256x8xbf16>
    %46 = arith.truncf %44 : vector<8x256xf32> to vector<8x256xbf16>
    %cst_24 = arith.constant dense<0.000000e+00> : vector<8x8xf32>
    %47 = tpu.matmul %46, %45, %cst_24 {dimension_numbers = #tpu.dot_dimension_numbers<[1], [0], [0], [1], [0, 0, 1, 1], [], []>} : vector<8x256xbf16>, vector<256x8xbf16>, vector<8x8xf32> -> vector<8x8xf32>
    %c0_25 = arith.constant 0 : index
    %c0_26 = arith.constant 0 : index
    %48 = vector.load %arg9[%c0_25, %c0_26] : memref<1x8xf32, #tpu.memory_space<vmem>>, vector<1x8xf32>
    %49 = vector.broadcast %48 : vector<1x8xf32> to vector<8x8xf32>
    %50 = arith.addf %47, %49 : vector<8x8xf32>
    %c0_27 = arith.constant 0 : index
    %c0_28 = arith.constant 0 : index
    %51 = vector.load %arg10[%c0_27, %c0_28] : memref<8x8xf32, #tpu.memory_space<vmem>>, vector<8x8xf32>
    tpu.vector_store %arg10[%c0_27, %c0_28], %50 {strides = array<i32>} : memref<8x8xf32, #tpu.memory_space<vmem>>, vector<8x8xf32>,
    return
  }
  func.func @transform_0(%arg0: i32) -> (i32, i32) {
    %c0_i32 = arith.constant 0 : i32
    %c0_i32_0 = arith.constant 0 : i32
    return %arg0, %c0_i32 : i32, i32
  }
  func.func @transform_1(%arg0: i32) -> (i32, i32) {
    %c0_i32 = arith.constant 0 : i32
    %c0_i32_0 = arith.constant 0 : i32
    %c0_i32_1 = arith.constant 0 : i32
    return %c0_i32, %c0_i32_0 : i32, i32
  }
  func.func @transform_2(%arg0: i32) -> (i32, i32) {
    %c0_i32 = arith.constant 0 : i32
    %c0_i32_0 = arith.constant 0 : i32
    %c0_i32_1 = arith.constant 0 : i32
    return %c0_i32, %c0_i32_0 : i32, i32
  }
  func.func @transform_3(%arg0: i32) -> (i32, i32) {
    %c0_i32 = arith.constant 0 : i32
    %c0_i32_0 = arith.constant 0 : i32
    %c0_i32_1 = arith.constant 0 : i32
    return %c0_i32, %c0_i32_0 : i32, i32
  }
  func.func @transform_4(%arg0: i32) -> (i32, i32) {
    %c0_i32 = arith.constant 0 : i32
    %c0_i32_0 = arith.constant 0 : i32
    %c0_i32_1 = arith.constant 0 : i32
    return %c0_i32, %c0_i32_0 : i32, i32
  }
  func.func @transform_5(%arg0: i32) -> (i32, i32) {
    %c0_i32 = arith.constant 0 : i32
    %c0_i32_0 = arith.constant 0 : i32
    %c0_i32_1 = arith.constant 0 : i32
    return %c0_i32, %c0_i32_0 : i32, i32
  }
  func.func @transform_6(%arg0: i32) -> (i32, i32) {
    %c0_i32 = arith.constant 0 : i32
    %c0_i32_0 = arith.constant 0 : i32
    %c0_i32_1 = arith.constant 0 : i32
    return %c0_i32, %c0_i32_0 : i32, i32
  }
  func.func @transform_7(%arg0: i32) -> (i32, i32) {
    %c0_i32 = arith.constant 0 : i32
    %c0_i32_0 = arith.constant 0 : i32
    %c0_i32_1 = arith.constant 0 : i32
    return %c0_i32, %c0_i32_0 : i32, i32
  }
  func.func @transform_8(%arg0: i32) -> (i32, i32) {
    %c0_i32 = arith.constant 0 : i32
    %c0_i32_0 = arith.constant 0 : i32
    %c0_i32_1 = arith.constant 0 : i32
    return %c0_i32, %c0_i32_0 : i32, i32
  }
  func.func @transform_9(%arg0: i32) -> (i32, i32) {
    %c0_i32 = arith.constant 0 : i32
    %c0_i32_0 = arith.constant 0 : i32
    return %arg0, %c0_i32 : i32, i32
  }
}

</mosaic_0001>

<llo_original>
// kernel: eeg_cnn_forward.1
$region0: #{eeg_cnn_forward.1}
  #allocation0 [shape = 'u32[]', space=smem, size = 0x4, offset = 0x4, fixed_abs, tag = 'smem constant byte address 0x4 - core index']
  #allocation1 [shape = 'u32[144,128]{1,0:T(1,128)}', space=vmem, size = 0x12000, scoped, tag = 'internal scratch']
  %s0 = inlined_call_operand.vmem [shape: f32[16,128], index: 0, kind: input, shape index: {}]
  %s1 = inlined_call_operand.vmem [shape: bf16[12,64], index: 1, kind: input, shape index: {}]
  %s2 = inlined_call_operand.vmem [shape: f32[1,64], index: 2, kind: input, shape index: {}]
  %s3 = inlined_call_operand.vmem [shape: bf16[192,128], index: 3, kind: input, shape index: {}]
  %s4 = inlined_call_operand.vmem [shape: f32[1,128], index: 4, kind: input, shape index: {}]
  %s5 = inlined_call_operand.hbm [shape: bf16[1024,256], index: 5, kind: input, shape index: {}]
  %s6 = inlined_call_operand.vmem [shape: f32[1,256], index: 6, kind: input, shape index: {}]
  %s7 = inlined_call_operand.vmem [shape: bf16[256,8], index: 7, kind: input, shape index: {}]
  %s8 = inlined_call_operand.vmem [shape: f32[1,8], index: 8, kind: input, shape index: {}]
  %s9 = inlined_call_operand.vmem [shape: f32[16,8], index: 9, kind: output, shape index: {}]
  %s10 = sld [smem:[#allocation0]]
  $region73: #{eeg_cnn_forward.1} parent=0
    _
  %s12 = ssub.s32 1, %s10
  %s13 = scalar_select 0, %s12, %s10
  $region1: #{eeg_cnn_forward.1} parent=0
    #allocation2 [shape = 'u8[524288]{0}', space=vmem, size = 0x80000, scoped, tag = 'input window, operand 5, single buffered']
    #allocation3 [shape = 's32[2]{0}', space=sflag, size = 0x8, scoped, tag = 'scoped memory for eeg_cnn_forward.1']
    %14 = vsyncpa [#allocation3], 0
    loop: start=0, step=1, limit=4
    $region2: #{eeg_cnn_forward.1} parent=1 // loop_pre_header
      _
    $region3: #{eeg_cnn_forward.1} parent=1 // loop_header
      %s16 = sphi 0, %s20
      %p17 = scmp.ge.s32.totalorder %s16, 4
      %s26 = sphi 0, %s28
      %s29 = sphi 0, %s26
      %s30 = sphi 0, %s29
      %s46 = sphi 0, %s30
      %s50 = sphi 0, %s50
      %s52 = sphi 0, %s50
      %s53 = sphi 0, %s52
      %s67 = sphi 0, %s53
      %s71 = sphi 0, %s71
      %s73 = sphi 0, %s71
      %s74 = sphi 0, %s73
      %s88 = sphi 0, %s74
      %s92 = sphi 0, %s92
      %s94 = sphi 0, %s92
      %s95 = sphi 0, %s94
      %s109 = sphi 0, %s95
      %s113 = sphi 0, %s113
      %s115 = sphi 0, %s113
      %s116 = sphi 0, %s115
      %s130 = sphi 0, %s116
      %s134 = sphi 0, %s134
      %s136 = sphi 0, %s134
      %s137 = sphi 0, %s136
      %s151 = sphi 0, %s137
      %s155 = sphi 0, %s155
      %s157 = sphi 0, %s155
      %s158 = sphi 0, %s157
      %s172 = sphi 0, %s158
      %s176 = sphi 0, %s176
      %s178 = sphi 0, %s176
      %s179 = sphi 0, %s178
      %s193 = sphi 0, %s179
      %s197 = sphi 0, %s197
      %s199 = sphi 0, %s197
      %s200 = sphi 0, %s199
      %s214 = sphi 0, %s200
      %s220 = sphi 0, %s222
      %s223 = sphi 0, %s220
      %s224 = sphi 0, %s223
      %s240 = sphi 0, %s224
    $region4: #{eeg_cnn_forward.1} parent=1 // loop_header_branch
      %19 = sbr.rel (%p17) target = $region8
    $region5: #{eeg_cnn_forward.1} parent=1 // loop_body
      %s21 = ssub.s32 %s16, 1
      %s22 = ssub.s32 %s16, 2
      %s23 = sadd.s32 %s16, 1
      %s24 = ssub.s32 %s16, %s23
      %p25 = scmp.eq.s32.totalorder %s24, 0
      %s27 = sadd.s32 %s26, 1
      %s28 = scalar_select %p25, %s26, %s27
      %p31 = pneg %p25
      %p32 = scmp.eq.s32.totalorder %s16, 1
      %p33 = por %p31, %p32
      %p34 = scmp.ne.s32.totalorder %s26, %s29
      %p35 = scmp.eq.s32.totalorder %s16, 0
      %p36 = por %p34, %p35
      %p37 = scmp.ne.s32.totalorder %s26, %s29
      %p38 = scmp.eq.s32.totalorder %s21, 1
      %p39 = por %p37, %p38
      %p40 = scmp.ne.s32.totalorder %s29, %s30
      %p41 = scmp.eq.s32.totalorder %s21, 0
      %p42 = por %p40, %p41
      %p43 = scmp.ne.s32.totalorder %s29, %s30
      %p44 = scmp.eq.s32.totalorder %s22, 1
      %p45 = por %p43, %p44
      %p47 = scmp.ne.s32.totalorder %s30, %s46
      %p48 = scmp.eq.s32.totalorder %s22, 0
      %p49 = por %p47, %p48
      %s51 = sadd.s32 %s50, 1
      %p54 = scmp.eq.s32.totalorder %s16, 1
      %p55 = scmp.ne.s32.totalorder %s50, %s52
      %p56 = scmp.eq.s32.totalorder %s16, 0
      %p57 = por %p55, %p56
      %p58 = scmp.ne.s32.totalorder %s50, %s52
      %p59 = scmp.eq.s32.totalorder %s21, 1
      %p60 = por %p58, %p59
      %p61 = scmp.ne.s32.totalorder %s52, %s53
      %p62 = scmp.eq.s32.totalorder %s21, 0
      %p63 = por %p61, %p62
      %p64 = scmp.ne.s32.totalorder %s52, %s53
      %p65 = scmp.eq.s32.totalorder %s22, 1
      %p66 = por %p64, %p65
      %p68 = scmp.ne.s32.totalorder %s53, %s67
      %p69 = scmp.eq.s32.totalorder %s22, 0
      %p70 = por %p68, %p69
      %s72 = sadd.s32 %s71, 1
      %p75 = scmp.eq.s32.totalorder %s16, 1
      %p76 = scmp.ne.s32.totalorder %s71, %s73
      %p77 = scmp.eq.s32.totalorder %s16, 0
      %p78 = por %p76, %p77
      %p79 = scmp.ne.s32.totalorder %s71, %s73
      %p80 = scmp.eq.s32.totalorder %s21, 1
      %p81 = por %p79, %p80
      %p82 = scmp.ne.s32.totalorder %s73, %s74
      %p83 = scmp.eq.s32.totalorder %s21, 0
      %p84 = por %p82, %p83
      %p85 = scmp.ne.s32.totalorder %s73, %s74
      %p86 = scmp.eq.s32.totalorder %s22, 1
      %p87 = por %p85, %p86
      %p89 = scmp.ne.s32.totalorder %s74, %s88
      %p90 = scmp.eq.s32.totalorder %s22, 0
      %p91 = por %p89, %p90
      %s93 = sadd.s32 %s92, 1
      %p96 = scmp.eq.s32.totalorder %s16, 1
      %p97 = scmp.ne.s32.totalorder %s92, %s94
      %p98 = scmp.eq.s32.totalorder %s16, 0
      %p99 = por %p97, %p98
      %p100 = scmp.ne.s32.totalorder %s92, %s94
      %p101 = scmp.eq.s32.totalorder %s21, 1
      %p102 = por %p100, %p101
      %p103 = scmp.ne.s32.totalorder %s94, %s95
      %p104 = scmp.eq.s32.totalorder %s21, 0
      %p105 = por %p103, %p104
      %p106 = scmp.ne.s32.totalorder %s94, %s95
      %p107 = scmp.eq.s32.totalorder %s22, 1
      %p108 = por %p106, %p107
      %p110 = scmp.ne.s32.totalorder %s95, %s109
      %p111 = scmp.eq.s32.totalorder %s22, 0
      %p112 = por %p110, %p111
      %s114 = sadd.s32 %s113, 1
      %p117 = scmp.eq.s32.totalorder %s16, 1
      %p118 = scmp.ne.s32.totalorder %s113, %s115
      %p119 = scmp.eq.s32.totalorder %s16, 0
      %p120 = por %p118, %p119
      %p121 = scmp.ne.s32.totalorder %s113, %s115
      %p122 = scmp.eq.s32.totalorder %s21, 1
      %p123 = por %p121, %p122
      %p124 = scmp.ne.s32.totalorder %s115, %s116
      %p125 = scmp.eq.s32.totalorder %s21, 0
      %p126 = por %p124, %p125
      %p127 = scmp.ne.s32.totalorder %s115, %s116
      %p128 = scmp.eq.s32.totalorder %s22, 1
      %p129 = por %p127, %p128
      %p131 = scmp.ne.s32.totalorder %s116, %s130
      %p132 = scmp.eq.s32.totalorder %s22, 0
      %p133 = por %p131, %p132
      %s135 = sadd.s32 %s134, 1
      %p138 = scmp.eq.s32.totalorder %s16, 1
      %p139 = scmp.ne.s32.totalorder %s134, %s136
      %p140 = scmp.eq.s32.totalorder %s16, 0
      %p141 = por %p139, %p140
      %p142 = scmp.ne.s32.totalorder %s134, %s136
      %p143 = scmp.eq.s32.totalorder %s21, 1
      %p144 = por %p142, %p143
      %p145 = scmp.ne.s32.totalorder %s136, %s137
      %p146 = scmp.eq.s32.totalorder %s21, 0
      %p147 = por %p145, %p146
      %p148 = scmp.ne.s32.totalorder %s136, %s137
      %p149 = scmp.eq.s32.totalorder %s22, 1
      %p150 = por %p148, %p149
      %p152 = scmp.ne.s32.totalorder %s137, %s151
      %p153 = scmp.eq.s32.totalorder %s22, 0
      %p154 = por %p152, %p153
      %s156 = sadd.s32 %s155, 1
      %p159 = scmp.eq.s32.totalorder %s16, 1
      %p160 = scmp.ne.s32.totalorder %s155, %s157
      %p161 = scmp.eq.s32.totalorder %s16, 0
      %p162 = por %p160, %p161
      %p163 = scmp.ne.s32.totalorder %s155, %s157
      %p164 = scmp.eq.s32.totalorder %s21, 1
      %p165 = por %p163, %p164
      %p166 = scmp.ne.s32.totalorder %s157, %s158
      %p167 = scmp.eq.s32.totalorder %s21, 0
      %p168 = por %p166, %p167
      %p169 = scmp.ne.s32.totalorder %s157, %s158
      %p170 = scmp.eq.s32.totalorder %s22, 1
      %p171 = por %p169, %p170
      %p173 = scmp.ne.s32.totalorder %s158, %s172
      %p174 = scmp.eq.s32.totalorder %s22, 0
      %p175 = por %p173, %p174
      %s177 = sadd.s32 %s176, 1
      %p180 = scmp.eq.s32.totalorder %s16, 1
      %p181 = scmp.ne.s32.totalorder %s176, %s178
      %p182 = scmp.eq.s32.totalorder %s16, 0
      %p183 = por %p181, %p182
      %p184 = scmp.ne.s32.totalorder %s176, %s178
      %p185 = scmp.eq.s32.totalorder %s21, 1
      %p186 = por %p184, %p185
      %p187 = scmp.ne.s32.totalorder %s178, %s179
      %p188 = scmp.eq.s32.totalorder %s21, 0
      %p189 = por %p187, %p188
      %p190 = scmp.ne.s32.totalorder %s178, %s179
      %p191 = scmp.eq.s32.totalorder %s22, 1
      %p192 = por %p190, %p191
      %p194 = scmp.ne.s32.totalorder %s179, %s193
      %p195 = scmp.eq.s32.totalorder %s22, 0
      %p196 = por %p194, %p195
      %s198 = sadd.s32 %s197, 1
      %p201 = scmp.eq.s32.totalorder %s16, 1
      %p202 = scmp.ne.s32.totalorder %s197, %s199
      %p203 = scmp.eq.s32.totalorder %s16, 0
      %p204 = por %p202, %p203
      %p205 = scmp.ne.s32.totalorder %s197, %s199
      %p206 = scmp.eq.s32.totalorder %s21, 1
      %p207 = por %p205, %p206
      %p208 = scmp.ne.s32.totalorder %s199, %s200
      %p209 = scmp.eq.s32.totalorder %s21, 0
      %p210 = por %p208, %p209
      %p211 = scmp.ne.s32.totalorder %s199, %s200
      %p212 = scmp.eq.s32.totalorder %s22, 1
      %p213 = por %p211, %p212
      %p215 = scmp.ne.s32.totalorder %s200, %s214
      %p216 = scmp.eq.s32.totalorder %s22, 0
      %p217 = por %p215, %p216
      %s218 = ssub.s32 %s16, %s23
      %p219 = scmp.eq.s32.totalorder %s218, 0
      %s221 = sadd.s32 %s220, 1
      %s222 = scalar_select %p219, %s220, %s221
      %p225 = pneg %p219
      %p226 = scmp.eq.s32.totalorder %s16, 1
      %p227 = por %p225, %p226
      %p228 = scmp.ne.s32.totalorder %s220, %s223
      %p229 = scmp.eq.s32.totalorder %s16, 0
      %p230 = por %p228, %p229
      %p231 = scmp.ne.s32.totalorder %s220, %s223
      %p232 = scmp.eq.s32.totalorder %s21, 1
      %p233 = por %p231, %p232
      %p234 = scmp.ne.s32.totalorder %s223, %s224
      %p235 = scmp.eq.s32.totalorder %s21, 0
      %p236 = por %p234, %p235
      %p237 = scmp.ne.s32.totalorder %s223, %s224
      %p238 = scmp.eq.s32.totalorder %s22, 1
      %p239 = por %p237, %p238
      %p241 = scmp.ne.s32.totalorder %s224, %s240
      %p242 = scmp.eq.s32.totalorder %s22, 0
      %p243 = por %p241, %p242
      %p244 = scmp.le.s32.totalorder 1, %s16
      %p245 = scmp.lt.s32.totalorder %s16, 3
      %p246 = pnand %p244, %p245
      %p247 = pneg %p246
      // Predicated region
      $region9: #{eeg_cnn_forward.1} parent=5 // pred_check
        _
      $region10: #{eeg_cnn_forward.1} parent=5 // pred_check_branch
        %249 = sbr.rel (%p246) target = $region12
      $region11: #{eeg_cnn_forward.1} parent=5 // pred_region
        %s250 = ssub.s32 %s16, 1
        // Predicated region
        $region13: #{eeg_cnn_forward.1} parent=11 // pred_check
          %p251 = pneg %p63
        $region14: #{eeg_cnn_forward.1} parent=11 // pred_check_branch
          %253 = sbr.rel (%p251) target = $region16
        $region15: #{eeg_cnn_forward.1} parent=11 // pred_region
          _
        $region16: #{eeg_cnn_forward.1} parent=11 // pred_fallthru
          _
        // Predicated region
        $region17: #{eeg_cnn_forward.1} parent=11 // pred_check
          %p254 = pneg %p84
        $region18: #{eeg_cnn_forward.1} parent=11 // pred_check_branch
          %256 = sbr.rel (%p254) target = $region20
        $region19: #{eeg_cnn_forward.1} parent=11 // pred_region
          _
        $region20: #{eeg_cnn_forward.1} parent=11 // pred_fallthru
          _
        // Predicated region
        $region21: #{eeg_cnn_forward.1} parent=11 // pred_check
          %p257 = pneg %p105
        $region22: #{eeg_cnn_forward.1} parent=11 // pred_check_branch
          %259 = sbr.rel (%p257) target = $region24
        $region23: #{eeg_cnn_forward.1} parent=11 // pred_region
          _
        $region24: #{eeg_cnn_forward.1} parent=11 // pred_fallthru
          _
        // Predicated region
        $region25: #{eeg_cnn_forward.1} parent=11 // pred_check
          %p260 = pneg %p126
        $region26: #{eeg_cnn_forward.1} parent=11 // pred_check_branch
          %262 = sbr.rel (%p260) target = $region28
        $region27: #{eeg_cnn_forward.1} parent=11 // pred_region
          _
        $region28: #{eeg_cnn_forward.1} parent=11 // pred_fallthru
          _
        // Predicated region
        $region29: #{eeg_cnn_forward.1} parent=11 // pred_check
          %p263 = pneg %p147
        $region30: #{eeg_cnn_forward.1} parent=11 // pred_check_branch
          %265 = sbr.rel (%p263) target = $region32
        $region31: #{eeg_cnn_forward.1} parent=11 // pred_region
          %s267 = ssub.s32 16384, 16384
          %268 = vsyncadd [#allocation3], %s267
          %s269 = sshll.u32 [#allocation2], 4
          %s270 = int_to_ptr.vmem [resolvable:$true] %s269
          %275 = dma.hbm_to_vmem [thread:$0]  %s5, 16384, %s270, [#allocation3], 128, 128, 8
        $region32: #{eeg_cnn_forward.1} parent=11 // pred_fallthru
          _
        // Predicated region
        $region33: #{eeg_cnn_forward.1} parent=11 // pred_check
          %p276 = pneg %p168
        $region34: #{eeg_cnn_forward.1} parent=11 // pred_check_branch
          %278 = sbr.rel (%p276) target = $region36
        $region35: #{eeg_cnn_forward.1} parent=11 // pred_region
          _
        $region36: #{eeg_cnn_forward.1} parent=11 // pred_fallthru
          _
        // Predicated region
        $region37: #{eeg_cnn_forward.1} parent=11 // pred_check
          %p279 = pneg %p189
        $region38: #{eeg_cnn_forward.1} parent=11 // pred_check_branch
          %281 = sbr.rel (%p279) target = $region40
        $region39: #{eeg_cnn_forward.1} parent=11 // pred_region
          _
        $region40: #{eeg_cnn_forward.1} parent=11 // pred_fallthru
          _
        // Predicated region
        $region41: #{eeg_cnn_forward.1} parent=11 // pred_check
          %p282 = pneg %p210
        $region42: #{eeg_cnn_forward.1} parent=11 // pred_check_branch
          %284 = sbr.rel (%p282) target = $region44
        $region43: #{eeg_cnn_forward.1} parent=11 // pred_region
          _
        $region44: #{eeg_cnn_forward.1} parent=11 // pred_fallthru
          _
      $region12: #{eeg_cnn_forward.1} parent=5 // pred_fallthru
        _
      %p285 = scmp.lt.s32.totalorder %s16, 2
      // Predicated region
      $region45: #{eeg_cnn_forward.1} parent=5 // pred_check
        %p286 = pneg %p285
      $region46: #{eeg_cnn_forward.1} parent=5 // pred_check_branch
        %288 = sbr.rel (%p286) target = $region48
      $region47: #{eeg_cnn_forward.1} parent=5 // pred_region
        // Predicated region
        $region49: #{eeg_cnn_forward.1} parent=47 // pred_check
          %p289 = pneg %p36
        $region50: #{eeg_cnn_forward.1} parent=47 // pred_check_branch
          %291 = sbr.rel (%p289) target = $region52
        $region51: #{eeg_cnn_forward.1} parent=47 // pred_region
          %p292 = scmp.lt.s32.totalorder %s16, 1
          %s293 = scalar_select %p292, %s16, 1
          %s294 = smul.addr %s293, 8
          %s295 = scalar_lea.vmem %s0, %s294
        $region52: #{eeg_cnn_forward.1} parent=47 // pred_fallthru
          _
      $region48: #{eeg_cnn_forward.1} parent=5 // pred_fallthru
        _
      %p296 = scmp.le.s32.totalorder 1, %s16
      %p297 = scmp.lt.s32.totalorder %s16, 3
      %p298 = pnand %p296, %p297
      %p299 = pneg %p298
      // Predicated region
      $region53: #{eeg_cnn_forward.1} parent=5 // pred_check
        _
      $region54: #{eeg_cnn_forward.1} parent=5 // pred_check_branch
        %301 = sbr.rel (%p298) target = $region56
      $region55: #{eeg_cnn_forward.1} parent=5 // pred_region
        %s302 = ssub.s32 %s16, 1
        // Predicated region
        $region57: #{eeg_cnn_forward.1} parent=55 // pred_check
          %p303 = pneg %p147
        $region58: #{eeg_cnn_forward.1} parent=55 // pred_check_branch
          %305 = sbr.rel (%p303) target = $region60
        $region59: #{eeg_cnn_forward.1} parent=55 // pred_region
          %306 = dma.done [#allocation3], 16384
        $region60: #{eeg_cnn_forward.1} parent=55 // pred_fallthru
          _
        %p307 = scmp.lt.s32.totalorder %s21, 1
        %s308 = scalar_select %p307, %s21, 1
        %s309 = smul.addr %s308, 8
        %s310 = scalar_lea.vmem %s0, %s309
        %p311 = pneg %p42
        %p312 = pneg %p39
        %p313 = pneg %p63
        %p314 = pneg %p60
        %p315 = pneg %p84
        %p316 = pneg %p81
        %p317 = pneg %p105
        %p318 = pneg %p102
        %p319 = pneg %p126
        %p320 = pneg %p123
        %p321 = pneg %p147
        %p322 = pneg %p144
        %p323 = pneg %p168
        %p324 = pneg %p165
        %p325 = pneg %p189
        %p326 = pneg %p186
        %p327 = pneg %p210
        %p328 = pneg %p207
        %p329 = pneg %p236
        %p330 = pneg %p233
        %p331 = scmp.lt.s32.totalorder %s21, 1
        %s332 = scalar_select %p331, %s21, 1
        %s333 = smul.addr %s332, 8
        %s334 = scalar_lea.vmem %s9, %s333
        %p335 = scmp.lt.s32.totalorder %s21, 1
        %s336 = scalar_select %p335, %s21, 1
        %s337 = smul.addr %s336, 8
        %s338 = scalar_lea.vmem %s0, %s337
        %p339 = scmp.lt.s32.totalorder %s21, 1
        %s340 = scalar_select %p339, %s21, 1
        %s341 = smul.addr %s340, 8
        %s342 = scalar_lea.vmem %s9, %s341
        %v344 = vld [vmem:[%s338] sm:$0xff]
        %346 = vrot.lane.b32.xlu0 %v344, 124
        %v347 = vpop.permute.xlu0 %346
        %349 = vrot.lane.b32.xlu0 %v344, 120
        %v350 = vpop.permute.xlu0 %349
        %352 = vrot.lane.b32.xlu0 %v344, 116
        %v353 = vpop.permute.xlu0 %352
        %355 = vrot.lane.b32.xlu0 %v344, 112
        %v356 = vpop.permute.xlu0 %355
        %358 = vrot.lane.b32.xlu0 %v344, 108
        %v359 = vpop.permute.xlu0 %358
        %361 = vrot.lane.b32.xlu0 %v344, 104
        %v362 = vpop.permute.xlu0 %361
        %364 = vrot.lane.b32.xlu0 %v344, 100
        %v365 = vpop.permute.xlu0 %364
        %367 = vrot.lane.b32.xlu0 %v344, 96
        %v368 = vpop.permute.xlu0 %367
        %370 = vrot.lane.b32.xlu0 %v344, 92
        %v371 = vpop.permute.xlu0 %370
        %373 = vrot.lane.b32.xlu0 %v344, 88
        %v374 = vpop.permute.xlu0 %373
        %376 = vrot.lane.b32.xlu0 %v344, 84
        %v377 = vpop.permute.xlu0 %376
        %379 = vrot.lane.b32.xlu0 %v344, 80
        %v380 = vpop.permute.xlu0 %379
        %382 = vrot.lane.b32.xlu0 %v344, 76
        %v383 = vpop.permute.xlu0 %382
        %385 = vrot.lane.b32.xlu0 %v344, 72
        %v386 = vpop.permute.xlu0 %385
        %388 = vrot.lane.b32.xlu0 %v344, 68
        %v389 = vpop.permute.xlu0 %388
        %391 = vrot.lane.b32.xlu0 %v344, 64
        %v392 = vpop.permute.xlu0 %391
        %394 = vrot.lane.b32.xlu0 %v344, 60
        %v395 = vpop.permute.xlu0 %394
        %397 = vrot.lane.b32.xlu0 %v344, 56
        %v398 = vpop.permute.xlu0 %397
        %400 = vrot.lane.b32.xlu0 %v344, 52
        %v401 = vpop.permute.xlu0 %400
        %403 = vrot.lane.b32.xlu0 %v344, 48
        %v404 = vpop.permute.xlu0 %403
        %406 = vrot.lane.b32.xlu0 %v344, 44
        %v407 = vpop.permute.xlu0 %406
        %409 = vrot.lane.b32.xlu0 %v344, 40
        %v410 = vpop.permute.xlu0 %409
        %412 = vrot.lane.b32.xlu0 %v344, 36
        %v413 = vpop.permute.xlu0 %412
        %415 = vrot.lane.b32.xlu0 %v344, 32
        %v416 = vpop.permute.xlu0 %415
        %418 = vrot.lane.b32.xlu0 %v344, 28
        %v419 = vpop.permute.xlu0 %418
        %421 = vrot.lane.b32.xlu0 %v344, 24
        %v422 = vpop.permute.xlu0 %421
        %424 = vrot.lane.b32.xlu0 %v344, 20
        %v425 = vpop.permute.xlu0 %424
        %427 = vrot.lane.b32.xlu0 %v344, 16
        %v428 = vpop.permute.xlu0 %427
        %430 = vrot.lane.b32.xlu0 %v344, 12
        %v431 = vpop.permute.xlu0 %430
        %433 = vrot.lane.b32.xlu0 %v344, 8
        %v434 = vpop.permute.xlu0 %433
        %436 = vrot.lane.b32.xlu0 %v344, 4
        %v437 = vpop.permute.xlu0 %436
        %v439 = vcombine.low %v344, %v350
        %v440 = vcombine.high %v344, %v350
        %v442 = vunpack.c.l.s4 1983009808
        %v443 = vunpack.c.0.s8 %v442
        %v444 = vlaneseq
        %v445 = vshrl.u32 %v444, 7
        %v446 = vsub.s32 %v443, %v445
        %v447 = vrot.slane %v439, %v446
        %v449 = vunpack.c.l.s4 1983009808
        %v450 = vunpack.c.0.s8 %v449
        %v451 = vlaneseq
        %v452 = vshrl.u32 %v451, 7
        %v453 = vsub.s32 %v450, %v452
        %v454 = vrot.slane %v440, %v453
        %v455 = vcombine.low %v347, %v353
        %v456 = vcombine.high %v347, %v353
        %v458 = vunpack.c.l.s4 1983009808
        %v459 = vunpack.c.0.s8 %v458
        %v460 = vlaneseq
        %v461 = vshrl.u32 %v460, 7
        %v462 = vsub.s32 %v459, %v461
        %v463 = vrot.slane %v455, %v462
        %v465 = vunpack.c.l.s4 1983009808
        %v466 = vunpack.c.0.s8 %v465
        %v467 = vlaneseq
        %v468 = vshrl.u32 %v467, 7
        %v469 = vsub.s32 %v466, %v468
        %v470 = vrot.slane %v456, %v469
        %v471 = vcombine.low %v356, %v362
        %v472 = vcombine.high %v356, %v362
        %v474 = vunpack.c.l.s4 1983009808
        %v475 = vunpack.c.0.s8 %v474
        %v476 = vlaneseq
        %v477 = vshrl.u32 %v476, 7
        %v478 = vsub.s32 %v475, %v477
        %v479 = vrot.slane %v471, %v478
        %v481 = vunpack.c.l.s4 1983009808
        %v482 = vunpack.c.0.s8 %v481
        %v483 = vlaneseq
        %v484 = vshrl.u32 %v483, 7
        %v485 = vsub.s32 %v482, %v484
        %v486 = vrot.slane %v472, %v485
        %v487 = vcombine.low %v359, %v365
        %v488 = vcombine.high %v359, %v365
        %v490 = vunpack.c.l.s4 1983009808
        %v491 = vunpack.c.0.s8 %v490
        %v492 = vlaneseq
        %v493 = vshrl.u32 %v492, 7
        %v494 = vsub.s32 %v491, %v493
        %v495 = vrot.slane %v487, %v494
        %v497 = vunpack.c.l.s4 1983009808
        %v498 = vunpack.c.0.s8 %v497
        %v499 = vlaneseq
        %v500 = vshrl.u32 %v499, 7
        %v501 = vsub.s32 %v498, %v500
        %v502 = vrot.slane %v488, %v501
        %v503 = vcombine.low %v447, %v463
        %v504 = vcombine.high %v447, %v463
        %v506 = vunpack.c.l.s4 1934713408
        %v507 = vunpack.c.0.s8 %v506
        %v508 = vlaneseq
        %v509 = vshrl.u32 %v508, 7
        %v510 = vsub.s32 %v507, %v509
        %v511 = vrot.slane %v503, %v510
        %v513 = vunpack.c.l.s4 1934713408
        %v514 = vunpack.c.0.s8 %v513
        %v515 = vlaneseq
        %v516 = vshrl.u32 %v515, 7
        %v517 = vsub.s32 %v514, %v516
        %v518 = vrot.slane %v504, %v517
        %v519 = vcombine.low %v454, %v470
        %v520 = vcombine.high %v454, %v470
        %v522 = vunpack.c.l.s4 1934713408
        %v523 = vunpack.c.0.s8 %v522
        %v524 = vlaneseq
        %v525 = vshrl.u32 %v524, 7
        %v526 = vsub.s32 %v523, %v525
        %v527 = vrot.slane %v519, %v526
        %v529 = vunpack.c.l.s4 1934713408
        %v530 = vunpack.c.0.s8 %v529
        %v531 = vlaneseq
        %v532 = vshrl.u32 %v531, 7
        %v533 = vsub.s32 %v530, %v532
        %v534 = vrot.slane %v520, %v533
        %v535 = vcombine.low %v479, %v495
        %v536 = vcombine.high %v479, %v495
        %v538 = vunpack.c.l.s4 1934713408
        %v539 = vunpack.c.0.s8 %v538
        %v540 = vlaneseq
        %v541 = vshrl.u32 %v540, 7
        %v542 = vsub.s32 %v539, %v541
        %v543 = vrot.slane %v535, %v542
        %v545 = vunpack.c.l.s4 1934713408
        %v546 = vunpack.c.0.s8 %v545
        %v547 = vlaneseq
        %v548 = vshrl.u32 %v547, 7
        %v549 = vsub.s32 %v546, %v548
        %v550 = vrot.slane %v536, %v549
        %v551 = vcombine.low %v486, %v502
        %v552 = vcombine.high %v486, %v502
        %v554 = vunpack.c.l.s4 1934713408
        %v555 = vunpack.c.0.s8 %v554
        %v556 = vlaneseq
        %v557 = vshrl.u32 %v556, 7
        %v558 = vsub.s32 %v555, %v557
        %v559 = vrot.slane %v551, %v558
        %v561 = vunpack.c.l.s4 1934713408
        %v562 = vunpack.c.0.s8 %v561
        %v563 = vlaneseq
        %v564 = vshrl.u32 %v563, 7
        %v565 = vsub.s32 %v562, %v564
        %v566 = vrot.slane %v552, %v565
        %v567 = vcombine.low %v511, %v543
        %v568 = vcombine.high %v511, %v543
        %v569 = vcombine.low %v518, %v550
        %v570 = vcombine.high %v518, %v550
        %v571 = vcombine.low %v527, %v559
        %v572 = vcombine.high %v527, %v559
        %v573 = vcombine.low %v534, %v566
        %v574 = vcombine.high %v534, %v566
        %v575 = vcombine.low %v368, %v374
        %v576 = vcombine.high %v368, %v374
        %v578 = vunpack.c.l.s4 1983009808
        %v579 = vunpack.c.0.s8 %v578
        %v580 = vlaneseq
        %v581 = vshrl.u32 %v580, 7
        %v582 = vsub.s32 %v579, %v581
        %v583 = vrot.slane %v575, %v582
        %v585 = vunpack.c.l.s4 1983009808
        %v586 = vunpack.c.0.s8 %v585
        %v587 = vlaneseq
        %v588 = vshrl.u32 %v587, 7
        %v589 = vsub.s32 %v586, %v588
        %v590 = vrot.slane %v576, %v589
        %v591 = vcombine.low %v371, %v377
        %v592 = vcombine.high %v371, %v377
        %v594 = vunpack.c.l.s4 1983009808
        %v595 = vunpack.c.0.s8 %v594
        %v596 = vlaneseq
        %v597 = vshrl.u32 %v596, 7
        %v598 = vsub.s32 %v595, %v597
        %v599 = vrot.slane %v591, %v598
        %v601 = vunpack.c.l.s4 1983009808
        %v602 = vunpack.c.0.s8 %v601
        %v603 = vlaneseq
        %v604 = vshrl.u32 %v603, 7
        %v605 = vsub.s32 %v602, %v604
        %v606 = vrot.slane %v592, %v605
        %v607 = vcombine.low %v380, %v386
        %v608 = vcombine.high %v380, %v386
        %v610 = vunpack.c.l.s4 1983009808
        %v611 = vunpack.c.0.s8 %v610
        %v612 = vlaneseq
        %v613 = vshrl.u32 %v612, 7
        %v614 = vsub.s32 %v611, %v613
        %v615 = vrot.slane %v607, %v614
        %v617 = vunpack.c.l.s4 1983009808
        %v618 = vunpack.c.0.s8 %v617
        %v619 = vlaneseq
        %v620 = vshrl.u32 %v619, 7
        %v621 = vsub.s32 %v618, %v620
        %v622 = vrot.slane %v608, %v621
        %v623 = vcombine.low %v383, %v389
        %v624 = vcombine.high %v383, %v389
        %v626 = vunpack.c.l.s4 1983009808
        %v627 = vunpack.c.0.s8 %v626
        %v628 = vlaneseq
        %v629 = vshrl.u32 %v628, 7
        %v630 = vsub.s32 %v627, %v629
        %v631 = vrot.slane %v623, %v630
        %v633 = vunpack.c.l.s4 1983009808
        %v634 = vunpack.c.0.s8 %v633
        %v635 = vlaneseq
        %v636 = vshrl.u32 %v635, 7
        %v637 = vsub.s32 %v634, %v636
        %v638 = vrot.slane %v624, %v637
        %v639 = vcombine.low %v583, %v599
        %v640 = vcombine.high %v583, %v599
        %v642 = vunpack.c.l.s4 1934713408
        %v643 = vunpack.c.0.s8 %v642
        %v644 = vlaneseq
        %v645 = vshrl.u32 %v644, 7
        %v646 = vsub.s32 %v643, %v645
        %v647 = vrot.slane %v639, %v646
        %v649 = vunpack.c.l.s4 1934713408
        %v650 = vunpack.c.0.s8 %v649
        %v651 = vlaneseq
        %v652 = vshrl.u32 %v651, 7
        %v653 = vsub.s32 %v650, %v652
        %v654 = vrot.slane %v640, %v653
        %v655 = vcombine.low %v590, %v606
        %v656 = vcombine.high %v590, %v606
        %v658 = vunpack.c.l.s4 1934713408
        %v659 = vunpack.c.0.s8 %v658
        %v660 = vlaneseq
        %v661 = vshrl.u32 %v660, 7
        %v662 = vsub.s32 %v659, %v661
        %v663 = vrot.slane %v655, %v662
        %v665 = vunpack.c.l.s4 1934713408
        %v666 = vunpack.c.0.s8 %v665
        %v667 = vlaneseq
        %v668 = vshrl.u32 %v667, 7
        %v669 = vsub.s32 %v666, %v668
        %v670 = vrot.slane %v656, %v669
        %v671 = vcombine.low %v615, %v631
        %v672 = vcombine.high %v615, %v631
        %v674 = vunpack.c.l.s4 1934713408
        %v675 = vunpack.c.0.s8 %v674
        %v676 = vlaneseq
        %v677 = vshrl.u32 %v676, 7
        %v678 = vsub.s32 %v675, %v677
        %v679 = vrot.slane %v671, %v678
        %v681 = vunpack.c.l.s4 1934713408
        %v682 = vunpack.c.0.s8 %v681
        %v683 = vlaneseq
        %v684 = vshrl.u32 %v683, 7
        %v685 = vsub.s32 %v682, %v684
        %v686 = vrot.slane %v672, %v685
        %v687 = vcombine.low %v622, %v638
        %v688 = vcombine.high %v622, %v638
        %v690 = vunpack.c.l.s4 1934713408
        %v691 = vunpack.c.0.s8 %v690
        %v692 = vlaneseq
        %v693 = vshrl.u32 %v692, 7
        %v694 = vsub.s32 %v691, %v693
        %v695 = vrot.slane %v687, %v694
        %v697 = vunpack.c.l.s4 1934713408
        %v698 = vunpack.c.0.s8 %v697
        %v699 = vlaneseq
        %v700 = vshrl.u32 %v699, 7
        %v701 = vsub.s32 %v698, %v700
        %v702 = vrot.slane %v688, %v701
        %v703 = vcombine.low %v647, %v679
        %v704 = vcombine.high %v647, %v679
        %v705 = vcombine.low %v654, %v686
        %v706 = vcombine.high %v654, %v686
        %v707 = vcombine.low %v663, %v695
        %v708 = vcombine.high %v663, %v695
        %v709 = vcombine.low %v670, %v702
        %v710 = vcombine.high %v670, %v702
        %v711 = vcombine.low %v392, %v398
        %v712 = vcombine.high %v392, %v398
        %v714 = vunpack.c.l.s4 1983009808
        %v715 = vunpack.c.0.s8 %v714
        %v716 = vlaneseq
        %v717 = vshrl.u32 %v716, 7
        %v718 = vsub.s32 %v715, %v717
        %v719 = vrot.slane %v711, %v718
        %v721 = vunpack.c.l.s4 1983009808
        %v722 = vunpack.c.0.s8 %v721
        %v723 = vlaneseq
        %v724 = vshrl.u32 %v723, 7
        %v725 = vsub.s32 %v722, %v724
        %v726 = vrot.slane %v712, %v725
        %v727 = vcombine.low %v395, %v401
        %v728 = vcombine.high %v395, %v401
        %v730 = vunpack.c.l.s4 1983009808
        %v731 = vunpack.c.0.s8 %v730
        %v732 = vlaneseq
        %v733 = vshrl.u32 %v732, 7
        %v734 = vsub.s32 %v731, %v733
        %v735 = vrot.slane %v727, %v734
        %v737 = vunpack.c.l.s4 1983009808
        %v738 = vunpack.c.0.s8 %v737
        %v739 = vlaneseq
        %v740 = vshrl.u32 %v739, 7
        %v741 = vsub.s32 %v738, %v740
        %v742 = vrot.slane %v728, %v741
        %v743 = vcombine.low %v404, %v410
        %v744 = vcombine.high %v404, %v410
        %v746 = vunpack.c.l.s4 1983009808
        %v747 = vunpack.c.0.s8 %v746
        %v748 = vlaneseq
        %v749 = vshrl.u32 %v748, 7
        %v750 = vsub.s32 %v747, %v749
        %v751 = vrot.slane %v743, %v750
        %v753 = vunpack.c.l.s4 1983009808
        %v754 = vunpack.c.0.s8 %v753
        %v755 = vlaneseq
        %v756 = vshrl.u32 %v755, 7
        %v757 = vsub.s32 %v754, %v756
        %v758 = vrot.slane %v744, %v757
        %v759 = vcombine.low %v407, %v413
        %v760 = vcombine.high %v407, %v413
        %v762 = vunpack.c.l.s4 1983009808
        %v763 = vunpack.c.0.s8 %v762
        %v764 = vlaneseq
        %v765 = vshrl.u32 %v764, 7
        %v766 = vsub.s32 %v763, %v765
        %v767 = vrot.slane %v759, %v766
        %v769 = vunpack.c.l.s4 1983009808
        %v770 = vunpack.c.0.s8 %v769
        %v771 = vlaneseq
        %v772 = vshrl.u32 %v771, 7
        %v773 = vsub.s32 %v770, %v772
        %v774 = vrot.slane %v760, %v773
        %v775 = vcombine.low %v719, %v735
        %v776 = vcombine.high %v719, %v735
        %v778 = vunpack.c.l.s4 1934713408
        %v779 = vunpack.c.0.s8 %v778
        %v780 = vlaneseq
        %v781 = vshrl.u32 %v780, 7
        %v782 = vsub.s32 %v779, %v781
        %v783 = vrot.slane %v775, %v782
        %v785 = vunpack.c.l.s4 1934713408
        %v786 = vunpack.c.0.s8 %v785
        %v787 = vlaneseq
        %v788 = vshrl.u32 %v787, 7
        %v789 = vsub.s32 %v786, %v788
        %v790 = vrot.slane %v776, %v789
        %v791 = vcombine.low %v726, %v742
        %v792 = vcombine.high %v726, %v742
        %v794 = vunpack.c.l.s4 1934713408
        %v795 = vunpack.c.0.s8 %v794
        %v796 = vlaneseq
        %v797 = vshrl.u32 %v796, 7
        %v798 = vsub.s32 %v795, %v797
        %v799 = vrot.slane %v791, %v798
        %v801 = vunpack.c.l.s4 1934713408
        %v802 = vunpack.c.0.s8 %v801
        %v803 = vlaneseq
        %v804 = vshrl.u32 %v803, 7
        %v805 = vsub.s32 %v802, %v804
        %v806 = vrot.slane %v792, %v805
        %v807 = vcombine.low %v751, %v767
        %v808 = vcombine.high %v751, %v767
        %v810 = vunpack.c.l.s4 1934713408
        %v811 = vunpack.c.0.s8 %v810
        %v812 = vlaneseq
        %v813 = vshrl.u32 %v812, 7
        %v814 = vsub.s32 %v811, %v813
        %v815 = vrot.slane %v807, %v814
        %v817 = vunpack.c.l.s4 1934713408
        %v818 = vunpack.c.0.s8 %v817
        %v819 = vlaneseq
        %v820 = vshrl.u32 %v819, 7
        %v821 = vsub.s32 %v818, %v820
        %v822 = vrot.slane %v808, %v821
        %v823 = vcombine.low %v758, %v774
        %v824 = vcombine.high %v758, %v774
        %v826 = vunpack.c.l.s4 1934713408
        %v827 = vunpack.c.0.s8 %v826
        %v828 = vlaneseq
        %v829 = vshrl.u32 %v828, 7
        %v830 = vsub.s32 %v827, %v829
        %v831 = vrot.slane %v823, %v830
        %v833 = vunpack.c.l.s4 1934713408
        %v834 = vunpack.c.0.s8 %v833
        %v835 = vlaneseq
        %v836 = vshrl.u32 %v835, 7
        %v837 = vsub.s32 %v834, %v836
        %v838 = vrot.slane %v824, %v837
        %v839 = vcombine.low %v783, %v815
        %v840 = vcombine.high %v783, %v815
        %v841 = vcombine.low %v790, %v822
        %v842 = vcombine.high %v790, %v822
        %v843 = vcombine.low %v799, %v831
        %v844 = vcombine.high %v799, %v831
        %v845 = vcombine.low %v806, %v838
        %v846 = vcombine.high %v806, %v838
        %v847 = vcombine.low %v416, %v422
        %v848 = vcombine.high %v416, %v422
        %v850 = vunpack.c.l.s4 1983009808
        %v851 = vunpack.c.0.s8 %v850
        %v852 = vlaneseq
        %v853 = vshrl.u32 %v852, 7
        %v854 = vsub.s32 %v851, %v853
        %v855 = vrot.slane %v847, %v854
        %v857 = vunpack.c.l.s4 1983009808
        %v858 = vunpack.c.0.s8 %v857
        %v859 = vlaneseq
        %v860 = vshrl.u32 %v859, 7
        %v861 = vsub.s32 %v858, %v860
        %v862 = vrot.slane %v848, %v861
        %v863 = vcombine.low %v419, %v425
        %v864 = vcombine.high %v419, %v425
        %v866 = vunpack.c.l.s4 1983009808
        %v867 = vunpack.c.0.s8 %v866
        %v868 = vlaneseq
        %v869 = vshrl.u32 %v868, 7
        %v870 = vsub.s32 %v867, %v869
        %v871 = vrot.slane %v863, %v870
        %v873 = vunpack.c.l.s4 1983009808
        %v874 = vunpack.c.0.s8 %v873
        %v875 = vlaneseq
        %v876 = vshrl.u32 %v875, 7
        %v877 = vsub.s32 %v874, %v876
        %v878 = vrot.slane %v864, %v877
        %v879 = vcombine.low %v428, %v434
        %v880 = vcombine.high %v428, %v434
        %v882 = vunpack.c.l.s4 1983009808
        %v883 = vunpack.c.0.s8 %v882
        %v884 = vlaneseq
        %v885 = vshrl.u32 %v884, 7
        %v886 = vsub.s32 %v883, %v885
        %v887 = vrot.slane %v879, %v886
        %v889 = vunpack.c.l.s4 1983009808
        %v890 = vunpack.c.0.s8 %v889
        %v891 = vlaneseq
        %v892 = vshrl.u32 %v891, 7
        %v893 = vsub.s32 %v890, %v892
        %v894 = vrot.slane %v880, %v893
        %v895 = vcombine.low %v431, %v437
        %v896 = vcombine.high %v431, %v437
        %v898 = vunpack.c.l.s4 1983009808
        %v899 = vunpack.c.0.s8 %v898
        %v900 = vlaneseq
        %v901 = vshrl.u32 %v900, 7
        %v902 = vsub.s32 %v899, %v901
        %v903 = vrot.slane %v895, %v902
        %v905 = vunpack.c.l.s4 1983009808
        %v906 = vunpack.c.0.s8 %v905
        %v907 = vlaneseq
        %v908 = vshrl.u32 %v907, 7
        %v909 = vsub.s32 %v906, %v908
        %v910 = vrot.slane %v896, %v909
        %v911 = vcombine.low %v855, %v871
        %v912 = vcombine.high %v855, %v871
        %v914 = vunpack.c.l.s4 1934713408
        %v915 = vunpack.c.0.s8 %v914
        %v916 = vlaneseq
        %v917 = vshrl.u32 %v916, 7
        %v918 = vsub.s32 %v915, %v917
        %v919 = vrot.slane %v911, %v918
        %v921 = vunpack.c.l.s4 1934713408
        %v922 = vunpack.c.0.s8 %v921
        %v923 = vlaneseq
        %v924 = vshrl.u32 %v923, 7
        %v925 = vsub.s32 %v922, %v924
        %v926 = vrot.slane %v912, %v925
        %v927 = vcombine.low %v862, %v878
        %v928 = vcombine.high %v862, %v878
        %v930 = vunpack.c.l.s4 1934713408
        %v931 = vunpack.c.0.s8 %v930
        %v932 = vlaneseq
        %v933 = vshrl.u32 %v932, 7
        %v934 = vsub.s32 %v931, %v933
        %v935 = vrot.slane %v927, %v934
        %v937 = vunpack.c.l.s4 1934713408
        %v938 = vunpack.c.0.s8 %v937
        %v939 = vlaneseq
        %v940 = vshrl.u32 %v939, 7
        %v941 = vsub.s32 %v938, %v940
        %v942 = vrot.slane %v928, %v941
        %v943 = vcombine.low %v887, %v903
        %v944 = vcombine.high %v887, %v903
        %v946 = vunpack.c.l.s4 1934713408
        %v947 = vunpack.c.0.s8 %v946
        %v948 = vlaneseq
        %v949 = vshrl.u32 %v948, 7
        %v950 = vsub.s32 %v947, %v949
        %v951 = vrot.slane %v943, %v950
        %v953 = vunpack.c.l.s4 1934713408
        %v954 = vunpack.c.0.s8 %v953
        %v955 = vlaneseq
        %v956 = vshrl.u32 %v955, 7
        %v957 = vsub.s32 %v954, %v956
        %v958 = vrot.slane %v944, %v957
        %v959 = vcombine.low %v894, %v910
        %v960 = vcombine.high %v894, %v910
        %v962 = vunpack.c.l.s4 1934713408
        %v963 = vunpack.c.0.s8 %v962
        %v964 = vlaneseq
        %v965 = vshrl.u32 %v964, 7
        %v966 = vsub.s32 %v963, %v965
        %v967 = vrot.slane %v959, %v966
        %v969 = vunpack.c.l.s4 1934713408
        %v970 = vunpack.c.0.s8 %v969
        %v971 = vlaneseq
        %v972 = vshrl.u32 %v971, 7
        %v973 = vsub.s32 %v970, %v972
        %v974 = vrot.slane %v960, %v973
        %v975 = vcombine.low %v919, %v951
        %v976 = vcombine.high %v919, %v951
        %v977 = vcombine.low %v926, %v958
        %v978 = vcombine.high %v926, %v958
        %v979 = vcombine.low %v935, %v967
        %v980 = vcombine.high %v935, %v967
        %v981 = vcombine.low %v942, %v974
        %v982 = vcombine.high %v942, %v974
        %v983 = vld [vmem:[%s1] sm:$0xf]
        %v984 = vld [vmem:[%s1 + $0x4] sm:$0x3]
        %v985 = vld [vmem:[%s2] sm:$0x1]
        %v986 = vpack.c.bf16 %v703, %v567
        %v987 = vpack.c.bf16 %v975, %v839
        %v988 = vpack.c.bf16 %v704, %v568
        %v989 = vpack.c.bf16 %v976, %v840
        %v990 = vpack.c.bf16 %v705, %v569
        %v991 = vpack.c.bf16 %v977, %v841
        %v992 = vpack.c.bf16 %v706, %v570
        %v993 = vpack.c.bf16 %v978, %v842
        %v994 = vpack.c.bf16 %v707, %v571
        %v995 = vpack.c.bf16 %v979, %v843
        %v996 = vpack.c.bf16 %v708, %v572
        %v997 = vpack.c.bf16 %v980, %v844
        %v998 = vpack.c.bf16 %v709, %v573
        %v999 = vpack.c.bf16 %v981, %v845
        %v1000 = vpack.c.bf16 %v710, %v574
        %v1001 = vpack.c.bf16 %v982, %v846
        %vm1002 = vsmask.f32 256
        %v1004 = vshrl.u32 %v986, 16
        %v1006 = vrot.slane %v1004, 7
        %v1007 = vshll.u32 %v986, 16
        %v1009 = vor.u32 %v1006, %v1007
        %v1011 = vshrl.u32 %v987, 16
        %v1013 = vrot.slane %v1011, 7
        %v1014 = vshll.u32 %v987, 16
        %v1016 = vor.u32 %v1013, %v1014
        %v1017 = vsel %vm1002, %v1006, %v1016
        %v1019 = vshrl.u32 %v988, 16
        %v1021 = vrot.slane %v1019, 7
        %v1022 = vshll.u32 %v988, 16
        %v1024 = vor.u32 %v1021, %v1022
        %v1026 = vshrl.u32 %v989, 16
        %v1028 = vrot.slane %v1026, 7
        %v1029 = vshll.u32 %v989, 16
        %v1031 = vor.u32 %v1028, %v1029
        %v1032 = vsel %vm1002, %v1021, %v1031
        %v1034 = vshrl.u32 %v990, 16
        %v1036 = vrot.slane %v1034, 7
        %v1037 = vshll.u32 %v990, 16
        %v1039 = vor.u32 %v1036, %v1037
        %v1041 = vshrl.u32 %v991, 16
        %v1043 = vrot.slane %v1041, 7
        %v1044 = vshll.u32 %v991, 16
        %v1046 = vor.u32 %v1043, %v1044
        %v1047 = vsel %vm1002, %v1036, %v1046
        %v1049 = vshrl.u32 %v992, 16
        %v1051 = vrot.slane %v1049, 7
        %v1052 = vshll.u32 %v992, 16
        %v1054 = vor.u32 %v1051, %v1052
        %v1056 = vshrl.u32 %v993, 16
        %v1058 = vrot.slane %v1056, 7
        %v1059 = vshll.u32 %v993, 16
        %v1061 = vor.u32 %v1058, %v1059
        %v1062 = vsel %vm1002, %v1051, %v1061
        %v1064 = vshrl.u32 %v994, 16
        %v1066 = vrot.slane %v1064, 7
        %v1067 = vshll.u32 %v994, 16
        %v1069 = vor.u32 %v1066, %v1067
        %v1071 = vshrl.u32 %v995, 16
        %v1073 = vrot.slane %v1071, 7
        %v1074 = vshll.u32 %v995, 16
        %v1076 = vor.u32 %v1073, %v1074
        %v1077 = vsel %vm1002, %v1066, %v1076
        %v1079 = vshrl.u32 %v996, 16
        %v1081 = vrot.slane %v1079, 7
        %v1082 = vshll.u32 %v996, 16
        %v1084 = vor.u32 %v1081, %v1082
        %v1086 = vshrl.u32 %v997, 16
        %v1088 = vrot.slane %v1086, 7
        %v1089 = vshll.u32 %v997, 16
        %v1091 = vor.u32 %v1088, %v1089
        %v1092 = vsel %vm1002, %v1081, %v1091
        %v1094 = vshrl.u32 %v998, 16
        %v1096 = vrot.slane %v1094, 7
        %v1097 = vshll.u32 %v998, 16
        %v1099 = vor.u32 %v1096, %v1097
        %v1101 = vshrl.u32 %v999, 16
        %v1103 = vrot.slane %v1101, 7
        %v1104 = vshll.u32 %v999, 16
        %v1106 = vor.u32 %v1103, %v1104
        %v1107 = vsel %vm1002, %v1096, %v1106
        %v1109 = vshrl.u32 %v1000, 16
        %v1111 = vrot.slane %v1109, 7
        %v1112 = vshll.u32 %v1000, 16
        %v1114 = vor.u32 %v1111, %v1112
        %v1116 = vshrl.u32 %v1001, 16
        %v1118 = vrot.slane %v1116, 7
        %v1119 = vshll.u32 %v1001, 16
        %v1121 = vor.u32 %v1118, %v1119
        %v1122 = vsel %vm1002, %v1111, %v1121
        %vm1131 = vcmask 1040384
        %vm1132 = vmand %vm1131, %vm1002
        %v1133 = vsel %vm1132, 0, %v1009
        %v1134 = vsel %vm1132, 0, %v1024
        %v1135 = vsel %vm1132, 0, %v1039
        %v1136 = vsel %vm1132, 0, %v1054
        %v1137 = vsel %vm1132, 0, %v1069
        %v1138 = vsel %vm1132, 0, %v1084
        %v1139 = vsel %vm1132, 0, %v1099
        %v1140 = vsel %vm1132, 0, %v1114
        %vm1141 = vsmask.f32 7424
        %v1142 = vrot.slane %v1007, 1
        %v1143 = vor.u32 %v1004, %v1142
        %v1144 = vrot.slane %v1014, 1
        %v1145 = vsel %vm1141, %v1143, %v1144
        %v1146 = vor.u32 %v1011, %v1144
        %v1147 = vrot.slane %v1022, 1
        %v1148 = vor.u32 %v1019, %v1147
        %v1149 = vrot.slane %v1029, 1
        %v1150 = vsel %vm1141, %v1148, %v1149
        %v1151 = vor.u32 %v1026, %v1149
        %v1152 = vrot.slane %v1037, 1
        %v1153 = vor.u32 %v1034, %v1152
        %v1154 = vrot.slane %v1044, 1
        %v1155 = vsel %vm1141, %v1153, %v1154
        %v1156 = vor.u32 %v1041, %v1154
        %v1157 = vrot.slane %v1052, 1
        %v1158 = vor.u32 %v1049, %v1157
        %v1159 = vrot.slane %v1059, 1
        %v1160 = vsel %vm1141, %v1158, %v1159
        %v1161 = vor.u32 %v1056, %v1159
        %v1162 = vrot.slane %v1067, 1
        %v1163 = vor.u32 %v1064, %v1162
        %v1164 = vrot.slane %v1074, 1
        %v1165 = vsel %vm1141, %v1163, %v1164
        %v1166 = vor.u32 %v1071, %v1164
        %v1167 = vrot.slane %v1082, 1
        %v1168 = vor.u32 %v1079, %v1167
        %v1169 = vrot.slane %v1089, 1
        %v1170 = vsel %vm1141, %v1168, %v1169
        %v1171 = vor.u32 %v1086, %v1169
        %v1172 = vrot.slane %v1097, 1
        %v1173 = vor.u32 %v1094, %v1172
        %v1174 = vrot.slane %v1104, 1
        %v1175 = vsel %vm1141, %v1173, %v1174
        %v1176 = vor.u32 %v1101, %v1174
        %v1177 = vrot.slane %v1112, 1
        %v1178 = vor.u32 %v1109, %v1177
        %v1179 = vrot.slane %v1119, 1
        %v1180 = vsel %vm1141, %v1178, %v1179
        %v1181 = vor.u32 %v1116, %v1179
        %vm1190 = vcmask 1047552
        %vm1191 = vmand %vm1190, %vm1141
        %v1192 = vsel %vm1191, %v1146, 0
        %v1193 = vsel %vm1191, %v1151, 0
        %v1194 = vsel %vm1191, %v1156, 0
        %v1195 = vsel %vm1191, %v1161, 0
        %v1196 = vsel %vm1191, %v1166, 0
        %v1197 = vsel %vm1191, %v1171, 0
        %v1198 = vsel %vm1191, %v1176, 0
        %v1199 = vsel %vm1191, %v1181, 0
        %1216 = vrot.lane.b32.xlu0 %v986, 4
        %v1217 = vpop.permute.xlu0 %1216
        %1218 = vrot.lane.b32.xlu0 %v987, 4
        %v1219 = vpop.permute.xlu0 %1218
        %1220 = vrot.lane.b32.xlu0 %v988, 4
        %v1221 = vpop.permute.xlu0 %1220
        %1222 = vrot.lane.b32.xlu0 %v989, 4
        %v1223 = vpop.permute.xlu0 %1222
        %1224 = vrot.lane.b32.xlu0 %v990, 4
        %v1225 = vpop.permute.xlu0 %1224
        %1226 = vrot.lane.b32.xlu0 %v991, 4
        %v1227 = vpop.permute.xlu0 %1226
        %1228 = vrot.lane.b32.xlu0 %v992, 4
        %v1229 = vpop.permute.xlu0 %1228
        %1230 = vrot.lane.b32.xlu0 %v993, 4
        %v1231 = vpop.permute.xlu0 %1230
        %1232 = vrot.lane.b32.xlu0 %v994, 4
        %v1233 = vpop.permute.xlu0 %1232
        %1234 = vrot.lane.b32.xlu0 %v995, 4
        %v1235 = vpop.permute.xlu0 %1234
        %1236 = vrot.lane.b32.xlu0 %v996, 4
        %v1237 = vpop.permute.xlu0 %1236
        %1238 = vrot.lane.b32.xlu0 %v997, 4
        %v1239 = vpop.permute.xlu0 %1238
        %1240 = vrot.lane.b32.xlu0 %v998, 4
        %v1241 = vpop.permute.xlu0 %1240
        %1242 = vrot.lane.b32.xlu0 %v999, 4
        %v1243 = vpop.permute.xlu0 %1242
        %1244 = vrot.lane.b32.xlu0 %v1000, 4
        %v1245 = vpop.permute.xlu0 %1244
        %1246 = vrot.lane.b32.xlu0 %v1001, 4
        %v1247 = vpop.permute.xlu0 %1246
        %1256 = vrot.lane.b32.xlu0 %v1145, 8
        %v1257 = vpop.permute.xlu0 %1256
        %1258 = vrot.lane.b32.xlu0 %v1192, 8
        %v1259 = vpop.permute.xlu0 %1258
        %1260 = vrot.lane.b32.xlu0 %v1150, 8
        %v1261 = vpop.permute.xlu0 %1260
        %1262 = vrot.lane.b32.xlu0 %v1193, 8
        %v1263 = vpop.permute.xlu0 %1262
        %1264 = vrot.lane.b32.xlu0 %v1155, 8
        %v1265 = vpop.permute.xlu0 %1264
        %1266 = vrot.lane.b32.xlu0 %v1194, 8
        %v1267 = vpop.permute.xlu0 %1266
        %1268 = vrot.lane.b32.xlu0 %v1160, 8
        %v1269 = vpop.permute.xlu0 %1268
        %1270 = vrot.lane.b32.xlu0 %v1195, 8
        %v1271 = vpop.permute.xlu0 %1270
        %1272 = vrot.lane.b32.xlu0 %v1165, 8
        %v1273 = vpop.permute.xlu0 %1272
        %1274 = vrot.lane.b32.xlu0 %v1196, 8
        %v1275 = vpop.permute.xlu0 %1274
        %1276 = vrot.lane.b32.xlu0 %v1170, 8
        %v1277 = vpop.permute.xlu0 %1276
        %1278 = vrot.lane.b32.xlu0 %v1197, 8
        %v1279 = vpop.permute.xlu0 %1278
        %1280 = vrot.lane.b32.xlu0 %v1175, 8
        %v1281 = vpop.permute.xlu0 %1280
        %1282 = vrot.lane.b32.xlu0 %v1198, 8
        %v1283 = vpop.permute.xlu0 %1282
        %1284 = vrot.lane.b32.xlu0 %v1180, 8
        %v1285 = vpop.permute.xlu0 %1284
        %1286 = vrot.lane.b32.xlu0 %v1199, 8
        %v1287 = vpop.permute.xlu0 %1286
        %vm1288 = vcmask 31744
        %v1291 = vsel %vm1288, %v1133, %v1217
        %v1294 = vsel %vm1288, %v1017, %v1219
        %v1297 = vsel %vm1288, %v1134, %v1221
        %v1300 = vsel %vm1288, %v1032, %v1223
        %v1303 = vsel %vm1288, %v1135, %v1225
        %v1306 = vsel %vm1288, %v1047, %v1227
        %v1309 = vsel %vm1288, %v1136, %v1229
        %v1312 = vsel %vm1288, %v1062, %v1231
        %v1315 = vsel %vm1288, %v1137, %v1233
        %v1318 = vsel %vm1288, %v1077, %v1235
        %v1321 = vsel %vm1288, %v1138, %v1237
        %v1324 = vsel %vm1288, %v1092, %v1239
        %v1327 = vsel %vm1288, %v1139, %v1241
        %v1330 = vsel %vm1288, %v1107, %v1243
        %v1333 = vsel %vm1288, %v1140, %v1245
        %v1336 = vsel %vm1288, %v1122, %v1247
        %vm1337 = vcmask 64512
        %v1339 = vsel %vm1337, %v1291, %v1257
        %v1341 = vsel %vm1337, %v1294, %v1259
        %v1343 = vsel %vm1337, %v1297, %v1261
        %v1345 = vsel %vm1337, %v1300, %v1263
        %v1347 = vsel %vm1337, %v1303, %v1265
        %v1349 = vsel %vm1337, %v1306, %v1267
        %v1351 = vsel %vm1337, %v1309, %v1269
        %v1353 = vsel %vm1337, %v1312, %v1271
        %v1355 = vsel %vm1337, %v1315, %v1273
        %v1357 = vsel %vm1337, %v1318, %v1275
        %v1359 = vsel %vm1337, %v1321, %v1277
        %v1361 = vsel %vm1337, %v1324, %v1279
        %v1363 = vsel %vm1337, %v1327, %v1281
        %v1365 = vsel %vm1337, %v1330, %v1283
        %v1367 = vsel %vm1337, %v1333, %v1285
        %v1369 = vsel %vm1337, %v1336, %v1287
        %v1371 = vlaneseq
        %v1372 = vshrl.u32 %v1371, 7
        %v1373 = vsub.s32 0, %v1372
        %v1374 = vrot.slane %v985, %v1373
        %v1378 = vunpack.c.l.b16 %v983
        %v1379 = vunpack.c.l.b16 %v984
        %v1380 = vpack.c.b16 %v1379, %v1378
        %vm1381 = vcmask 97280
        %v1382 = vsel %vm1381, %v1339, 0
        %v1384 = vsel %vm1381, %v1341, 0
        %v1386 = vsel %vm1381, %v1343, 0
        %v1388 = vsel %vm1381, %v1345, 0
        %v1390 = vsel %vm1381, %v1347, 0
        %v1392 = vsel %vm1381, %v1349, 0
        %v1394 = vsel %vm1381, %v1351, 0
        %v1396 = vsel %vm1381, %v1353, 0
        %v1398 = vsel %vm1381, %v1355, 0
        %v1400 = vsel %vm1381, %v1357, 0
        %v1402 = vsel %vm1381, %v1359, 0
        %v1404 = vsel %vm1381, %v1361, 0
        %v1406 = vsel %vm1381, %v1363, 0
        %v1408 = vsel %vm1381, %v1365, 0
        %v1410 = vsel %vm1381, %v1367, 0
        %v1412 = vsel %vm1381, %v1369, 0
        %vm1414 = vcmask 1045504
        %v1416 = vsel %vm1414, %v1380, 0
        %1418 = vmatprep.subr.bf16.mxu0 0
        %1419 = vmatpush1.bf16.msra.mxu0 %v1416
        %1420 = vmatprep.subr.bf16.mxu0 0
        %1421 = vmatpush1.bf16.msra.mxu0 0
        %1422 = vmatprep.subr.bf16.mxu0 0
        %1423 = vmatpush1.bf16.msra.mxu0 0
        %1424 = vmatprep.subr.bf16.mxu0 0
        %1425 = vmatpush1.bf16.msra.mxu0 0
        %1426 = vmatprep.subr.bf16.mxu0 0
        %1427 = vmatpush1.bf16.msra.mxu0 0
        %1428 = vmatprep.subr.bf16.mxu0 0
        %1429 = vmatpush1.bf16.msra.mxu0 0
        %1430 = vmatprep.subr.bf16.mxu0 0
        %1431 = vmatpush1.bf16.msra.mxu0 0
        %1432 = vmatprep.subr.bf16.mxu0 0
        %1433 = vmatpush1.bf16.msra.mxu0 0
        %1434 = vmatprep.subr.bf16.mxu0 0
        %1435 = vmatpush1.bf16.msra.mxu0 0
        %1436 = vmatprep.subr.bf16.mxu0 0
        %1437 = vmatpush1.bf16.msra.mxu0 0
        %1438 = vmatprep.subr.bf16.mxu0 0
        %1439 = vmatpush1.bf16.msra.mxu0 0
        %1440 = vmatprep.subr.bf16.mxu0 0
        %1441 = vmatpush1.bf16.msra.mxu0 0
        %1442 = vmatprep.subr.bf16.mxu0 0
        %1443 = vmatpush1.bf16.msra.mxu0 0
        %1444 = vmatprep.subr.bf16.mxu0 0
        %1445 = vmatpush1.bf16.msra.mxu0 0
        %1446 = vmatprep.subr.bf16.mxu0 0
        %1447 = vmatpush1.bf16.msra.mxu0 0
        %1448 = vmatprep.subr.bf16.mxu0 0
        %1449 = vmatpush1.bf16.msra.mxu0 0
        %1450 = vmatprep.mubr.bf16.mxu0 0
        %1451 = vmatmul.mubr.bf16.gmra.mrb[0].mxu0 %v1382
        %v1452 = vpop.f32.mrb[0].mxu0
        %v1453 = vadd.f32 %v1374, %v1452
        %v1454 = vpop.f32.mrb[0].mxu0
        %v1455 = vpop.f32.mrb[0].mxu0
        %v1456 = vadd.f32 %v1374, %v1455
        %v1457 = vpop.f32.mrb[0].mxu0
        %1458 = vmatprep.mubr.bf16.mxu0 0
        %1459 = vmatmul.mubr.bf16.gmra.mrb[0].mxu0 %v1384
        %v1460 = vpop.f32.mrb[0].mxu0
        %v1461 = vadd.f32 %v1374, %v1460
        %v1462 = vpop.f32.mrb[0].mxu0
        %v1463 = vpop.f32.mrb[0].mxu0
        %v1464 = vadd.f32 %v1374, %v1463
        %v1465 = vpop.f32.mrb[0].mxu0
        %1466 = vmatprep.mubr.bf16.mxu0 0
        %1467 = vmatmul.mubr.bf16.gmra.mrb[0].mxu0 %v1386
        %v1468 = vpop.f32.mrb[0].mxu0
        %v1469 = vadd.f32 %v1374, %v1468
        %v1470 = vpop.f32.mrb[0].mxu0
        %v1471 = vpop.f32.mrb[0].mxu0
        %v1472 = vadd.f32 %v1374, %v1471
        %v1473 = vpop.f32.mrb[0].mxu0
        %1474 = vmatprep.mubr.bf16.mxu0 0
        %1475 = vmatmul.mubr.bf16.gmra.mrb[0].mxu0 %v1388
        %v1476 = vpop.f32.mrb[0].mxu0
        %v1477 = vadd.f32 %v1374, %v1476
        %v1478 = vpop.f32.mrb[0].mxu0
        %v1479 = vpop.f32.mrb[0].mxu0
        %v1480 = vadd.f32 %v1374, %v1479
        %v1481 = vpop.f32.mrb[0].mxu0
        %1482 = vmatprep.mubr.bf16.mxu0 0
        %1483 = vmatmul.mubr.bf16.gmra.mrb[0].mxu0 %v1390
        %v1484 = vpop.f32.mrb[0].mxu0
        %v1485 = vadd.f32 %v1374, %v1484
        %v1486 = vpop.f32.mrb[0].mxu0
        %v1487 = vpop.f32.mrb[0].mxu0
        %v1488 = vadd.f32 %v1374, %v1487
        %v1489 = vpop.f32.mrb[0].mxu0
        %1490 = vmatprep.mubr.bf16.mxu0 0
        %1491 = vmatmul.mubr.bf16.gmra.mrb[0].mxu0 %v1392
        %v1492 = vpop.f32.mrb[0].mxu0
        %v1493 = vadd.f32 %v1374, %v1492
        %v1494 = vpop.f32.mrb[0].mxu0
        %v1495 = vpop.f32.mrb[0].mxu0
        %v1496 = vadd.f32 %v1374, %v1495
        %v1497 = vpop.f32.mrb[0].mxu0
        %1498 = vmatprep.mubr.bf16.mxu0 0
        %1499 = vmatmul.mubr.bf16.gmra.mrb[0].mxu0 %v1394
        %v1500 = vpop.f32.mrb[0].mxu0
        %v1501 = vadd.f32 %v1374, %v1500
        %v1502 = vpop.f32.mrb[0].mxu0
        %v1503 = vpop.f32.mrb[0].mxu0
        %v1504 = vadd.f32 %v1374, %v1503
        %v1505 = vpop.f32.mrb[0].mxu0
        %1506 = vmatprep.mubr.bf16.mxu0 0
        %1507 = vmatmul.mubr.bf16.gmra.mrb[0].mxu0 %v1396
        %v1508 = vpop.f32.mrb[0].mxu0
        %v1509 = vadd.f32 %v1374, %v1508
        %v1510 = vpop.f32.mrb[0].mxu0
        %v1511 = vpop.f32.mrb[0].mxu0
        %v1512 = vadd.f32 %v1374, %v1511
        %v1513 = vpop.f32.mrb[0].mxu0
        %1514 = vmatprep.mubr.bf16.mxu0 0
        %1515 = vmatmul.mubr.bf16.gmra.mrb[0].mxu0 %v1398
        %v1516 = vpop.f32.mrb[0].mxu0
        %v1517 = vadd.f32 %v1374, %v1516
        %v1518 = vpop.f32.mrb[0].mxu0
        %v1519 = vpop.f32.mrb[0].mxu0
        %v1520 = vadd.f32 %v1374, %v1519
        %v1521 = vpop.f32.mrb[0].mxu0
        %1522 = vmatprep.mubr.bf16.mxu0 0
        %1523 = vmatmul.mubr.bf16.gmra.mrb[0].mxu0 %v1400
        %v1524 = vpop.f32.mrb[0].mxu0
        %v1525 = vadd.f32 %v1374, %v1524
        %v1526 = vpop.f32.mrb[0].mxu0
        %v1527 = vpop.f32.mrb[0].mxu0
        %v1528 = vadd.f32 %v1374, %v1527
        %v1529 = vpop.f32.mrb[0].mxu0
        %1530 = vmatprep.mubr.bf16.mxu0 0
        %1531 = vmatmul.mubr.bf16.gmra.mrb[0].mxu0 %v1402
        %v1532 = vpop.f32.mrb[0].mxu0
        %v1533 = vadd.f32 %v1374, %v1532
        %v1534 = vpop.f32.mrb[0].mxu0
        %v1535 = vpop.f32.mrb[0].mxu0
        %v1536 = vadd.f32 %v1374, %v1535
        %v1537 = vpop.f32.mrb[0].mxu0
        %1538 = vmatprep.mubr.bf16.mxu0 0
        %1539 = vmatmul.mubr.bf16.gmra.mrb[0].mxu0 %v1404
        %v1540 = vpop.f32.mrb[0].mxu0
        %v1541 = vadd.f32 %v1374, %v1540
        %v1542 = vpop.f32.mrb[0].mxu0
        %v1543 = vpop.f32.mrb[0].mxu0
        %v1544 = vadd.f32 %v1374, %v1543
        %v1545 = vpop.f32.mrb[0].mxu0
        %1546 = vmatprep.mubr.bf16.mxu0 0
        %1547 = vmatmul.mubr.bf16.gmra.mrb[0].mxu0 %v1406
        %v1548 = vpop.f32.mrb[0].mxu0
        %v1549 = vadd.f32 %v1374, %v1548
        %v1550 = vpop.f32.mrb[0].mxu0
        %v1551 = vpop.f32.mrb[0].mxu0
        %v1552 = vadd.f32 %v1374, %v1551
        %v1553 = vpop.f32.mrb[0].mxu0
        %1554 = vmatprep.mubr.bf16.mxu0 0
        %1555 = vmatmul.mubr.bf16.gmra.mrb[0].mxu0 %v1408
        %v1556 = vpop.f32.mrb[0].mxu0
        %v1557 = vadd.f32 %v1374, %v1556
        %v1558 = vpop.f32.mrb[0].mxu0
        %v1559 = vpop.f32.mrb[0].mxu0
        %v1560 = vadd.f32 %v1374, %v1559
        %v1561 = vpop.f32.mrb[0].mxu0
        %1562 = vmatprep.mubr.bf16.mxu0 0
        %1563 = vmatmul.mubr.bf16.gmra.mrb[0].mxu0 %v1410
        %v1564 = vpop.f32.mrb[0].mxu0
        %v1565 = vadd.f32 %v1374, %v1564
        %v1566 = vpop.f32.mrb[0].mxu0
        %v1567 = vpop.f32.mrb[0].mxu0
        %v1568 = vadd.f32 %v1374, %v1567
        %v1569 = vpop.f32.mrb[0].mxu0
        %1570 = vmatprep.mubr.bf16.mxu0 0
        %1571 = vmatmul.mubr.bf16.gmra.mrb[0].mxu0 %v1412
        %v1572 = vpop.f32.mrb[0].mxu0
        %v1573 = vadd.f32 %v1374, %v1572
        %v1574 = vpop.f32.mrb[0].mxu0
        %v1575 = vpop.f32.mrb[0].mxu0
        %v1576 = vadd.f32 %v1374, %v1575
        %v1577 = vpop.f32.mrb[0].mxu0
        %1578 = vdwg.mxu0
        %v1579 = vmax.f32 %v1453, 0.0
        %v1580 = vmax.f32 %v1456, 0.0
        %v1581 = vmax.f32 %v1461, 0.0
        %v1582 = vmax.f32 %v1464, 0.0
        %v1583 = vmax.f32 %v1469, 0.0
        %v1584 = vmax.f32 %v1472, 0.0
        %v1585 = vmax.f32 %v1477, 0.0
        %v1586 = vmax.f32 %v1480, 0.0
        %v1587 = vmax.f32 %v1485, 0.0
        %v1588 = vmax.f32 %v1488, 0.0
        %v1589 = vmax.f32 %v1493, 0.0
        %v1590 = vmax.f32 %v1496, 0.0
        %v1591 = vmax.f32 %v1501, 0.0
        %v1592 = vmax.f32 %v1504, 0.0
        %v1593 = vmax.f32 %v1509, 0.0
        %v1594 = vmax.f32 %v1512, 0.0
        %v1595 = vmax.f32 %v1517, 0.0
        %v1596 = vmax.f32 %v1520, 0.0
        %v1597 = vmax.f32 %v1525, 0.0
        %v1598 = vmax.f32 %v1528, 0.0
        %v1599 = vmax.f32 %v1533, 0.0
        %v1600 = vmax.f32 %v1536, 0.0
        %v1601 = vmax.f32 %v1541, 0.0
        %v1602 = vmax.f32 %v1544, 0.0
        %v1603 = vmax.f32 %v1549, 0.0
        %v1604 = vmax.f32 %v1552, 0.0
        %v1605 = vmax.f32 %v1557, 0.0
        %v1606 = vmax.f32 %v1560, 0.0
        %v1607 = vmax.f32 %v1565, 0.0
        %v1608 = vmax.f32 %v1568, 0.0
        %v1609 = vmax.f32 %v1573, 0.0
        %v1610 = vmax.f32 %v1576, 0.0
        %v1643 = vcombine.high %v1579, %v1579
        %v1645 = vunpack.c.l.s4 1983009808
        %v1646 = vunpack.c.0.s8 %v1645
        %v1647 = vlaneseq
        %v1648 = vshrl.u32 %v1647, 7
        %v1649 = vsub.s32 %v1646, %v1648
        %v1650 = vrot.slane %v1579, %v1649
        %v1652 = vunpack.c.l.s4 1983009808
        %v1653 = vunpack.c.0.s8 %v1652
        %v1654 = vlaneseq
        %v1655 = vshrl.u32 %v1654, 7
        %v1656 = vsub.s32 %v1653, %v1655
        %v1657 = vrot.slane %v1643, %v1656
        %v1658 = vcombine.high %v1650, %v1650
        %v1659 = vcombine.high %v1657, %v1657
        %v1660 = vcombine.high %v1580, %v1580
        %v1662 = vunpack.c.l.s4 1983009808
        %v1663 = vunpack.c.0.s8 %v1662
        %v1664 = vlaneseq
        %v1665 = vshrl.u32 %v1664, 7
        %v1666 = vsub.s32 %v1663, %v1665
        %v1667 = vrot.slane %v1580, %v1666
        %v1669 = vunpack.c.l.s4 1983009808
        %v1670 = vunpack.c.0.s8 %v1669
        %v1671 = vlaneseq
        %v1672 = vshrl.u32 %v1671, 7
        %v1673 = vsub.s32 %v1670, %v1672
        %v1674 = vrot.slane %v1660, %v1673
        %v1675 = vcombine.high %v1667, %v1667
        %v1676 = vcombine.high %v1674, %v1674
        %v1677 = vcombine.high %v1581, %v1581
        %v1679 = vunpack.c.l.s4 1983009808
        %v1680 = vunpack.c.0.s8 %v1679
        %v1681 = vlaneseq
        %v1682 = vshrl.u32 %v1681, 7
        %v1683 = vsub.s32 %v1680, %v1682
        %v1684 = vrot.slane %v1581, %v1683
        %v1686 = vunpack.c.l.s4 1983009808
        %v1687 = vunpack.c.0.s8 %v1686
        %v1688 = vlaneseq
        %v1689 = vshrl.u32 %v1688, 7
        %v1690 = vsub.s32 %v1687, %v1689
        %v1691 = vrot.slane %v1677, %v1690
        %v1692 = vcombine.high %v1684, %v1684
        %v1693 = vcombine.high %v1691, %v1691
        %v1694 = vcombine.high %v1582, %v1582
        %v1696 = vunpack.c.l.s4 1983009808
        %v1697 = vunpack.c.0.s8 %v1696
        %v1698 = vlaneseq
        %v1699 = vshrl.u32 %v1698, 7
        %v1700 = vsub.s32 %v1697, %v1699
        %v1701 = vrot.slane %v1582, %v1700
        %v1703 = vunpack.c.l.s4 1983009808
        %v1704 = vunpack.c.0.s8 %v1703
        %v1705 = vlaneseq
        %v1706 = vshrl.u32 %v1705, 7
        %v1707 = vsub.s32 %v1704, %v1706
        %v1708 = vrot.slane %v1694, %v1707
        %v1709 = vcombine.high %v1701, %v1701
        %v1710 = vcombine.high %v1708, %v1708
        %v1711 = vcombine.high %v1583, %v1583
        %v1713 = vunpack.c.l.s4 1983009808
        %v1714 = vunpack.c.0.s8 %v1713
        %v1715 = vlaneseq
        %v1716 = vshrl.u32 %v1715, 7
        %v1717 = vsub.s32 %v1714, %v1716
        %v1718 = vrot.slane %v1583, %v1717
        %v1720 = vunpack.c.l.s4 1983009808
        %v1721 = vunpack.c.0.s8 %v1720
        %v1722 = vlaneseq
        %v1723 = vshrl.u32 %v1722, 7
        %v1724 = vsub.s32 %v1721, %v1723
        %v1725 = vrot.slane %v1711, %v1724
        %v1726 = vcombine.high %v1718, %v1718
        %v1727 = vcombine.high %v1725, %v1725
        %v1728 = vcombine.high %v1584, %v1584
        %v1730 = vunpack.c.l.s4 1983009808
        %v1731 = vunpack.c.0.s8 %v1730
        %v1732 = vlaneseq
        %v1733 = vshrl.u32 %v1732, 7
        %v1734 = vsub.s32 %v1731, %v1733
        %v1735 = vrot.slane %v1584, %v1734
        %v1737 = vunpack.c.l.s4 1983009808
        %v1738 = vunpack.c.0.s8 %v1737
        %v1739 = vlaneseq
        %v1740 = vshrl.u32 %v1739, 7
        %v1741 = vsub.s32 %v1738, %v1740
        %v1742 = vrot.slane %v1728, %v1741
        %v1743 = vcombine.high %v1735, %v1735
        %v1744 = vcombine.high %v1742, %v1742
        %v1745 = vcombine.high %v1585, %v1585
        %v1747 = vunpack.c.l.s4 1983009808
        %v1748 = vunpack.c.0.s8 %v1747
        %v1749 = vlaneseq
        %v1750 = vshrl.u32 %v1749, 7
        %v1751 = vsub.s32 %v1748, %v1750
        %v1752 = vrot.slane %v1585, %v1751
        %v1754 = vunpack.c.l.s4 1983009808
        %v1755 = vunpack.c.0.s8 %v1754
        %v1756 = vlaneseq
        %v1757 = vshrl.u32 %v1756, 7
        %v1758 = vsub.s32 %v1755, %v1757
        %v1759 = vrot.slane %v1745, %v1758
        %v1760 = vcombine.high %v1752, %v1752
        %v1761 = vcombine.high %v1759, %v1759
        %v1762 = vcombine.high %v1586, %v1586
        %v1764 = vunpack.c.l.s4 1983009808
        %v1765 = vunpack.c.0.s8 %v1764
        %v1766 = vlaneseq
        %v1767 = vshrl.u32 %v1766, 7
        %v1768 = vsub.s32 %v1765, %v1767
        %v1769 = vrot.slane %v1586, %v1768
        %v1771 = vunpack.c.l.s4 1983009808
        %v1772 = vunpack.c.0.s8 %v1771
        %v1773 = vlaneseq
        %v1774 = vshrl.u32 %v1773, 7
        %v1775 = vsub.s32 %v1772, %v1774
        %v1776 = vrot.slane %v1762, %v1775
        %v1777 = vcombine.high %v1769, %v1769
        %v1778 = vcombine.high %v1776, %v1776
        %v1779 = vcombine.high %v1587, %v1587
        %v1781 = vunpack.c.l.s4 1983009808
        %v1782 = vunpack.c.0.s8 %v1781
        %v1783 = vlaneseq
        %v1784 = vshrl.u32 %v1783, 7
        %v1785 = vsub.s32 %v1782, %v1784
        %v1786 = vrot.slane %v1587, %v1785
        %v1788 = vunpack.c.l.s4 1983009808
        %v1789 = vunpack.c.0.s8 %v1788
        %v1790 = vlaneseq
        %v1791 = vshrl.u32 %v1790, 7
        %v1792 = vsub.s32 %v1789, %v1791
        %v1793 = vrot.slane %v1779, %v1792
        %v1794 = vcombine.high %v1786, %v1786
        %v1795 = vcombine.high %v1793, %v1793
        %v1796 = vcombine.high %v1588, %v1588
        %v1798 = vunpack.c.l.s4 1983009808
        %v1799 = vunpack.c.0.s8 %v1798
        %v1800 = vlaneseq
        %v1801 = vshrl.u32 %v1800, 7
        %v1802 = vsub.s32 %v1799, %v1801
        %v1803 = vrot.slane %v1588, %v1802
        %v1805 = vunpack.c.l.s4 1983009808
        %v1806 = vunpack.c.0.s8 %v1805
        %v1807 = vlaneseq
        %v1808 = vshrl.u32 %v1807, 7
        %v1809 = vsub.s32 %v1806, %v1808
        %v1810 = vrot.slane %v1796, %v1809
        %v1811 = vcombine.high %v1803, %v1803
        %v1812 = vcombine.high %v1810, %v1810
        %v1813 = vcombine.high %v1589, %v1589
        %v1815 = vunpack.c.l.s4 1983009808
        %v1816 = vunpack.c.0.s8 %v1815
        %v1817 = vlaneseq
        %v1818 = vshrl.u32 %v1817, 7
        %v1819 = vsub.s32 %v1816, %v1818
        %v1820 = vrot.slane %v1589, %v1819
        %v1822 = vunpack.c.l.s4 1983009808
        %v1823 = vunpack.c.0.s8 %v1822
        %v1824 = vlaneseq
        %v1825 = vshrl.u32 %v1824, 7
        %v1826 = vsub.s32 %v1823, %v1825
        %v1827 = vrot.slane %v1813, %v1826
        %v1828 = vcombine.high %v1820, %v1820
        %v1829 = vcombine.high %v1827, %v1827
        %v1830 = vcombine.high %v1590, %v1590
        %v1832 = vunpack.c.l.s4 1983009808
        %v1833 = vunpack.c.0.s8 %v1832
        %v1834 = vlaneseq
        %v1835 = vshrl.u32 %v1834, 7
        %v1836 = vsub.s32 %v1833, %v1835
        %v1837 = vrot.slane %v1590, %v1836
        %v1839 = vunpack.c.l.s4 1983009808
        %v1840 = vunpack.c.0.s8 %v1839
        %v1841 = vlaneseq
        %v1842 = vshrl.u32 %v1841, 7
        %v1843 = vsub.s32 %v1840, %v1842
        %v1844 = vrot.slane %v1830, %v1843
        %v1845 = vcombine.high %v1837, %v1837
        %v1846 = vcombine.high %v1844, %v1844
        %v1847 = vcombine.high %v1591, %v1591
        %v1849 = vunpack.c.l.s4 1983009808
        %v1850 = vunpack.c.0.s8 %v1849
        %v1851 = vlaneseq
        %v1852 = vshrl.u32 %v1851, 7
        %v1853 = vsub.s32 %v1850, %v1852
        %v1854 = vrot.slane %v1591, %v1853
        %v1856 = vunpack.c.l.s4 1983009808
        %v1857 = vunpack.c.0.s8 %v1856
        %v1858 = vlaneseq
        %v1859 = vshrl.u32 %v1858, 7
        %v1860 = vsub.s32 %v1857, %v1859
        %v1861 = vrot.slane %v1847, %v1860
        %v1862 = vcombine.high %v1854, %v1854
        %v1863 = vcombine.high %v1861, %v1861
        %v1864 = vcombine.high %v1592, %v1592
        %v1866 = vunpack.c.l.s4 1983009808
        %v1867 = vunpack.c.0.s8 %v1866
        %v1868 = vlaneseq
        %v1869 = vshrl.u32 %v1868, 7
        %v1870 = vsub.s32 %v1867, %v1869
        %v1871 = vrot.slane %v1592, %v1870
        %v1873 = vunpack.c.l.s4 1983009808
        %v1874 = vunpack.c.0.s8 %v1873
        %v1875 = vlaneseq
        %v1876 = vshrl.u32 %v1875, 7
        %v1877 = vsub.s32 %v1874, %v1876
        %v1878 = vrot.slane %v1864, %v1877
        %v1879 = vcombine.high %v1871, %v1871
        %v1880 = vcombine.high %v1878, %v1878
        %v1881 = vcombine.high %v1593, %v1593
        %v1883 = vunpack.c.l.s4 1983009808
        %v1884 = vunpack.c.0.s8 %v1883
        %v1885 = vlaneseq
        %v1886 = vshrl.u32 %v1885, 7
        %v1887 = vsub.s32 %v1884, %v1886
        %v1888 = vrot.slane %v1593, %v1887
        %v1890 = vunpack.c.l.s4 1983009808
        %v1891 = vunpack.c.0.s8 %v1890
        %v1892 = vlaneseq
        %v1893 = vshrl.u32 %v1892, 7
        %v1894 = vsub.s32 %v1891, %v1893
        %v1895 = vrot.slane %v1881, %v1894
        %v1896 = vcombine.high %v1888, %v1888
        %v1897 = vcombine.high %v1895, %v1895
        %v1898 = vcombine.high %v1594, %v1594
        %v1900 = vunpack.c.l.s4 1983009808
        %v1901 = vunpack.c.0.s8 %v1900
        %v1902 = vlaneseq
        %v1903 = vshrl.u32 %v1902, 7
        %v1904 = vsub.s32 %v1901, %v1903
        %v1905 = vrot.slane %v1594, %v1904
        %v1907 = vunpack.c.l.s4 1983009808
        %v1908 = vunpack.c.0.s8 %v1907
        %v1909 = vlaneseq
        %v1910 = vshrl.u32 %v1909, 7
        %v1911 = vsub.s32 %v1908, %v1910
        %v1912 = vrot.slane %v1898, %v1911
        %v1913 = vcombine.high %v1905, %v1905
        %v1914 = vcombine.high %v1912, %v1912
        %v1915 = vcombine.high %v1595, %v1595
        %v1917 = vunpack.c.l.s4 1983009808
        %v1918 = vunpack.c.0.s8 %v1917
        %v1919 = vlaneseq
        %v1920 = vshrl.u32 %v1919, 7
        %v1921 = vsub.s32 %v1918, %v1920
        %v1922 = vrot.slane %v1595, %v1921
        %v1924 = vunpack.c.l.s4 1983009808
        %v1925 = vunpack.c.0.s8 %v1924
        %v1926 = vlaneseq
        %v1927 = vshrl.u32 %v1926, 7
        %v1928 = vsub.s32 %v1925, %v1927
        %v1929 = vrot.slane %v1915, %v1928
        %v1930 = vcombine.high %v1922, %v1922
        %v1931 = vcombine.high %v1929, %v1929
        %v1932 = vcombine.high %v1596, %v1596
        %v1934 = vunpack.c.l.s4 1983009808
        %v1935 = vunpack.c.0.s8 %v1934
        %v1936 = vlaneseq
        %v1937 = vshrl.u32 %v1936, 7
        %v1938 = vsub.s32 %v1935, %v1937
        %v1939 = vrot.slane %v1596, %v1938
        %v1941 = vunpack.c.l.s4 1983009808
        %v1942 = vunpack.c.0.s8 %v1941
        %v1943 = vlaneseq
        %v1944 = vshrl.u32 %v1943, 7
        %v1945 = vsub.s32 %v1942, %v1944
        %v1946 = vrot.slane %v1932, %v1945
        %v1947 = vcombine.high %v1939, %v1939
        %v1948 = vcombine.high %v1946, %v1946
        %v1949 = vcombine.high %v1597, %v1597
        %v1951 = vunpack.c.l.s4 1983009808
        %v1952 = vunpack.c.0.s8 %v1951
        %v1953 = vlaneseq
        %v1954 = vshrl.u32 %v1953, 7
        %v1955 = vsub.s32 %v1952, %v1954
        %v1956 = vrot.slane %v1597, %v1955
        %v1958 = vunpack.c.l.s4 1983009808
        %v1959 = vunpack.c.0.s8 %v1958
        %v1960 = vlaneseq
        %v1961 = vshrl.u32 %v1960, 7
        %v1962 = vsub.s32 %v1959, %v1961
        %v1963 = vrot.slane %v1949, %v1962
        %v1964 = vcombine.high %v1956, %v1956
        %v1965 = vcombine.high %v1963, %v1963
        %v1966 = vcombine.high %v1598, %v1598
        %v1968 = vunpack.c.l.s4 1983009808
        %v1969 = vunpack.c.0.s8 %v1968
        %v1970 = vlaneseq
        %v1971 = vshrl.u32 %v1970, 7
        %v1972 = vsub.s32 %v1969, %v1971
        %v1973 = vrot.slane %v1598, %v1972
        %v1975 = vunpack.c.l.s4 1983009808
        %v1976 = vunpack.c.0.s8 %v1975
        %v1977 = vlaneseq
        %v1978 = vshrl.u32 %v1977, 7
        %v1979 = vsub.s32 %v1976, %v1978
        %v1980 = vrot.slane %v1966, %v1979
        %v1981 = vcombine.high %v1973, %v1973
        %v1982 = vcombine.high %v1980, %v1980
        %v1983 = vcombine.high %v1599, %v1599
        %v1985 = vunpack.c.l.s4 1983009808
        %v1986 = vunpack.c.0.s8 %v1985
        %v1987 = vlaneseq
        %v1988 = vshrl.u32 %v1987, 7
        %v1989 = vsub.s32 %v1986, %v1988
        %v1990 = vrot.slane %v1599, %v1989
        %v1992 = vunpack.c.l.s4 1983009808
        %v1993 = vunpack.c.0.s8 %v1992
        %v1994 = vlaneseq
        %v1995 = vshrl.u32 %v1994, 7
        %v1996 = vsub.s32 %v1993, %v1995
        %v1997 = vrot.slane %v1983, %v1996
        %v1998 = vcombine.high %v1990, %v1990
        %v1999 = vcombine.high %v1997, %v1997
        %v2000 = vcombine.high %v1600, %v1600
        %v2002 = vunpack.c.l.s4 1983009808
        %v2003 = vunpack.c.0.s8 %v2002
        %v2004 = vlaneseq
        %v2005 = vshrl.u32 %v2004, 7
        %v2006 = vsub.s32 %v2003, %v2005
        %v2007 = vrot.slane %v1600, %v2006
        %v2009 = vunpack.c.l.s4 1983009808
        %v2010 = vunpack.c.0.s8 %v2009
        %v2011 = vlaneseq
        %v2012 = vshrl.u32 %v2011, 7
        %v2013 = vsub.s32 %v2010, %v2012
        %v2014 = vrot.slane %v2000, %v2013
        %v2015 = vcombine.high %v2007, %v2007
        %v2016 = vcombine.high %v2014, %v2014
        %v2017 = vcombine.high %v1601, %v1601
        %v2019 = vunpack.c.l.s4 1983009808
        %v2020 = vunpack.c.0.s8 %v2019
        %v2021 = vlaneseq
        %v2022 = vshrl.u32 %v2021, 7
        %v2023 = vsub.s32 %v2020, %v2022
        %v2024 = vrot.slane %v1601, %v2023
        %v2026 = vunpack.c.l.s4 1983009808
        %v2027 = vunpack.c.0.s8 %v2026
        %v2028 = vlaneseq
        %v2029 = vshrl.u32 %v2028, 7
        %v2030 = vsub.s32 %v2027, %v2029
        %v2031 = vrot.slane %v2017, %v2030
        %v2032 = vcombine.high %v2024, %v2024
        %v2033 = vcombine.high %v2031, %v2031
        %v2034 = vcombine.high %v1602, %v1602
        %v2036 = vunpack.c.l.s4 1983009808
        %v2037 = vunpack.c.0.s8 %v2036
        %v2038 = vlaneseq
        %v2039 = vshrl.u32 %v2038, 7
        %v2040 = vsub.s32 %v2037, %v2039
        %v2041 = vrot.slane %v1602, %v2040
        %v2043 = vunpack.c.l.s4 1983009808
        %v2044 = vunpack.c.0.s8 %v2043
        %v2045 = vlaneseq
        %v2046 = vshrl.u32 %v2045, 7
        %v2047 = vsub.s32 %v2044, %v2046
        %v2048 = vrot.slane %v2034, %v2047
        %v2049 = vcombine.high %v2041, %v2041
        %v2050 = vcombine.high %v2048, %v2048
        %v2051 = vcombine.high %v1603, %v1603
        %v2053 = vunpack.c.l.s4 1983009808
        %v2054 = vunpack.c.0.s8 %v2053
        %v2055 = vlaneseq
        %v2056 = vshrl.u32 %v2055, 7
        %v2057 = vsub.s32 %v2054, %v2056
        %v2058 = vrot.slane %v1603, %v2057
        %v2060 = vunpack.c.l.s4 1983009808
        %v2061 = vunpack.c.0.s8 %v2060
        %v2062 = vlaneseq
        %v2063 = vshrl.u32 %v2062, 7
        %v2064 = vsub.s32 %v2061, %v2063
        %v2065 = vrot.slane %v2051, %v2064
        %v2066 = vcombine.high %v2058, %v2058
        %v2067 = vcombine.high %v2065, %v2065
        %v2068 = vcombine.high %v1604, %v1604
        %v2070 = vunpack.c.l.s4 1983009808
        %v2071 = vunpack.c.0.s8 %v2070
        %v2072 = vlaneseq
        %v2073 = vshrl.u32 %v2072, 7
        %v2074 = vsub.s32 %v2071, %v2073
        %v2075 = vrot.slane %v1604, %v2074
        %v2077 = vunpack.c.l.s4 1983009808
        %v2078 = vunpack.c.0.s8 %v2077
        %v2079 = vlaneseq
        %v2080 = vshrl.u32 %v2079, 7
        %v2081 = vsub.s32 %v2078, %v2080
        %v2082 = vrot.slane %v2068, %v2081
        %v2083 = vcombine.high %v2075, %v2075
        %v2084 = vcombine.high %v2082, %v2082
        %v2085 = vcombine.high %v1605, %v1605
        %v2087 = vunpack.c.l.s4 1983009808
        %v2088 = vunpack.c.0.s8 %v2087
        %v2089 = vlaneseq
        %v2090 = vshrl.u32 %v2089, 7
        %v2091 = vsub.s32 %v2088, %v2090
        %v2092 = vrot.slane %v1605, %v2091
        %v2094 = vunpack.c.l.s4 1983009808
        %v2095 = vunpack.c.0.s8 %v2094
        %v2096 = vlaneseq
        %v2097 = vshrl.u32 %v2096, 7
        %v2098 = vsub.s32 %v2095, %v2097
        %v2099 = vrot.slane %v2085, %v2098
        %v2100 = vcombine.high %v2092, %v2092
        %v2101 = vcombine.high %v2099, %v2099
        %v2102 = vcombine.high %v1606, %v1606
        %v2104 = vunpack.c.l.s4 1983009808
        %v2105 = vunpack.c.0.s8 %v2104
        %v2106 = vlaneseq
        %v2107 = vshrl.u32 %v2106, 7
        %v2108 = vsub.s32 %v2105, %v2107
        %v2109 = vrot.slane %v1606, %v2108
        %v2111 = vunpack.c.l.s4 1983009808
        %v2112 = vunpack.c.0.s8 %v2111
        %v2113 = vlaneseq
        %v2114 = vshrl.u32 %v2113, 7
        %v2115 = vsub.s32 %v2112, %v2114
        %v2116 = vrot.slane %v2102, %v2115
        %v2117 = vcombine.high %v2109, %v2109
        %v2118 = vcombine.high %v2116, %v2116
        %v2119 = vcombine.high %v1607, %v1607
        %v2121 = vunpack.c.l.s4 1983009808
        %v2122 = vunpack.c.0.s8 %v2121
        %v2123 = vlaneseq
        %v2124 = vshrl.u32 %v2123, 7
        %v2125 = vsub.s32 %v2122, %v2124
        %v2126 = vrot.slane %v1607, %v2125
        %v2128 = vunpack.c.l.s4 1983009808
        %v2129 = vunpack.c.0.s8 %v2128
        %v2130 = vlaneseq
        %v2131 = vshrl.u32 %v2130, 7
        %v2132 = vsub.s32 %v2129, %v2131
        %v2133 = vrot.slane %v2119, %v2132
        %v2134 = vcombine.high %v2126, %v2126
        %v2135 = vcombine.high %v2133, %v2133
        %v2136 = vcombine.high %v1608, %v1608
        %v2138 = vunpack.c.l.s4 1983009808
        %v2139 = vunpack.c.0.s8 %v2138
        %v2140 = vlaneseq
        %v2141 = vshrl.u32 %v2140, 7
        %v2142 = vsub.s32 %v2139, %v2141
        %v2143 = vrot.slane %v1608, %v2142
        %v2145 = vunpack.c.l.s4 1983009808
        %v2146 = vunpack.c.0.s8 %v2145
        %v2147 = vlaneseq
        %v2148 = vshrl.u32 %v2147, 7
        %v2149 = vsub.s32 %v2146, %v2148
        %v2150 = vrot.slane %v2136, %v2149
        %v2151 = vcombine.high %v2143, %v2143
        %v2152 = vcombine.high %v2150, %v2150
        %v2153 = vcombine.high %v1609, %v1609
        %v2155 = vunpack.c.l.s4 1983009808
        %v2156 = vunpack.c.0.s8 %v2155
        %v2157 = vlaneseq
        %v2158 = vshrl.u32 %v2157, 7
        %v2159 = vsub.s32 %v2156, %v2158
        %v2160 = vrot.slane %v1609, %v2159
        %v2162 = vunpack.c.l.s4 1983009808
        %v2163 = vunpack.c.0.s8 %v2162
        %v2164 = vlaneseq
        %v2165 = vshrl.u32 %v2164, 7
        %v2166 = vsub.s32 %v2163, %v2165
        %v2167 = vrot.slane %v2153, %v2166
        %v2168 = vcombine.high %v2160, %v2160
        %v2169 = vcombine.high %v2167, %v2167
        %v2170 = vcombine.high %v1610, %v1610
        %v2172 = vunpack.c.l.s4 1983009808
        %v2173 = vunpack.c.0.s8 %v2172
        %v2174 = vlaneseq
        %v2175 = vshrl.u32 %v2174, 7
        %v2176 = vsub.s32 %v2173, %v2175
        %v2177 = vrot.slane %v1610, %v2176
        %v2179 = vunpack.c.l.s4 1983009808
        %v2180 = vunpack.c.0.s8 %v2179
        %v2181 = vlaneseq
        %v2182 = vshrl.u32 %v2181, 7
        %v2183 = vsub.s32 %v2180, %v2182
        %v2184 = vrot.slane %v2170, %v2183
        %v2185 = vcombine.high %v2177, %v2177
        %v2186 = vcombine.high %v2184, %v2184
        %vm2315 = vcmask 517120
        %v2316 = vsel %vm2315, %v1650, -inf
        %v2317 = vrot.slane %v2316, 4
        %v2318 = vmax.f32 %v2316, %v2317
        %v2319 = vrot.slane %v2318, 2
        %v2320 = vmax.f32 %v2318, %v2319
        %v2321 = vrot.slane %v2320, 1
        %v2322 = vmax.f32 %v2320, %v2321
        %v2323 = vsel %vm2315, %v1658, -inf
        %v2324 = vrot.slane %v2323, 4
        %v2325 = vmax.f32 %v2323, %v2324
        %v2326 = vrot.slane %v2325, 2
        %v2327 = vmax.f32 %v2325, %v2326
        %v2328 = vrot.slane %v2327, 1
        %v2329 = vmax.f32 %v2327, %v2328
        %v2330 = vsel %vm2315, %v1657, -inf
        %v2331 = vrot.slane %v2330, 4
        %v2332 = vmax.f32 %v2330, %v2331
        %v2333 = vrot.slane %v2332, 2
        %v2334 = vmax.f32 %v2332, %v2333
        %v2335 = vrot.slane %v2334, 1
        %v2336 = vmax.f32 %v2334, %v2335
        %v2337 = vsel %vm2315, %v1659, -inf
        %v2338 = vrot.slane %v2337, 4
        %v2339 = vmax.f32 %v2337, %v2338
        %v2340 = vrot.slane %v2339, 2
        %v2341 = vmax.f32 %v2339, %v2340
        %v2342 = vrot.slane %v2341, 1
        %v2343 = vmax.f32 %v2341, %v2342
        %v2344 = vsel %vm2315, %v1667, -inf
        %v2345 = vrot.slane %v2344, 4
        %v2346 = vmax.f32 %v2344, %v2345
        %v2347 = vrot.slane %v2346, 2
        %v2348 = vmax.f32 %v2346, %v2347
        %v2349 = vrot.slane %v2348, 1
        %v2350 = vmax.f32 %v2348, %v2349
        %v2351 = vsel %vm2315, %v1675, -inf
        %v2352 = vrot.slane %v2351, 4
        %v2353 = vmax.f32 %v2351, %v2352
        %v2354 = vrot.slane %v2353, 2
        %v2355 = vmax.f32 %v2353, %v2354
        %v2356 = vrot.slane %v2355, 1
        %v2357 = vmax.f32 %v2355, %v2356
        %v2358 = vsel %vm2315, %v1674, -inf
        %v2359 = vrot.slane %v2358, 4
        %v2360 = vmax.f32 %v2358, %v2359
        %v2361 = vrot.slane %v2360, 2
        %v2362 = vmax.f32 %v2360, %v2361
        %v2363 = vrot.slane %v2362, 1
        %v2364 = vmax.f32 %v2362, %v2363
        %v2365 = vsel %vm2315, %v1676, -inf
        %v2366 = vrot.slane %v2365, 4
        %v2367 = vmax.f32 %v2365, %v2366
        %v2368 = vrot.slane %v2367, 2
        %v2369 = vmax.f32 %v2367, %v2368
        %v2370 = vrot.slane %v2369, 1
        %v2371 = vmax.f32 %v2369, %v2370
        %v2372 = vsel %vm2315, %v1684, -inf
        %v2373 = vrot.slane %v2372, 4
        %v2374 = vmax.f32 %v2372, %v2373
        %v2375 = vrot.slane %v2374, 2
        %v2376 = vmax.f32 %v2374, %v2375
        %v2377 = vrot.slane %v2376, 1
        %v2378 = vmax.f32 %v2376, %v2377
        %v2379 = vsel %vm2315, %v1692, -inf
        %v2380 = vrot.slane %v2379, 4
        %v2381 = vmax.f32 %v2379, %v2380
        %v2382 = vrot.slane %v2381, 2
        %v2383 = vmax.f32 %v2381, %v2382
        %v2384 = vrot.slane %v2383, 1
        %v2385 = vmax.f32 %v2383, %v2384
        %v2386 = vsel %vm2315, %v1691, -inf
        %v2387 = vrot.slane %v2386, 4
        %v2388 = vmax.f32 %v2386, %v2387
        %v2389 = vrot.slane %v2388, 2
        %v2390 = vmax.f32 %v2388, %v2389
        %v2391 = vrot.slane %v2390, 1
        %v2392 = vmax.f32 %v2390, %v2391
        %v2393 = vsel %vm2315, %v1693, -inf
        %v2394 = vrot.slane %v2393, 4
        %v2395 = vmax.f32 %v2393, %v2394
        %v2396 = vrot.slane %v2395, 2
        %v2397 = vmax.f32 %v2395, %v2396
        %v2398 = vrot.slane %v2397, 1
        %v2399 = vmax.f32 %v2397, %v2398
        %v2400 = vsel %vm2315, %v1701, -inf
        %v2401 = vrot.slane %v2400, 4
        %v2402 = vmax.f32 %v2400, %v2401
        %v2403 = vrot.slane %v2402, 2
        %v2404 = vmax.f32 %v2402, %v2403
        %v2405 = vrot.slane %v2404, 1
        %v2406 = vmax.f32 %v2404, %v2405
        %v2407 = vsel %vm2315, %v1709, -inf
        %v2408 = vrot.slane %v2407, 4
        %v2409 = vmax.f32 %v2407, %v2408
        %v2410 = vrot.slane %v2409, 2
        %v2411 = vmax.f32 %v2409, %v2410
        %v2412 = vrot.slane %v2411, 1
        %v2413 = vmax.f32 %v2411, %v2412
        %v2414 = vsel %vm2315, %v1708, -inf
        %v2415 = vrot.slane %v2414, 4
        %v2416 = vmax.f32 %v2414, %v2415
        %v2417 = vrot.slane %v2416, 2
        %v2418 = vmax.f32 %v2416, %v2417
        %v2419 = vrot.slane %v2418, 1
        %v2420 = vmax.f32 %v2418, %v2419
        %v2421 = vsel %vm2315, %v1710, -inf
        %v2422 = vrot.slane %v2421, 4
        %v2423 = vmax.f32 %v2421, %v2422
        %v2424 = vrot.slane %v2423, 2
        %v2425 = vmax.f32 %v2423, %v2424
        %v2426 = vrot.slane %v2425, 1
        %v2427 = vmax.f32 %v2425, %v2426
        %v2428 = vsel %vm2315, %v1718, -inf
        %v2429 = vrot.slane %v2428, 4
        %v2430 = vmax.f32 %v2428, %v2429
        %v2431 = vrot.slane %v2430, 2
        %v2432 = vmax.f32 %v2430, %v2431
        %v2433 = vrot.slane %v2432, 1
        %v2434 = vmax.f32 %v2432, %v2433
        %v2435 = vsel %vm2315, %v1726, -inf
        %v2436 = vrot.slane %v2435, 4
        %v2437 = vmax.f32 %v2435, %v2436
        %v2438 = vrot.slane %v2437, 2
        %v2439 = vmax.f32 %v2437, %v2438
        %v2440 = vrot.slane %v2439, 1
        %v2441 = vmax.f32 %v2439, %v2440
        %v2442 = vsel %vm2315, %v1725, -inf
        %v2443 = vrot.slane %v2442, 4
        %v2444 = vmax.f32 %v2442, %v2443
        %v2445 = vrot.slane %v2444, 2
        %v2446 = vmax.f32 %v2444, %v2445
        %v2447 = vrot.slane %v2446, 1
        %v2448 = vmax.f32 %v2446, %v2447
        %v2449 = vsel %vm2315, %v1727, -inf
        %v2450 = vrot.slane %v2449, 4
        %v2451 = vmax.f32 %v2449, %v2450
        %v2452 = vrot.slane %v2451, 2
        %v2453 = vmax.f32 %v2451, %v2452
        %v2454 = vrot.slane %v2453, 1
        %v2455 = vmax.f32 %v2453, %v2454
        %v2456 = vsel %vm2315, %v1735, -inf
        %v2457 = vrot.slane %v2456, 4
        %v2458 = vmax.f32 %v2456, %v2457
        %v2459 = vrot.slane %v2458, 2
        %v2460 = vmax.f32 %v2458, %v2459
        %v2461 = vrot.slane %v2460, 1
        %v2462 = vmax.f32 %v2460, %v2461
        %v2463 = vsel %vm2315, %v1743, -inf
        %v2464 = vrot.slane %v2463, 4
        %v2465 = vmax.f32 %v2463, %v2464
        %v2466 = vrot.slane %v2465, 2
        %v2467 = vmax.f32 %v2465, %v2466
        %v2468 = vrot.slane %v2467, 1
        %v2469 = vmax.f32 %v2467, %v2468
        %v2470 = vsel %vm2315, %v1742, -inf
        %v2471 = vrot.slane %v2470, 4
        %v2472 = vmax.f32 %v2470, %v2471
        %v2473 = vrot.slane %v2472, 2
        %v2474 = vmax.f32 %v2472, %v2473
        %v2475 = vrot.slane %v2474, 1
        %v2476 = vmax.f32 %v2474, %v2475
        %v2477 = vsel %vm2315, %v1744, -inf
        %v2478 = vrot.slane %v2477, 4
        %v2479 = vmax.f32 %v2477, %v2478
        %v2480 = vrot.slane %v2479, 2
        %v2481 = vmax.f32 %v2479, %v2480
        %v2482 = vrot.slane %v2481, 1
        %v2483 = vmax.f32 %v2481, %v2482
        %v2484 = vsel %vm2315, %v1752, -inf
        %v2485 = vrot.slane %v2484, 4
        %v2486 = vmax.f32 %v2484, %v2485
        %v2487 = vrot.slane %v2486, 2
        %v2488 = vmax.f32 %v2486, %v2487
        %v2489 = vrot.slane %v2488, 1
        %v2490 = vmax.f32 %v2488, %v2489
        %v2491 = vsel %vm2315, %v1760, -inf
        %v2492 = vrot.slane %v2491, 4
        %v2493 = vmax.f32 %v2491, %v2492
        %v2494 = vrot.slane %v2493, 2
        %v2495 = vmax.f32 %v2493, %v2494
        %v2496 = vrot.slane %v2495, 1
        %v2497 = vmax.f32 %v2495, %v2496
        %v2498 = vsel %vm2315, %v1759, -inf
        %v2499 = vrot.slane %v2498, 4
        %v2500 = vmax.f32 %v2498, %v2499
        %v2501 = vrot.slane %v2500, 2
        %v2502 = vmax.f32 %v2500, %v2501
        %v2503 = vrot.slane %v2502, 1
        %v2504 = vmax.f32 %v2502, %v2503
        %v2505 = vsel %vm2315, %v1761, -inf
        %v2506 = vrot.slane %v2505, 4
        %v2507 = vmax.f32 %v2505, %v2506
        %v2508 = vrot.slane %v2507, 2
        %v2509 = vmax.f32 %v2507, %v2508
        %v2510 = vrot.slane %v2509, 1
        %v2511 = vmax.f32 %v2509, %v2510
        %v2512 = vsel %vm2315, %v1769, -inf
        %v2513 = vrot.slane %v2512, 4
        %v2514 = vmax.f32 %v2512, %v2513
        %v2515 = vrot.slane %v2514, 2
        %v2516 = vmax.f32 %v2514, %v2515
        %v2517 = vrot.slane %v2516, 1
        %v2518 = vmax.f32 %v2516, %v2517
        %v2519 = vsel %vm2315, %v1777, -inf
        %v2520 = vrot.slane %v2519, 4
        %v2521 = vmax.f32 %v2519, %v2520
        %v2522 = vrot.slane %v2521, 2
        %v2523 = vmax.f32 %v2521, %v2522
        %v2524 = vrot.slane %v2523, 1
        %v2525 = vmax.f32 %v2523, %v2524
        %v2526 = vsel %vm2315, %v1776, -inf
        %v2527 = vrot.slane %v2526, 4
        %v2528 = vmax.f32 %v2526, %v2527
        %v2529 = vrot.slane %v2528, 2
        %v2530 = vmax.f32 %v2528, %v2529
        %v2531 = vrot.slane %v2530, 1
        %v2532 = vmax.f32 %v2530, %v2531
        %v2533 = vsel %vm2315, %v1778, -inf
        %v2534 = vrot.slane %v2533, 4
        %v2535 = vmax.f32 %v2533, %v2534
        %v2536 = vrot.slane %v2535, 2
        %v2537 = vmax.f32 %v2535, %v2536
        %v2538 = vrot.slane %v2537, 1
        %v2539 = vmax.f32 %v2537, %v2538
        %v2540 = vsel %vm2315, %v1786, -inf
        %v2541 = vrot.slane %v2540, 4
        %v2542 = vmax.f32 %v2540, %v2541
        %v2543 = vrot.slane %v2542, 2
        %v2544 = vmax.f32 %v2542, %v2543
        %v2545 = vrot.slane %v2544, 1
        %v2546 = vmax.f32 %v2544, %v2545
        %v2547 = vsel %vm2315, %v1794, -inf
        %v2548 = vrot.slane %v2547, 4
        %v2549 = vmax.f32 %v2547, %v2548
        %v2550 = vrot.slane %v2549, 2
        %v2551 = vmax.f32 %v2549, %v2550
        %v2552 = vrot.slane %v2551, 1
        %v2553 = vmax.f32 %v2551, %v2552
        %v2554 = vsel %vm2315, %v1793, -inf
        %v2555 = vrot.slane %v2554, 4
        %v2556 = vmax.f32 %v2554, %v2555
        %v2557 = vrot.slane %v2556, 2
        %v2558 = vmax.f32 %v2556, %v2557
        %v2559 = vrot.slane %v2558, 1
        %v2560 = vmax.f32 %v2558, %v2559
        %v2561 = vsel %vm2315, %v1795, -inf
        %v2562 = vrot.slane %v2561, 4
        %v2563 = vmax.f32 %v2561, %v2562
        %v2564 = vrot.slane %v2563, 2
        %v2565 = vmax.f32 %v2563, %v2564
        %v2566 = vrot.slane %v2565, 1
        %v2567 = vmax.f32 %v2565, %v2566
        %v2568 = vsel %vm2315, %v1803, -inf
        %v2569 = vrot.slane %v2568, 4
        %v2570 = vmax.f32 %v2568, %v2569
        %v2571 = vrot.slane %v2570, 2
        %v2572 = vmax.f32 %v2570, %v2571
        %v2573 = vrot.slane %v2572, 1
        %v2574 = vmax.f32 %v2572, %v2573
        %v2575 = vsel %vm2315, %v1811, -inf
        %v2576 = vrot.slane %v2575, 4
        %v2577 = vmax.f32 %v2575, %v2576
        %v2578 = vrot.slane %v2577, 2
        %v2579 = vmax.f32 %v2577, %v2578
        %v2580 = vrot.slane %v2579, 1
        %v2581 = vmax.f32 %v2579, %v2580
        %v2582 = vsel %vm2315, %v1810, -inf
        %v2583 = vrot.slane %v2582, 4
        %v2584 = vmax.f32 %v2582, %v2583
        %v2585 = vrot.slane %v2584, 2
        %v2586 = vmax.f32 %v2584, %v2585
        %v2587 = vrot.slane %v2586, 1
        %v2588 = vmax.f32 %v2586, %v2587
        %v2589 = vsel %vm2315, %v1812, -inf
        %v2590 = vrot.slane %v2589, 4
        %v2591 = vmax.f32 %v2589, %v2590
        %v2592 = vrot.slane %v2591, 2
        %v2593 = vmax.f32 %v2591, %v2592
        %v2594 = vrot.slane %v2593, 1
        %v2595 = vmax.f32 %v2593, %v2594
        %v2596 = vsel %vm2315, %v1820, -inf
        %v2597 = vrot.slane %v2596, 4
        %v2598 = vmax.f32 %v2596, %v2597
        %v2599 = vrot.slane %v2598, 2
        %v2600 = vmax.f32 %v2598, %v2599
        %v2601 = vrot.slane %v2600, 1
        %v2602 = vmax.f32 %v2600, %v2601
        %v2603 = vsel %vm2315, %v1828, -inf
        %v2604 = vrot.slane %v2603, 4
        %v2605 = vmax.f32 %v2603, %v2604
        %v2606 = vrot.slane %v2605, 2
        %v2607 = vmax.f32 %v2605, %v2606
        %v2608 = vrot.slane %v2607, 1
        %v2609 = vmax.f32 %v2607, %v2608
        %v2610 = vsel %vm2315, %v1827, -inf
        %v2611 = vrot.slane %v2610, 4
        %v2612 = vmax.f32 %v2610, %v2611
        %v2613 = vrot.slane %v2612, 2
        %v2614 = vmax.f32 %v2612, %v2613
        %v2615 = vrot.slane %v2614, 1
        %v2616 = vmax.f32 %v2614, %v2615
        %v2617 = vsel %vm2315, %v1829, -inf
        %v2618 = vrot.slane %v2617, 4
        %v2619 = vmax.f32 %v2617, %v2618
        %v2620 = vrot.slane %v2619, 2
        %v2621 = vmax.f32 %v2619, %v2620
        %v2622 = vrot.slane %v2621, 1
        %v2623 = vmax.f32 %v2621, %v2622
        %v2624 = vsel %vm2315, %v1837, -inf
        %v2625 = vrot.slane %v2624, 4
        %v2626 = vmax.f32 %v2624, %v2625
        %v2627 = vrot.slane %v2626, 2
        %v2628 = vmax.f32 %v2626, %v2627
        %v2629 = vrot.slane %v2628, 1
        %v2630 = vmax.f32 %v2628, %v2629
        %v2631 = vsel %vm2315, %v1845, -inf
        %v2632 = vrot.slane %v2631, 4
        %v2633 = vmax.f32 %v2631, %v2632
        %v2634 = vrot.slane %v2633, 2
        %v2635 = vmax.f32 %v2633, %v2634
        %v2636 = vrot.slane %v2635, 1
        %v2637 = vmax.f32 %v2635, %v2636
        %v2638 = vsel %vm2315, %v1844, -inf
        %v2639 = vrot.slane %v2638, 4
        %v2640 = vmax.f32 %v2638, %v2639
        %v2641 = vrot.slane %v2640, 2
        %v2642 = vmax.f32 %v2640, %v2641
        %v2643 = vrot.slane %v2642, 1
        %v2644 = vmax.f32 %v2642, %v2643
        %v2645 = vsel %vm2315, %v1846, -inf
        %v2646 = vrot.slane %v2645, 4
        %v2647 = vmax.f32 %v2645, %v2646
        %v2648 = vrot.slane %v2647, 2
        %v2649 = vmax.f32 %v2647, %v2648
        %v2650 = vrot.slane %v2649, 1
        %v2651 = vmax.f32 %v2649, %v2650
        %v2652 = vsel %vm2315, %v1854, -inf
        %v2653 = vrot.slane %v2652, 4
        %v2654 = vmax.f32 %v2652, %v2653
        %v2655 = vrot.slane %v2654, 2
        %v2656 = vmax.f32 %v2654, %v2655
        %v2657 = vrot.slane %v2656, 1
        %v2658 = vmax.f32 %v2656, %v2657
        %v2659 = vsel %vm2315, %v1862, -inf
        %v2660 = vrot.slane %v2659, 4
        %v2661 = vmax.f32 %v2659, %v2660
        %v2662 = vrot.slane %v2661, 2
        %v2663 = vmax.f32 %v2661, %v2662
        %v2664 = vrot.slane %v2663, 1
        %v2665 = vmax.f32 %v2663, %v2664
        %v2666 = vsel %vm2315, %v1861, -inf
        %v2667 = vrot.slane %v2666, 4
        %v2668 = vmax.f32 %v2666, %v2667
        %v2669 = vrot.slane %v2668, 2
        %v2670 = vmax.f32 %v2668, %v2669
        %v2671 = vrot.slane %v2670, 1
        %v2672 = vmax.f32 %v2670, %v2671
        %v2673 = vsel %vm2315, %v1863, -inf
        %v2674 = vrot.slane %v2673, 4
        %v2675 = vmax.f32 %v2673, %v2674
        %v2676 = vrot.slane %v2675, 2
        %v2677 = vmax.f32 %v2675, %v2676
        %v2678 = vrot.slane %v2677, 1
        %v2679 = vmax.f32 %v2677, %v2678
        %v2680 = vsel %vm2315, %v1871, -inf
        %v2681 = vrot.slane %v2680, 4
        %v2682 = vmax.f32 %v2680, %v2681
        %v2683 = vrot.slane %v2682, 2
        %v2684 = vmax.f32 %v2682, %v2683
        %v2685 = vrot.slane %v2684, 1
        %v2686 = vmax.f32 %v2684, %v2685
        %v2687 = vsel %vm2315, %v1879, -inf
        %v2688 = vrot.slane %v2687, 4
        %v2689 = vmax.f32 %v2687, %v2688
        %v2690 = vrot.slane %v2689, 2
        %v2691 = vmax.f32 %v2689, %v2690
        %v2692 = vrot.slane %v2691, 1
        %v2693 = vmax.f32 %v2691, %v2692
        %v2694 = vsel %vm2315, %v1878, -inf
        %v2695 = vrot.slane %v2694, 4
        %v2696 = vmax.f32 %v2694, %v2695
        %v2697 = vrot.slane %v2696, 2
        %v2698 = vmax.f32 %v2696, %v2697
        %v2699 = vrot.slane %v2698, 1
        %v2700 = vmax.f32 %v2698, %v2699
        %v2701 = vsel %vm2315, %v1880, -inf
        %v2702 = vrot.slane %v2701, 4
        %v2703 = vmax.f32 %v2701, %v2702
        %v2704 = vrot.slane %v2703, 2
        %v2705 = vmax.f32 %v2703, %v2704
        %v2706 = vrot.slane %v2705, 1
        %v2707 = vmax.f32 %v2705, %v2706
        %v2708 = vsel %vm2315, %v1888, -inf
        %v2709 = vrot.slane %v2708, 4
        %v2710 = vmax.f32 %v2708, %v2709
        %v2711 = vrot.slane %v2710, 2
        %v2712 = vmax.f32 %v2710, %v2711
        %v2713 = vrot.slane %v2712, 1
        %v2714 = vmax.f32 %v2712, %v2713
        %v2715 = vsel %vm2315, %v1896, -inf
        %v2716 = vrot.slane %v2715, 4
        %v2717 = vmax.f32 %v2715, %v2716
        %v2718 = vrot.slane %v2717, 2
        %v2719 = vmax.f32 %v2717, %v2718
        %v2720 = vrot.slane %v2719, 1
        %v2721 = vmax.f32 %v2719, %v2720
        %v2722 = vsel %vm2315, %v1895, -inf
        %v2723 = vrot.slane %v2722, 4
        %v2724 = vmax.f32 %v2722, %v2723
        %v2725 = vrot.slane %v2724, 2
        %v2726 = vmax.f32 %v2724, %v2725
        %v2727 = vrot.slane %v2726, 1
        %v2728 = vmax.f32 %v2726, %v2727
        %v2729 = vsel %vm2315, %v1897, -inf
        %v2730 = vrot.slane %v2729, 4
        %v2731 = vmax.f32 %v2729, %v2730
        %v2732 = vrot.slane %v2731, 2
        %v2733 = vmax.f32 %v2731, %v2732
        %v2734 = vrot.slane %v2733, 1
        %v2735 = vmax.f32 %v2733, %v2734
        %v2736 = vsel %vm2315, %v1905, -inf
        %v2737 = vrot.slane %v2736, 4
        %v2738 = vmax.f32 %v2736, %v2737
        %v2739 = vrot.slane %v2738, 2
        %v2740 = vmax.f32 %v2738, %v2739
        %v2741 = vrot.slane %v2740, 1
        %v2742 = vmax.f32 %v2740, %v2741
        %v2743 = vsel %vm2315, %v1913, -inf
        %v2744 = vrot.slane %v2743, 4
        %v2745 = vmax.f32 %v2743, %v2744
        %v2746 = vrot.slane %v2745, 2
        %v2747 = vmax.f32 %v2745, %v2746
        %v2748 = vrot.slane %v2747, 1
        %v2749 = vmax.f32 %v2747, %v2748
        %v2750 = vsel %vm2315, %v1912, -inf
        %v2751 = vrot.slane %v2750, 4
        %v2752 = vmax.f32 %v2750, %v2751
        %v2753 = vrot.slane %v2752, 2
        %v2754 = vmax.f32 %v2752, %v2753
        %v2755 = vrot.slane %v2754, 1
        %v2756 = vmax.f32 %v2754, %v2755
        %v2757 = vsel %vm2315, %v1914, -inf
        %v2758 = vrot.slane %v2757, 4
        %v2759 = vmax.f32 %v2757, %v2758
        %v2760 = vrot.slane %v2759, 2
        %v2761 = vmax.f32 %v2759, %v2760
        %v2762 = vrot.slane %v2761, 1
        %v2763 = vmax.f32 %v2761, %v2762
        %v2764 = vsel %vm2315, %v1922, -inf
        %v2765 = vrot.slane %v2764, 4
        %v2766 = vmax.f32 %v2764, %v2765
        %v2767 = vrot.slane %v2766, 2
        %v2768 = vmax.f32 %v2766, %v2767
        %v2769 = vrot.slane %v2768, 1
        %v2770 = vmax.f32 %v2768, %v2769
        %v2771 = vsel %vm2315, %v1930, -inf
        %v2772 = vrot.slane %v2771, 4
        %v2773 = vmax.f32 %v2771, %v2772
        %v2774 = vrot.slane %v2773, 2
        %v2775 = vmax.f32 %v2773, %v2774
        %v2776 = vrot.slane %v2775, 1
        %v2777 = vmax.f32 %v2775, %v2776
        %v2778 = vsel %vm2315, %v1929, -inf
        %v2779 = vrot.slane %v2778, 4
        %v2780 = vmax.f32 %v2778, %v2779
        %v2781 = vrot.slane %v2780, 2
        %v2782 = vmax.f32 %v2780, %v2781
        %v2783 = vrot.slane %v2782, 1
        %v2784 = vmax.f32 %v2782, %v2783
        %v2785 = vsel %vm2315, %v1931, -inf
        %v2786 = vrot.slane %v2785, 4
        %v2787 = vmax.f32 %v2785, %v2786
        %v2788 = vrot.slane %v2787, 2
        %v2789 = vmax.f32 %v2787, %v2788
        %v2790 = vrot.slane %v2789, 1
        %v2791 = vmax.f32 %v2789, %v2790
        %v2792 = vsel %vm2315, %v1939, -inf
        %v2793 = vrot.slane %v2792, 4
        %v2794 = vmax.f32 %v2792, %v2793
        %v2795 = vrot.slane %v2794, 2
        %v2796 = vmax.f32 %v2794, %v2795
        %v2797 = vrot.slane %v2796, 1
        %v2798 = vmax.f32 %v2796, %v2797
        %v2799 = vsel %vm2315, %v1947, -inf
        %v2800 = vrot.slane %v2799, 4
        %v2801 = vmax.f32 %v2799, %v2800
        %v2802 = vrot.slane %v2801, 2
        %v2803 = vmax.f32 %v2801, %v2802
        %v2804 = vrot.slane %v2803, 1
        %v2805 = vmax.f32 %v2803, %v2804
        %v2806 = vsel %vm2315, %v1946, -inf
        %v2807 = vrot.slane %v2806, 4
        %v2808 = vmax.f32 %v2806, %v2807
        %v2809 = vrot.slane %v2808, 2
        %v2810 = vmax.f32 %v2808, %v2809
        %v2811 = vrot.slane %v2810, 1
        %v2812 = vmax.f32 %v2810, %v2811
        %v2813 = vsel %vm2315, %v1948, -inf
        %v2814 = vrot.slane %v2813, 4
        %v2815 = vmax.f32 %v2813, %v2814
        %v2816 = vrot.slane %v2815, 2
        %v2817 = vmax.f32 %v2815, %v2816
        %v2818 = vrot.slane %v2817, 1
        %v2819 = vmax.f32 %v2817, %v2818
        %v2820 = vsel %vm2315, %v1956, -inf
        %v2821 = vrot.slane %v2820, 4
        %v2822 = vmax.f32 %v2820, %v2821
        %v2823 = vrot.slane %v2822, 2
        %v2824 = vmax.f32 %v2822, %v2823
        %v2825 = vrot.slane %v2824, 1
        %v2826 = vmax.f32 %v2824, %v2825
        %v2827 = vsel %vm2315, %v1964, -inf
        %v2828 = vrot.slane %v2827, 4
        %v2829 = vmax.f32 %v2827, %v2828
        %v2830 = vrot.slane %v2829, 2
        %v2831 = vmax.f32 %v2829, %v2830
        %v2832 = vrot.slane %v2831, 1
        %v2833 = vmax.f32 %v2831, %v2832
        %v2834 = vsel %vm2315, %v1963, -inf
        %v2835 = vrot.slane %v2834, 4
        %v2836 = vmax.f32 %v2834, %v2835
        %v2837 = vrot.slane %v2836, 2
        %v2838 = vmax.f32 %v2836, %v2837
        %v2839 = vrot.slane %v2838, 1
        %v2840 = vmax.f32 %v2838, %v2839
        %v2841 = vsel %vm2315, %v1965, -inf
        %v2842 = vrot.slane %v2841, 4
        %v2843 = vmax.f32 %v2841, %v2842
        %v2844 = vrot.slane %v2843, 2
        %v2845 = vmax.f32 %v2843, %v2844
        %v2846 = vrot.slane %v2845, 1
        %v2847 = vmax.f32 %v2845, %v2846
        %v2848 = vsel %vm2315, %v1973, -inf
        %v2849 = vrot.slane %v2848, 4
        %v2850 = vmax.f32 %v2848, %v2849
        %v2851 = vrot.slane %v2850, 2
        %v2852 = vmax.f32 %v2850, %v2851
        %v2853 = vrot.slane %v2852, 1
        %v2854 = vmax.f32 %v2852, %v2853
        %v2855 = vsel %vm2315, %v1981, -inf
        %v2856 = vrot.slane %v2855, 4
        %v2857 = vmax.f32 %v2855, %v2856
        %v2858 = vrot.slane %v2857, 2
        %v2859 = vmax.f32 %v2857, %v2858
        %v2860 = vrot.slane %v2859, 1
        %v2861 = vmax.f32 %v2859, %v2860
        %v2862 = vsel %vm2315, %v1980, -inf
        %v2863 = vrot.slane %v2862, 4
        %v2864 = vmax.f32 %v2862, %v2863
        %v2865 = vrot.slane %v2864, 2
        %v2866 = vmax.f32 %v2864, %v2865
        %v2867 = vrot.slane %v2866, 1
        %v2868 = vmax.f32 %v2866, %v2867
        %v2869 = vsel %vm2315, %v1982, -inf
        %v2870 = vrot.slane %v2869, 4
        %v2871 = vmax.f32 %v2869, %v2870
        %v2872 = vrot.slane %v2871, 2
        %v2873 = vmax.f32 %v2871, %v2872
        %v2874 = vrot.slane %v2873, 1
        %v2875 = vmax.f32 %v2873, %v2874
        %v2876 = vsel %vm2315, %v1990, -inf
        %v2877 = vrot.slane %v2876, 4
        %v2878 = vmax.f32 %v2876, %v2877
        %v2879 = vrot.slane %v2878, 2
        %v2880 = vmax.f32 %v2878, %v2879
        %v2881 = vrot.slane %v2880, 1
        %v2882 = vmax.f32 %v2880, %v2881
        %v2883 = vsel %vm2315, %v1998, -inf
        %v2884 = vrot.slane %v2883, 4
        %v2885 = vmax.f32 %v2883, %v2884
        %v2886 = vrot.slane %v2885, 2
        %v2887 = vmax.f32 %v2885, %v2886
        %v2888 = vrot.slane %v2887, 1
        %v2889 = vmax.f32 %v2887, %v2888
        %v2890 = vsel %vm2315, %v1997, -inf
        %v2891 = vrot.slane %v2890, 4
        %v2892 = vmax.f32 %v2890, %v2891
        %v2893 = vrot.slane %v2892, 2
        %v2894 = vmax.f32 %v2892, %v2893
        %v2895 = vrot.slane %v2894, 1
        %v2896 = vmax.f32 %v2894, %v2895
        %v2897 = vsel %vm2315, %v1999, -inf
        %v2898 = vrot.slane %v2897, 4
        %v2899 = vmax.f32 %v2897, %v2898
        %v2900 = vrot.slane %v2899, 2
        %v2901 = vmax.f32 %v2899, %v2900
        %v2902 = vrot.slane %v2901, 1
        %v2903 = vmax.f32 %v2901, %v2902
        %v2904 = vsel %vm2315, %v2007, -inf
        %v2905 = vrot.slane %v2904, 4
        %v2906 = vmax.f32 %v2904, %v2905
        %v2907 = vrot.slane %v2906, 2
        %v2908 = vmax.f32 %v2906, %v2907
        %v2909 = vrot.slane %v2908, 1
        %v2910 = vmax.f32 %v2908, %v2909
        %v2911 = vsel %vm2315, %v2015, -inf
        %v2912 = vrot.slane %v2911, 4
        %v2913 = vmax.f32 %v2911, %v2912
        %v2914 = vrot.slane %v2913, 2
        %v2915 = vmax.f32 %v2913, %v2914
        %v2916 = vrot.slane %v2915, 1
        %v2917 = vmax.f32 %v2915, %v2916
        %v2918 = vsel %vm2315, %v2014, -inf
        %v2919 = vrot.slane %v2918, 4
        %v2920 = vmax.f32 %v2918, %v2919
        %v2921 = vrot.slane %v2920, 2
        %v2922 = vmax.f32 %v2920, %v2921
        %v2923 = vrot.slane %v2922, 1
        %v2924 = vmax.f32 %v2922, %v2923
        %v2925 = vsel %vm2315, %v2016, -inf
        %v2926 = vrot.slane %v2925, 4
        %v2927 = vmax.f32 %v2925, %v2926
        %v2928 = vrot.slane %v2927, 2
        %v2929 = vmax.f32 %v2927, %v2928
        %v2930 = vrot.slane %v2929, 1
        %v2931 = vmax.f32 %v2929, %v2930
        %v2932 = vsel %vm2315, %v2024, -inf
        %v2933 = vrot.slane %v2932, 4
        %v2934 = vmax.f32 %v2932, %v2933
        %v2935 = vrot.slane %v2934, 2
        %v2936 = vmax.f32 %v2934, %v2935
        %v2937 = vrot.slane %v2936, 1
        %v2938 = vmax.f32 %v2936, %v2937
        %v2939 = vsel %vm2315, %v2032, -inf
        %v2940 = vrot.slane %v2939, 4
        %v2941 = vmax.f32 %v2939, %v2940
        %v2942 = vrot.slane %v2941, 2
        %v2943 = vmax.f32 %v2941, %v2942
        %v2944 = vrot.slane %v2943, 1
        %v2945 = vmax.f32 %v2943, %v2944
        %v2946 = vsel %vm2315, %v2031, -inf
        %v2947 = vrot.slane %v2946, 4
        %v2948 = vmax.f32 %v2946, %v2947
        %v2949 = vrot.slane %v2948, 2
        %v2950 = vmax.f32 %v2948, %v2949
        %v2951 = vrot.slane %v2950, 1
        %v2952 = vmax.f32 %v2950, %v2951
        %v2953 = vsel %vm2315, %v2033, -inf
        %v2954 = vrot.slane %v2953, 4
        %v2955 = vmax.f32 %v2953, %v2954
        %v2956 = vrot.slane %v2955, 2
        %v2957 = vmax.f32 %v2955, %v2956
        %v2958 = vrot.slane %v2957, 1
        %v2959 = vmax.f32 %v2957, %v2958
        %v2960 = vsel %vm2315, %v2041, -inf
        %v2961 = vrot.slane %v2960, 4
        %v2962 = vmax.f32 %v2960, %v2961
        %v2963 = vrot.slane %v2962, 2
        %v2964 = vmax.f32 %v2962, %v2963
        %v2965 = vrot.slane %v2964, 1
        %v2966 = vmax.f32 %v2964, %v2965
        %v2967 = vsel %vm2315, %v2049, -inf
        %v2968 = vrot.slane %v2967, 4
        %v2969 = vmax.f32 %v2967, %v2968
        %v2970 = vrot.slane %v2969, 2
        %v2971 = vmax.f32 %v2969, %v2970
        %v2972 = vrot.slane %v2971, 1
        %v2973 = vmax.f32 %v2971, %v2972
        %v2974 = vsel %vm2315, %v2048, -inf
        %v2975 = vrot.slane %v2974, 4
        %v2976 = vmax.f32 %v2974, %v2975
        %v2977 = vrot.slane %v2976, 2
        %v2978 = vmax.f32 %v2976, %v2977
        %v2979 = vrot.slane %v2978, 1
        %v2980 = vmax.f32 %v2978, %v2979
        %v2981 = vsel %vm2315, %v2050, -inf
        %v2982 = vrot.slane %v2981, 4
        %v2983 = vmax.f32 %v2981, %v2982
        %v2984 = vrot.slane %v2983, 2
        %v2985 = vmax.f32 %v2983, %v2984
        %v2986 = vrot.slane %v2985, 1
        %v2987 = vmax.f32 %v2985, %v2986
        %v2988 = vsel %vm2315, %v2058, -inf
        %v2989 = vrot.slane %v2988, 4
        %v2990 = vmax.f32 %v2988, %v2989
        %v2991 = vrot.slane %v2990, 2
        %v2992 = vmax.f32 %v2990, %v2991
        %v2993 = vrot.slane %v2992, 1
        %v2994 = vmax.f32 %v2992, %v2993
        %v2995 = vsel %vm2315, %v2066, -inf
        %v2996 = vrot.slane %v2995, 4
        %v2997 = vmax.f32 %v2995, %v2996
        %v2998 = vrot.slane %v2997, 2
        %v2999 = vmax.f32 %v2997, %v2998
        %v3000 = vrot.slane %v2999, 1
        %v3001 = vmax.f32 %v2999, %v3000
        %v3002 = vsel %vm2315, %v2065, -inf
        %v3003 = vrot.slane %v3002, 4
        %v3004 = vmax.f32 %v3002, %v3003
        %v3005 = vrot.slane %v3004, 2
        %v3006 = vmax.f32 %v3004, %v3005
        %v3007 = vrot.slane %v3006, 1
        %v3008 = vmax.f32 %v3006, %v3007
        %v3009 = vsel %vm2315, %v2067, -inf
        %v3010 = vrot.slane %v3009, 4
        %v3011 = vmax.f32 %v3009, %v3010
        %v3012 = vrot.slane %v3011, 2
        %v3013 = vmax.f32 %v3011, %v3012
        %v3014 = vrot.slane %v3013, 1
        %v3015 = vmax.f32 %v3013, %v3014
        %v3016 = vsel %vm2315, %v2075, -inf
        %v3017 = vrot.slane %v3016, 4
        %v3018 = vmax.f32 %v3016, %v3017
        %v3019 = vrot.slane %v3018, 2
        %v3020 = vmax.f32 %v3018, %v3019
        %v3021 = vrot.slane %v3020, 1
        %v3022 = vmax.f32 %v3020, %v3021
        %v3023 = vsel %vm2315, %v2083, -inf
        %v3024 = vrot.slane %v3023, 4
        %v3025 = vmax.f32 %v3023, %v3024
        %v3026 = vrot.slane %v3025, 2
        %v3027 = vmax.f32 %v3025, %v3026
        %v3028 = vrot.slane %v3027, 1
        %v3029 = vmax.f32 %v3027, %v3028
        %v3030 = vsel %vm2315, %v2082, -inf
        %v3031 = vrot.slane %v3030, 4
        %v3032 = vmax.f32 %v3030, %v3031
        %v3033 = vrot.slane %v3032, 2
        %v3034 = vmax.f32 %v3032, %v3033
        %v3035 = vrot.slane %v3034, 1
        %v3036 = vmax.f32 %v3034, %v3035
        %v3037 = vsel %vm2315, %v2084, -inf
        %v3038 = vrot.slane %v3037, 4
        %v3039 = vmax.f32 %v3037, %v3038
        %v3040 = vrot.slane %v3039, 2
        %v3041 = vmax.f32 %v3039, %v3040
        %v3042 = vrot.slane %v3041, 1
        %v3043 = vmax.f32 %v3041, %v3042
        %v3044 = vsel %vm2315, %v2092, -inf
        %v3045 = vrot.slane %v3044, 4
        %v3046 = vmax.f32 %v3044, %v3045
        %v3047 = vrot.slane %v3046, 2
        %v3048 = vmax.f32 %v3046, %v3047
        %v3049 = vrot.slane %v3048, 1
        %v3050 = vmax.f32 %v3048, %v3049
        %v3051 = vsel %vm2315, %v2100, -inf
        %v3052 = vrot.slane %v3051, 4
        %v3053 = vmax.f32 %v3051, %v3052
        %v3054 = vrot.slane %v3053, 2
        %v3055 = vmax.f32 %v3053, %v3054
        %v3056 = vrot.slane %v3055, 1
        %v3057 = vmax.f32 %v3055, %v3056
        %v3058 = vsel %vm2315, %v2099, -inf
        %v3059 = vrot.slane %v3058, 4
        %v3060 = vmax.f32 %v3058, %v3059
        %v3061 = vrot.slane %v3060, 2
        %v3062 = vmax.f32 %v3060, %v3061
        %v3063 = vrot.slane %v3062, 1
        %v3064 = vmax.f32 %v3062, %v3063
        %v3065 = vsel %vm2315, %v2101, -inf
        %v3066 = vrot.slane %v3065, 4
        %v3067 = vmax.f32 %v3065, %v3066
        %v3068 = vrot.slane %v3067, 2
        %v3069 = vmax.f32 %v3067, %v3068
        %v3070 = vrot.slane %v3069, 1
        %v3071 = vmax.f32 %v3069, %v3070
        %v3072 = vsel %vm2315, %v2109, -inf
        %v3073 = vrot.slane %v3072, 4
        %v3074 = vmax.f32 %v3072, %v3073
        %v3075 = vrot.slane %v3074, 2
        %v3076 = vmax.f32 %v3074, %v3075
        %v3077 = vrot.slane %v3076, 1
        %v3078 = vmax.f32 %v3076, %v3077
        %v3079 = vsel %vm2315, %v2117, -inf
        %v3080 = vrot.slane %v3079, 4
        %v3081 = vmax.f32 %v3079, %v3080
        %v3082 = vrot.slane %v3081, 2
        %v3083 = vmax.f32 %v3081, %v3082
        %v3084 = vrot.slane %v3083, 1
        %v3085 = vmax.f32 %v3083, %v3084
        %v3086 = vsel %vm2315, %v2116, -inf
        %v3087 = vrot.slane %v3086, 4
        %v3088 = vmax.f32 %v3086, %v3087
        %v3089 = vrot.slane %v3088, 2
        %v3090 = vmax.f32 %v3088, %v3089
        %v3091 = vrot.slane %v3090, 1
        %v3092 = vmax.f32 %v3090, %v3091
        %v3093 = vsel %vm2315, %v2118, -inf
        %v3094 = vrot.slane %v3093, 4
        %v3095 = vmax.f32 %v3093, %v3094
        %v3096 = vrot.slane %v3095, 2
        %v3097 = vmax.f32 %v3095, %v3096
        %v3098 = vrot.slane %v3097, 1
        %v3099 = vmax.f32 %v3097, %v3098
        %v3100 = vsel %vm2315, %v2126, -inf
        %v3101 = vrot.slane %v3100, 4
        %v3102 = vmax.f32 %v3100, %v3101
        %v3103 = vrot.slane %v3102, 2
        %v3104 = vmax.f32 %v3102, %v3103
        %v3105 = vrot.slane %v3104, 1
        %v3106 = vmax.f32 %v3104, %v3105
        %v3107 = vsel %vm2315, %v2134, -inf
        %v3108 = vrot.slane %v3107, 4
        %v3109 = vmax.f32 %v3107, %v3108
        %v3110 = vrot.slane %v3109, 2
        %v3111 = vmax.f32 %v3109, %v3110
        %v3112 = vrot.slane %v3111, 1
        %v3113 = vmax.f32 %v3111, %v3112
        %v3114 = vsel %vm2315, %v2133, -inf
        %v3115 = vrot.slane %v3114, 4
        %v3116 = vmax.f32 %v3114, %v3115
        %v3117 = vrot.slane %v3116, 2
        %v3118 = vmax.f32 %v3116, %v3117
        %v3119 = vrot.slane %v3118, 1
        %v3120 = vmax.f32 %v3118, %v3119
        %v3121 = vsel %vm2315, %v2135, -inf
        %v3122 = vrot.slane %v3121, 4
        %v3123 = vmax.f32 %v3121, %v3122
        %v3124 = vrot.slane %v3123, 2
        %v3125 = vmax.f32 %v3123, %v3124
        %v3126 = vrot.slane %v3125, 1
        %v3127 = vmax.f32 %v3125, %v3126
        %v3128 = vsel %vm2315, %v2143, -inf
        %v3129 = vrot.slane %v3128, 4
        %v3130 = vmax.f32 %v3128, %v3129
        %v3131 = vrot.slane %v3130, 2
        %v3132 = vmax.f32 %v3130, %v3131
        %v3133 = vrot.slane %v3132, 1
        %v3134 = vmax.f32 %v3132, %v3133
        %v3135 = vsel %vm2315, %v2151, -inf
        %v3136 = vrot.slane %v3135, 4
        %v3137 = vmax.f32 %v3135, %v3136
        %v3138 = vrot.slane %v3137, 2
        %v3139 = vmax.f32 %v3137, %v3138
        %v3140 = vrot.slane %v3139, 1
        %v3141 = vmax.f32 %v3139, %v3140
        %v3142 = vsel %vm2315, %v2150, -inf
        %v3143 = vrot.slane %v3142, 4
        %v3144 = vmax.f32 %v3142, %v3143
        %v3145 = vrot.slane %v3144, 2
        %v3146 = vmax.f32 %v3144, %v3145
        %v3147 = vrot.slane %v3146, 1
        %v3148 = vmax.f32 %v3146, %v3147
        %v3149 = vsel %vm2315, %v2152, -inf
        %v3150 = vrot.slane %v3149, 4
        %v3151 = vmax.f32 %v3149, %v3150
        %v3152 = vrot.slane %v3151, 2
        %v3153 = vmax.f32 %v3151, %v3152
        %v3154 = vrot.slane %v3153, 1
        %v3155 = vmax.f32 %v3153, %v3154
        %v3156 = vsel %vm2315, %v2160, -inf
        %v3157 = vrot.slane %v3156, 4
        %v3158 = vmax.f32 %v3156, %v3157
        %v3159 = vrot.slane %v3158, 2
        %v3160 = vmax.f32 %v3158, %v3159
        %v3161 = vrot.slane %v3160, 1
        %v3162 = vmax.f32 %v3160, %v3161
        %v3163 = vsel %vm2315, %v2168, -inf
        %v3164 = vrot.slane %v3163, 4
        %v3165 = vmax.f32 %v3163, %v3164
        %v3166 = vrot.slane %v3165, 2
        %v3167 = vmax.f32 %v3165, %v3166
        %v3168 = vrot.slane %v3167, 1
        %v3169 = vmax.f32 %v3167, %v3168
        %v3170 = vsel %vm2315, %v2167, -inf
        %v3171 = vrot.slane %v3170, 4
        %v3172 = vmax.f32 %v3170, %v3171
        %v3173 = vrot.slane %v3172, 2
        %v3174 = vmax.f32 %v3172, %v3173
        %v3175 = vrot.slane %v3174, 1
        %v3176 = vmax.f32 %v3174, %v3175
        %v3177 = vsel %vm2315, %v2169, -inf
        %v3178 = vrot.slane %v3177, 4
        %v3179 = vmax.f32 %v3177, %v3178
        %v3180 = vrot.slane %v3179, 2
        %v3181 = vmax.f32 %v3179, %v3180
        %v3182 = vrot.slane %v3181, 1
        %v3183 = vmax.f32 %v3181, %v3182
        %v3184 = vsel %vm2315, %v2177, -inf
        %v3185 = vrot.slane %v3184, 4
        %v3186 = vmax.f32 %v3184, %v3185
        %v3187 = vrot.slane %v3186, 2
        %v3188 = vmax.f32 %v3186, %v3187
        %v3189 = vrot.slane %v3188, 1
        %v3190 = vmax.f32 %v3188, %v3189
        %v3191 = vsel %vm2315, %v2185, -inf
        %v3192 = vrot.slane %v3191, 4
        %v3193 = vmax.f32 %v3191, %v3192
        %v3194 = vrot.slane %v3193, 2
        %v3195 = vmax.f32 %v3193, %v3194
        %v3196 = vrot.slane %v3195, 1
        %v3197 = vmax.f32 %v3195, %v3196
        %v3198 = vsel %vm2315, %v2184, -inf
        %v3199 = vrot.slane %v3198, 4
        %v3200 = vmax.f32 %v3198, %v3199
        %v3201 = vrot.slane %v3200, 2
        %v3202 = vmax.f32 %v3200, %v3201
        %v3203 = vrot.slane %v3202, 1
        %v3204 = vmax.f32 %v3202, %v3203
        %v3205 = vsel %vm2315, %v2186, -inf
        %v3206 = vrot.slane %v3205, 4
        %v3207 = vmax.f32 %v3205, %v3206
        %v3208 = vrot.slane %v3207, 2
        %v3209 = vmax.f32 %v3207, %v3208
        %v3210 = vrot.slane %v3209, 1
        %v3211 = vmax.f32 %v3209, %v3210
        %v3212 = vld [vmem:[%s3] sm:$0xf]
        %v3213 = vld [vmem:[%s3 + $0x4] sm:$0xf]
        %v3214 = vld [vmem:[%s3 + $0x8] sm:$0xf]
        %v3215 = vld [vmem:[%s3 + $0xc] sm:$0xf]
        %v3216 = vld [vmem:[%s3 + $0x10] sm:$0xf]
        %v3217 = vld [vmem:[%s3 + $0x14] sm:$0xf]
        %v3218 = vld [vmem:[%s3 + $0x18] sm:$0xf]
        %v3219 = vld [vmem:[%s3 + $0x1c] sm:$0xf]
        %v3220 = vld [vmem:[%s3 + $0x20] sm:$0xf]
        %v3221 = vld [vmem:[%s3 + $0x24] sm:$0xf]
        %v3222 = vld [vmem:[%s3 + $0x28] sm:$0xf]
        %v3223 = vld [vmem:[%s3 + $0x2c] sm:$0xf]
        %v3224 = vld [vmem:[%s3 + $0x30] sm:$0xf]
        %v3225 = vld [vmem:[%s3 + $0x34] sm:$0xf]
        %v3226 = vld [vmem:[%s3 + $0x38] sm:$0xf]
        %v3227 = vld [vmem:[%s3 + $0x3c] sm:$0xf]
        %v3228 = vld [vmem:[%s3 + $0x40] sm:$0xf]
        %v3229 = vld [vmem:[%s3 + $0x44] sm:$0xf]
        %v3230 = vld [vmem:[%s3 + $0x48] sm:$0xf]
        %v3231 = vld [vmem:[%s3 + $0x4c] sm:$0xf]
        %v3232 = vld [vmem:[%s3 + $0x50] sm:$0xf]
        %v3233 = vld [vmem:[%s3 + $0x54] sm:$0xf]
        %v3234 = vld [vmem:[%s3 + $0x58] sm:$0xf]
        %v3235 = vld [vmem:[%s3 + $0x5c] sm:$0xf]
        %v3236 = vld [vmem:[%s4] sm:$0x1]
        %v3237 = vpack.c.bf16 %v2322, %v2322
        %v3238 = vpack.c.bf16 %v2329, %v2329
        %v3239 = vpack.c.bf16 %v2336, %v2336
        %v3240 = vpack.c.bf16 %v2343, %v2343
        %v3241 = vpack.c.bf16 %v2350, %v2350
        %v3242 = vpack.c.bf16 %v2357, %v2357
        %v3243 = vpack.c.bf16 %v2364, %v2364
        %v3244 = vpack.c.bf16 %v2371, %v2371
        %v3245 = vpack.c.bf16 %v2378, %v2378
        %v3246 = vpack.c.bf16 %v2385, %v2385
        %v3247 = vpack.c.bf16 %v2392, %v2392
        %v3248 = vpack.c.bf16 %v2399, %v2399
        %v3249 = vpack.c.bf16 %v2406, %v2406
        %v3250 = vpack.c.bf16 %v2413, %v2413
        %v3251 = vpack.c.bf16 %v2420, %v2420
        %v3252 = vpack.c.bf16 %v2427, %v2427
        %v3253 = vpack.c.bf16 %v2434, %v2434
        %v3254 = vpack.c.bf16 %v2441, %v2441
        %v3255 = vpack.c.bf16 %v2448, %v2448
        %v3256 = vpack.c.bf16 %v2455, %v2455
        %v3257 = vpack.c.bf16 %v2462, %v2462
        %v3258 = vpack.c.bf16 %v2469, %v2469
        %v3259 = vpack.c.bf16 %v2476, %v2476
        %v3260 = vpack.c.bf16 %v2483, %v2483
        %v3261 = vpack.c.bf16 %v2490, %v2490
        %v3262 = vpack.c.bf16 %v2497, %v2497
        %v3263 = vpack.c.bf16 %v2504, %v2504
        %v3264 = vpack.c.bf16 %v2511, %v2511
        %v3265 = vpack.c.bf16 %v2518, %v2518
        %v3266 = vpack.c.bf16 %v2525, %v2525
        %v3267 = vpack.c.bf16 %v2532, %v2532
        %v3268 = vpack.c.bf16 %v2539, %v2539
        %v3269 = vpack.c.bf16 %v2546, %v2546
        %v3270 = vpack.c.bf16 %v2553, %v2553
        %v3271 = vpack.c.bf16 %v2560, %v2560
        %v3272 = vpack.c.bf16 %v2567, %v2567
        %v3273 = vpack.c.bf16 %v2574, %v2574
        %v3274 = vpack.c.bf16 %v2581, %v2581
        %v3275 = vpack.c.bf16 %v2588, %v2588
        %v3276 = vpack.c.bf16 %v2595, %v2595
        %v3277 = vpack.c.bf16 %v2602, %v2602
        %v3278 = vpack.c.bf16 %v2609, %v2609
        %v3279 = vpack.c.bf16 %v2616, %v2616
        %v3280 = vpack.c.bf16 %v2623, %v2623
        %v3281 = vpack.c.bf16 %v2630, %v2630
        %v3282 = vpack.c.bf16 %v2637, %v2637
        %v3283 = vpack.c.bf16 %v2644, %v2644
        %v3284 = vpack.c.bf16 %v2651, %v2651
        %v3285 = vpack.c.bf16 %v2658, %v2658
        %v3286 = vpack.c.bf16 %v2665, %v2665
        %v3287 = vpack.c.bf16 %v2672, %v2672
        %v3288 = vpack.c.bf16 %v2679, %v2679
        %v3289 = vpack.c.bf16 %v2686, %v2686
        %v3290 = vpack.c.bf16 %v2693, %v2693
        %v3291 = vpack.c.bf16 %v2700, %v2700
        %v3292 = vpack.c.bf16 %v2707, %v2707
        %v3293 = vpack.c.bf16 %v2714, %v2714
        %v3294 = vpack.c.bf16 %v2721, %v2721
        %v3295 = vpack.c.bf16 %v2728, %v2728
        %v3296 = vpack.c.bf16 %v2735, %v2735
        %v3297 = vpack.c.bf16 %v2742, %v2742
        %v3298 = vpack.c.bf16 %v2749, %v2749
        %v3299 = vpack.c.bf16 %v2756, %v2756
        %v3300 = vpack.c.bf16 %v2763, %v2763
        %v3301 = vpack.c.bf16 %v2770, %v2770
        %v3302 = vpack.c.bf16 %v2777, %v2777
        %v3303 = vpack.c.bf16 %v2784, %v2784
        %v3304 = vpack.c.bf16 %v2791, %v2791
        %v3305 = vpack.c.bf16 %v2798, %v2798
        %v3306 = vpack.c.bf16 %v2805, %v2805
        %v3307 = vpack.c.bf16 %v2812, %v2812
        %v3308 = vpack.c.bf16 %v2819, %v2819
        %v3309 = vpack.c.bf16 %v2826, %v2826
        %v3310 = vpack.c.bf16 %v2833, %v2833
        %v3311 = vpack.c.bf16 %v2840, %v2840
        %v3312 = vpack.c.bf16 %v2847, %v2847
        %v3313 = vpack.c.bf16 %v2854, %v2854
        %v3314 = vpack.c.bf16 %v2861, %v2861
        %v3315 = vpack.c.bf16 %v2868, %v2868
        %v3316 = vpack.c.bf16 %v2875, %v2875
        %v3317 = vpack.c.bf16 %v2882, %v2882
        %v3318 = vpack.c.bf16 %v2889, %v2889
        %v3319 = vpack.c.bf16 %v2896, %v2896
        %v3320 = vpack.c.bf16 %v2903, %v2903
        %v3321 = vpack.c.bf16 %v2910, %v2910
        %v3322 = vpack.c.bf16 %v2917, %v2917
        %v3323 = vpack.c.bf16 %v2924, %v2924
        %v3324 = vpack.c.bf16 %v2931, %v2931
        %v3325 = vpack.c.bf16 %v2938, %v2938
        %v3326 = vpack.c.bf16 %v2945, %v2945
        %v3327 = vpack.c.bf16 %v2952, %v2952
        %v3328 = vpack.c.bf16 %v2959, %v2959
        %v3329 = vpack.c.bf16 %v2966, %v2966
        %v3330 = vpack.c.bf16 %v2973, %v2973
        %v3331 = vpack.c.bf16 %v2980, %v2980
        %v3332 = vpack.c.bf16 %v2987, %v2987
        %v3333 = vpack.c.bf16 %v2994, %v2994
        %v3334 = vpack.c.bf16 %v3001, %v3001
        %v3335 = vpack.c.bf16 %v3008, %v3008
        %v3336 = vpack.c.bf16 %v3015, %v3015
        %v3337 = vpack.c.bf16 %v3022, %v3022
        %v3338 = vpack.c.bf16 %v3029, %v3029
        %v3339 = vpack.c.bf16 %v3036, %v3036
        %v3340 = vpack.c.bf16 %v3043, %v3043
        %v3341 = vpack.c.bf16 %v3050, %v3050
        %v3342 = vpack.c.bf16 %v3057, %v3057
        %v3343 = vpack.c.bf16 %v3064, %v3064
        %v3344 = vpack.c.bf16 %v3071, %v3071
        %v3345 = vpack.c.bf16 %v3078, %v3078
        %v3346 = vpack.c.bf16 %v3085, %v3085
        %v3347 = vpack.c.bf16 %v3092, %v3092
        %v3348 = vpack.c.bf16 %v3099, %v3099
        %v3349 = vpack.c.bf16 %v3106, %v3106
        %v3350 = vpack.c.bf16 %v3113, %v3113
        %v3351 = vpack.c.bf16 %v3120, %v3120
        %v3352 = vpack.c.bf16 %v3127, %v3127
        %v3353 = vpack.c.bf16 %v3134, %v3134
        %v3354 = vpack.c.bf16 %v3141, %v3141
        %v3355 = vpack.c.bf16 %v3148, %v3148
        %v3356 = vpack.c.bf16 %v3155, %v3155
        %v3357 = vpack.c.bf16 %v3162, %v3162
        %v3358 = vpack.c.bf16 %v3169, %v3169
        %v3359 = vpack.c.bf16 %v3176, %v3176
        %v3360 = vpack.c.bf16 %v3183, %v3183
        %v3361 = vpack.c.bf16 %v3190, %v3190
        %v3362 = vpack.c.bf16 %v3197, %v3197
        %v3363 = vpack.c.bf16 %v3204, %v3204
        %v3364 = vpack.c.bf16 %v3211, %v3211
        %v3485 = vunpack.c.l.b16 %v3237
        %v3486 = vunpack.c.l.b16 %v3238
        %v3487 = vunpack.c.l.b16 %v3239
        %v3488 = vunpack.c.l.b16 %v3240
        %v3489 = vunpack.c.l.b16 %v3241
        %v3490 = vunpack.c.l.b16 %v3242
        %v3491 = vunpack.c.l.b16 %v3243
        %v3492 = vunpack.c.l.b16 %v3244
        %v3493 = vunpack.c.l.b16 %v3245
        %v3494 = vunpack.c.l.b16 %v3246
        %v3495 = vunpack.c.l.b16 %v3247
        %v3496 = vunpack.c.l.b16 %v3248
        %v3497 = vunpack.c.l.b16 %v3249
        %v3498 = vunpack.c.l.b16 %v3250
        %v3499 = vunpack.c.l.b16 %v3251
        %v3500 = vunpack.c.l.b16 %v3253
        %v3501 = vunpack.c.l.b16 %v3254
        %v3502 = vunpack.c.l.b16 %v3255
        %v3503 = vunpack.c.l.b16 %v3256
        %v3504 = vunpack.c.l.b16 %v3257
        %v3505 = vunpack.c.l.b16 %v3258
        %v3506 = vunpack.c.l.b16 %v3259
        %v3507 = vunpack.c.l.b16 %v3260
        %v3508 = vunpack.c.l.b16 %v3261
        %v3509 = vunpack.c.l.b16 %v3262
        %v3510 = vunpack.c.l.b16 %v3263
        %v3511 = vunpack.c.l.b16 %v3264
        %v3512 = vunpack.c.l.b16 %v3265
        %v3513 = vunpack.c.l.b16 %v3266
        %v3514 = vunpack.c.l.b16 %v3267
        %v3515 = vunpack.c.l.b16 %v3269
        %v3516 = vunpack.c.l.b16 %v3270
        %v3517 = vunpack.c.l.b16 %v3271
        %v3518 = vunpack.c.l.b16 %v3272
        %v3519 = vunpack.c.l.b16 %v3273
        %v3520 = vunpack.c.l.b16 %v3274
        %v3521 = vunpack.c.l.b16 %v3275
        %v3522 = vunpack.c.l.b16 %v3276
        %v3523 = vunpack.c.l.b16 %v3277
        %v3524 = vunpack.c.l.b16 %v3278
        %v3525 = vunpack.c.l.b16 %v3279
        %v3526 = vunpack.c.l.b16 %v3280
        %v3527 = vunpack.c.l.b16 %v3281
        %v3528 = vunpack.c.l.b16 %v3282
        %v3529 = vunpack.c.l.b16 %v3283
        %v3530 = vunpack.c.l.b16 %v3285
        %v3531 = vunpack.c.l.b16 %v3286
        %v3532 = vunpack.c.l.b16 %v3287
        %v3533 = vunpack.c.l.b16 %v3288
        %v3534 = vunpack.c.l.b16 %v3289
        %v3535 = vunpack.c.l.b16 %v3290
        %v3536 = vunpack.c.l.b16 %v3291
        %v3537 = vunpack.c.l.b16 %v3292
        %v3538 = vunpack.c.l.b16 %v3293
        %v3539 = vunpack.c.l.b16 %v3294
        %v3540 = vunpack.c.l.b16 %v3295
        %v3541 = vunpack.c.l.b16 %v3296
        %v3542 = vunpack.c.l.b16 %v3297
        %v3543 = vunpack.c.l.b16 %v3298
        %v3544 = vunpack.c.l.b16 %v3299
        %v3545 = vunpack.c.l.b16 %v3301
        %v3546 = vunpack.c.l.b16 %v3302
        %v3547 = vunpack.c.l.b16 %v3303
        %v3548 = vunpack.c.l.b16 %v3304
        %v3549 = vunpack.c.l.b16 %v3305
        %v3550 = vunpack.c.l.b16 %v3306
        %v3551 = vunpack.c.l.b16 %v3307
        %v3552 = vunpack.c.l.b16 %v3308
        %v3553 = vunpack.c.l.b16 %v3309
        %v3554 = vunpack.c.l.b16 %v3310
        %v3555 = vunpack.c.l.b16 %v3311
        %v3556 = vunpack.c.l.b16 %v3312
        %v3557 = vunpack.c.l.b16 %v3313
        %v3558 = vunpack.c.l.b16 %v3314
        %v3559 = vunpack.c.l.b16 %v3315
        %v3560 = vunpack.c.l.b16 %v3317
        %v3561 = vunpack.c.l.b16 %v3318
        %v3562 = vunpack.c.l.b16 %v3319
        %v3563 = vunpack.c.l.b16 %v3320
        %v3564 = vunpack.c.l.b16 %v3321
        %v3565 = vunpack.c.l.b16 %v3322
        %v3566 = vunpack.c.l.b16 %v3323
        %v3567 = vunpack.c.l.b16 %v3324
        %v3568 = vunpack.c.l.b16 %v3325
        %v3569 = vunpack.c.l.b16 %v3326
        %v3570 = vunpack.c.l.b16 %v3327
        %v3571 = vunpack.c.l.b16 %v3328
        %v3572 = vunpack.c.l.b16 %v3329
        %v3573 = vunpack.c.l.b16 %v3330
        %v3574 = vunpack.c.l.b16 %v3331
        %v3575 = vunpack.c.l.b16 %v3333
        %v3576 = vunpack.c.l.b16 %v3334
        %v3577 = vunpack.c.l.b16 %v3335
        %v3578 = vunpack.c.l.b16 %v3336
        %v3579 = vunpack.c.l.b16 %v3337
        %v3580 = vunpack.c.l.b16 %v3338
        %v3581 = vunpack.c.l.b16 %v3339
        %v3582 = vunpack.c.l.b16 %v3340
        %v3583 = vunpack.c.l.b16 %v3341
        %v3584 = vunpack.c.l.b16 %v3342
        %v3585 = vunpack.c.l.b16 %v3343
        %v3586 = vunpack.c.l.b16 %v3344
        %v3587 = vunpack.c.l.b16 %v3345
        %v3588 = vunpack.c.l.b16 %v3346
        %v3589 = vunpack.c.l.b16 %v3347
        %v3590 = vunpack.c.l.b16 %v3349
        %v3591 = vunpack.c.l.b16 %v3350
        %v3592 = vunpack.c.l.b16 %v3351
        %v3593 = vunpack.c.l.b16 %v3352
        %v3594 = vunpack.c.l.b16 %v3353
        %v3595 = vunpack.c.l.b16 %v3354
        %v3596 = vunpack.c.l.b16 %v3355
        %v3597 = vunpack.c.l.b16 %v3356
        %v3598 = vunpack.c.l.b16 %v3357
        %v3599 = vunpack.c.l.b16 %v3358
        %v3600 = vunpack.c.l.b16 %v3359
        %v3601 = vunpack.c.l.b16 %v3360
        %v3602 = vunpack.c.l.b16 %v3361
        %v3603 = vunpack.c.l.b16 %v3362
        %v3604 = vunpack.c.l.b16 %v3363
        %vm3605 = vcmask 1042434
        %v3606 = vsel %vm3605, %v3486, %v3485
        %vm3607 = vcmask 1043459
        %v3608 = vsel %vm3607, %v3487, %v3606
        %vm3609 = vcmask 1044484
        %v3610 = vsel %vm3609, %v3488, %v3608
        %vm3611 = vcmask 1045509
        %v3612 = vsel %vm3611, %v3489, %v3610
        %vm3613 = vcmask 1046534
        %v3614 = vsel %vm3613, %v3490, %v3612
        %vm3615 = vcmask 1047559
        %v3616 = vsel %vm3615, %v3491, %v3614
        %vm3617 = vcmask 1041409
        %v3618 = vsel %vm3617, %v3493, %v3492
        %v3619 = vsel %vm3605, %v3494, %v3618
        %v3620 = vsel %vm3607, %v3495, %v3619
        %v3621 = vsel %vm3609, %v3496, %v3620
        %v3622 = vsel %vm3611, %v3497, %v3621
        %v3623 = vsel %vm3613, %v3498, %v3622
        %v3624 = vsel %vm3615, %v3499, %v3623
        %v3625 = vsel %vm3605, %v3501, %v3500
        %v3626 = vsel %vm3607, %v3502, %v3625
        %v3627 = vsel %vm3609, %v3503, %v3626
        %v3628 = vsel %vm3611, %v3504, %v3627
        %v3629 = vsel %vm3613, %v3505, %v3628
        %v3630 = vsel %vm3615, %v3506, %v3629
        %v3631 = vsel %vm3617, %v3508, %v3507
        %v3632 = vsel %vm3605, %v3509, %v3631
        %v3633 = vsel %vm3607, %v3510, %v3632
        %v3634 = vsel %vm3609, %v3511, %v3633
        %v3635 = vsel %vm3611, %v3512, %v3634
        %v3636 = vsel %vm3613, %v3513, %v3635
        %v3637 = vsel %vm3615, %v3514, %v3636
        %v3638 = vsel %vm3605, %v3516, %v3515
        %v3639 = vsel %vm3607, %v3517, %v3638
        %v3640 = vsel %vm3609, %v3518, %v3639
        %v3641 = vsel %vm3611, %v3519, %v3640
        %v3642 = vsel %vm3613, %v3520, %v3641
        %v3643 = vsel %vm3615, %v3521, %v3642
        %v3644 = vsel %vm3617, %v3523, %v3522
        %v3645 = vsel %vm3605, %v3524, %v3644
        %v3646 = vsel %vm3607, %v3525, %v3645
        %v3647 = vsel %vm3609, %v3526, %v3646
        %v3648 = vsel %vm3611, %v3527, %v3647
        %v3649 = vsel %vm3613, %v3528, %v3648
        %v3650 = vsel %vm3615, %v3529, %v3649
        %v3651 = vsel %vm3605, %v3531, %v3530
        %v3652 = vsel %vm3607, %v3532, %v3651
        %v3653 = vsel %vm3609, %v3533, %v3652
        %v3654 = vsel %vm3611, %v3534, %v3653
        %v3655 = vsel %vm3613, %v3535, %v3654
        %v3656 = vsel %vm3615, %v3536, %v3655
        %v3657 = vsel %vm3617, %v3538, %v3537
        %v3658 = vsel %vm3605, %v3539, %v3657
        %v3659 = vsel %vm3607, %v3540, %v3658
        %v3660 = vsel %vm3609, %v3541, %v3659
        %v3661 = vsel %vm3611, %v3542, %v3660
        %v3662 = vsel %vm3613, %v3543, %v3661
        %v3663 = vsel %vm3615, %v3544, %v3662
        %v3664 = vsel %vm3605, %v3546, %v3545
        %v3665 = vsel %vm3607, %v3547, %v3664
        %v3666 = vsel %vm3609, %v3548, %v3665
        %v3667 = vsel %vm3611, %v3549, %v3666
        %v3668 = vsel %vm3613, %v3550, %v3667
        %v3669 = vsel %vm3615, %v3551, %v3668
        %v3670 = vsel %vm3617, %v3553, %v3552
        %v3671 = vsel %vm3605, %v3554, %v3670
        %v3672 = vsel %vm3607, %v3555, %v3671
        %v3673 = vsel %vm3609, %v3556, %v3672
        %v3674 = vsel %vm3611, %v3557, %v3673
        %v3675 = vsel %vm3613, %v3558, %v3674
        %v3676 = vsel %vm3615, %v3559, %v3675
        %v3677 = vsel %vm3605, %v3561, %v3560
        %v3678 = vsel %vm3607, %v3562, %v3677
        %v3679 = vsel %vm3609, %v3563, %v3678
        %v3680 = vsel %vm3611, %v3564, %v3679
        %v3681 = vsel %vm3613, %v3565, %v3680
        %v3682 = vsel %vm3615, %v3566, %v3681
        %v3683 = vsel %vm3617, %v3568, %v3567
        %v3684 = vsel %vm3605, %v3569, %v3683
        %v3685 = vsel %vm3607, %v3570, %v3684
        %v3686 = vsel %vm3609, %v3571, %v3685
        %v3687 = vsel %vm3611, %v3572, %v3686
        %v3688 = vsel %vm3613, %v3573, %v3687
        %v3689 = vsel %vm3615, %v3574, %v3688
        %v3690 = vsel %vm3605, %v3576, %v3575
        %v3691 = vsel %vm3607, %v3577, %v3690
        %v3692 = vsel %vm3609, %v3578, %v3691
        %v3693 = vsel %vm3611, %v3579, %v3692
        %v3694 = vsel %vm3613, %v3580, %v3693
        %v3695 = vsel %vm3615, %v3581, %v3694
        %v3696 = vsel %vm3617, %v3583, %v3582
        %v3697 = vsel %vm3605, %v3584, %v3696
        %v3698 = vsel %vm3607, %v3585, %v3697
        %v3699 = vsel %vm3609, %v3586, %v3698
        %v3700 = vsel %vm3611, %v3587, %v3699
        %v3701 = vsel %vm3613, %v3588, %v3700
        %v3702 = vsel %vm3615, %v3589, %v3701
        %v3703 = vsel %vm3605, %v3591, %v3590
        %v3704 = vsel %vm3607, %v3592, %v3703
        %v3705 = vsel %vm3609, %v3593, %v3704
        %v3706 = vsel %vm3611, %v3594, %v3705
        %v3707 = vsel %vm3613, %v3595, %v3706
        %v3708 = vsel %vm3615, %v3596, %v3707
        %v3709 = vsel %vm3617, %v3598, %v3597
        %v3710 = vsel %vm3605, %v3599, %v3709
        %v3711 = vsel %vm3607, %v3600, %v3710
        %v3712 = vsel %vm3609, %v3601, %v3711
        %v3713 = vsel %vm3611, %v3602, %v3712
        %v3714 = vsel %vm3613, %v3603, %v3713
        %v3715 = vsel %vm3615, %v3604, %v3714
        %v3716 = vpack.c.b16 %v3624, %v3616
        %v3717 = vpack.c.b16 %v3637, %v3630
        %v3718 = vpack.c.b16 %v3650, %v3643
        %v3719 = vpack.c.b16 %v3663, %v3656
        %v3720 = vpack.c.b16 %v3676, %v3669
        %v3721 = vpack.c.b16 %v3689, %v3682
        %v3722 = vpack.c.b16 %v3702, %v3695
        %v3723 = vpack.c.b16 %v3715, %v3708
        %v3732 = vsel %vm1132, 0, %v3716
        %v3733 = vsel %vm1132, 0, %v3717
        %v3734 = vsel %vm1132, 0, %v3718
        %v3735 = vsel %vm1132, 0, %v3719
        %v3736 = vsel %vm1132, 0, %v3720
        %v3737 = vsel %vm1132, 0, %v3721
        %v3738 = vsel %vm1132, 0, %v3722
        %v3739 = vsel %vm1132, 0, %v3723
        %v3748 = vunpack.c.l.b16 %v3252
        %v3749 = vunpack.c.l.b16 %v3268
        %v3750 = vunpack.c.l.b16 %v3284
        %v3751 = vunpack.c.l.b16 %v3300
        %v3752 = vunpack.c.l.b16 %v3316
        %v3753 = vunpack.c.l.b16 %v3332
        %v3754 = vunpack.c.l.b16 %v3348
        %v3755 = vunpack.c.l.b16 %v3364
        %v3756 = vsel %vm3617, %v3487, %v3486
        %v3757 = vsel %vm3605, %v3488, %v3756
        %v3758 = vsel %vm3607, %v3489, %v3757
        %v3759 = vsel %vm3609, %v3490, %v3758
        %v3760 = vsel %vm3611, %v3491, %v3759
        %v3761 = vsel %vm3613, %v3492, %v3760
        %v3762 = vsel %vm3615, %v3493, %v3761
        %v3763 = vsel %vm3617, %v3495, %v3494
        %v3764 = vsel %vm3605, %v3496, %v3763
        %v3765 = vsel %vm3607, %v3497, %v3764
        %v3766 = vsel %vm3609, %v3498, %v3765
        %v3767 = vsel %vm3611, %v3499, %v3766
        %v3768 = vsel %vm3613, %v3748, %v3767
        %v3769 = vsel %vm3617, %v3502, %v3501
        %v3770 = vsel %vm3605, %v3503, %v3769
        %v3771 = vsel %vm3607, %v3504, %v3770
        %v3772 = vsel %vm3609, %v3505, %v3771
        %v3773 = vsel %vm3611, %v3506, %v3772
        %v3774 = vsel %vm3613, %v3507, %v3773
        %v3775 = vsel %vm3615, %v3508, %v3774
        %v3776 = vsel %vm3617, %v3510, %v3509
        %v3777 = vsel %vm3605, %v3511, %v3776
        %v3778 = vsel %vm3607, %v3512, %v3777
        %v3779 = vsel %vm3609, %v3513, %v3778
        %v3780 = vsel %vm3611, %v3514, %v3779
        %v3781 = vsel %vm3613, %v3749, %v3780
        %v3782 = vsel %vm3617, %v3517, %v3516
        %v3783 = vsel %vm3605, %v3518, %v3782
        %v3784 = vsel %vm3607, %v3519, %v3783
        %v3785 = vsel %vm3609, %v3520, %v3784
        %v3786 = vsel %vm3611, %v3521, %v3785
        %v3787 = vsel %vm3613, %v3522, %v3786
        %v3788 = vsel %vm3615, %v3523, %v3787
        %v3789 = vsel %vm3617, %v3525, %v3524
        %v3790 = vsel %vm3605, %v3526, %v3789
        %v3791 = vsel %vm3607, %v3527, %v3790
        %v3792 = vsel %vm3609, %v3528, %v3791
        %v3793 = vsel %vm3611, %v3529, %v3792
        %v3794 = vsel %vm3613, %v3750, %v3793
        %v3795 = vsel %vm3617, %v3532, %v3531
        %v3796 = vsel %vm3605, %v3533, %v3795
        %v3797 = vsel %vm3607, %v3534, %v3796
        %v3798 = vsel %vm3609, %v3535, %v3797
        %v3799 = vsel %vm3611, %v3536, %v3798
        %v3800 = vsel %vm3613, %v3537, %v3799
        %v3801 = vsel %vm3615, %v3538, %v3800
        %v3802 = vsel %vm3617, %v3540, %v3539
        %v3803 = vsel %vm3605, %v3541, %v3802
        %v3804 = vsel %vm3607, %v3542, %v3803
        %v3805 = vsel %vm3609, %v3543, %v3804
        %v3806 = vsel %vm3611, %v3544, %v3805
        %v3807 = vsel %vm3613, %v3751, %v3806
        %v3808 = vsel %vm3617, %v3547, %v3546
        %v3809 = vsel %vm3605, %v3548, %v3808
        %v3810 = vsel %vm3607, %v3549, %v3809
        %v3811 = vsel %vm3609, %v3550, %v3810
        %v3812 = vsel %vm3611, %v3551, %v3811
        %v3813 = vsel %vm3613, %v3552, %v3812
        %v3814 = vsel %vm3615, %v3553, %v3813
        %v3815 = vsel %vm3617, %v3555, %v3554
        %v3816 = vsel %vm3605, %v3556, %v3815
        %v3817 = vsel %vm3607, %v3557, %v3816
        %v3818 = vsel %vm3609, %v3558, %v3817
        %v3819 = vsel %vm3611, %v3559, %v3818
        %v3820 = vsel %vm3613, %v3752, %v3819
        %v3821 = vsel %vm3617, %v3562, %v3561
        %v3822 = vsel %vm3605, %v3563, %v3821
        %v3823 = vsel %vm3607, %v3564, %v3822
        %v3824 = vsel %vm3609, %v3565, %v3823
        %v3825 = vsel %vm3611, %v3566, %v3824
        %v3826 = vsel %vm3613, %v3567, %v3825
        %v3827 = vsel %vm3615, %v3568, %v3826
        %v3828 = vsel %vm3617, %v3570, %v3569
        %v3829 = vsel %vm3605, %v3571, %v3828
        %v3830 = vsel %vm3607, %v3572, %v3829
        %v3831 = vsel %vm3609, %v3573, %v3830
        %v3832 = vsel %vm3611, %v3574, %v3831
        %v3833 = vsel %vm3613, %v3753, %v3832
        %v3834 = vsel %vm3617, %v3577, %v3576
        %v3835 = vsel %vm3605, %v3578, %v3834
        %v3836 = vsel %vm3607, %v3579, %v3835
        %v3837 = vsel %vm3609, %v3580, %v3836
        %v3838 = vsel %vm3611, %v3581, %v3837
        %v3839 = vsel %vm3613, %v3582, %v3838
        %v3840 = vsel %vm3615, %v3583, %v3839
        %v3841 = vsel %vm3617, %v3585, %v3584
        %v3842 = vsel %vm3605, %v3586, %v3841
        %v3843 = vsel %vm3607, %v3587, %v3842
        %v3844 = vsel %vm3609, %v3588, %v3843
        %v3845 = vsel %vm3611, %v3589, %v3844
        %v3846 = vsel %vm3613, %v3754, %v3845
        %v3847 = vsel %vm3617, %v3592, %v3591
        %v3848 = vsel %vm3605, %v3593, %v3847
        %v3849 = vsel %vm3607, %v3594, %v3848
        %v3850 = vsel %vm3609, %v3595, %v3849
        %v3851 = vsel %vm3611, %v3596, %v3850
        %v3852 = vsel %vm3613, %v3597, %v3851
        %v3853 = vsel %vm3615, %v3598, %v3852
        %v3854 = vsel %vm3617, %v3600, %v3599
        %v3855 = vsel %vm3605, %v3601, %v3854
        %v3856 = vsel %vm3607, %v3602, %v3855
        %v3857 = vsel %vm3609, %v3603, %v3856
        %v3858 = vsel %vm3611, %v3604, %v3857
        %v3859 = vsel %vm3613, %v3755, %v3858
        %v3860 = vpack.c.b16 %v3768, %v3762
        %v3861 = vpack.c.b16 %v3781, %v3775
        %v3862 = vpack.c.b16 %v3794, %v3788
        %v3863 = vpack.c.b16 %v3807, %v3801
        %v3864 = vpack.c.b16 %v3820, %v3814
        %v3865 = vpack.c.b16 %v3833, %v3827
        %v3866 = vpack.c.b16 %v3846, %v3840
        %v3867 = vpack.c.b16 %v3859, %v3853
        %v3876 = vsel %vm1191, %v3860, 0
        %v3877 = vsel %vm1191, %v3861, 0
        %v3878 = vsel %vm1191, %v3862, 0
        %v3879 = vsel %vm1191, %v3863, 0
        %v3880 = vsel %vm1191, %v3864, 0
        %v3881 = vsel %vm1191, %v3865, 0
        %v3882 = vsel %vm1191, %v3866, 0
        %v3883 = vsel %vm1191, %v3867, 0
        %v3884 = vsel %vm3617, %v3486, %v3485
        %v3885 = vsel %vm3605, %v3487, %v3884
        %v3886 = vsel %vm3607, %v3488, %v3885
        %v3887 = vsel %vm3609, %v3489, %v3886
        %v3888 = vsel %vm3611, %v3490, %v3887
        %v3889 = vsel %vm3613, %v3491, %v3888
        %v3890 = vsel %vm3615, %v3492, %v3889
        %v3891 = vsel %vm3617, %v3494, %v3493
        %v3892 = vsel %vm3605, %v3495, %v3891
        %v3893 = vsel %vm3607, %v3496, %v3892
        %v3894 = vsel %vm3609, %v3497, %v3893
        %v3895 = vsel %vm3611, %v3498, %v3894
        %v3896 = vsel %vm3613, %v3499, %v3895
        %v3897 = vsel %vm3615, %v3748, %v3896
        %v3898 = vsel %vm3617, %v3501, %v3500
        %v3899 = vsel %vm3605, %v3502, %v3898
        %v3900 = vsel %vm3607, %v3503, %v3899
        %v3901 = vsel %vm3609, %v3504, %v3900
        %v3902 = vsel %vm3611, %v3505, %v3901
        %v3903 = vsel %vm3613, %v3506, %v3902
        %v3904 = vsel %vm3615, %v3507, %v3903
        %v3905 = vsel %vm3617, %v3509, %v3508
        %v3906 = vsel %vm3605, %v3510, %v3905
        %v3907 = vsel %vm3607, %v3511, %v3906
        %v3908 = vsel %vm3609, %v3512, %v3907
        %v3909 = vsel %vm3611, %v3513, %v3908
        %v3910 = vsel %vm3613, %v3514, %v3909
        %v3911 = vsel %vm3615, %v3749, %v3910
        %v3912 = vsel %vm3617, %v3516, %v3515
        %v3913 = vsel %vm3605, %v3517, %v3912
        %v3914 = vsel %vm3607, %v3518, %v3913
        %v3915 = vsel %vm3609, %v3519, %v3914
        %v3916 = vsel %vm3611, %v3520, %v3915
        %v3917 = vsel %vm3613, %v3521, %v3916
        %v3918 = vsel %vm3615, %v3522, %v3917
        %v3919 = vsel %vm3617, %v3524, %v3523
        %v3920 = vsel %vm3605, %v3525, %v3919
        %v3921 = vsel %vm3607, %v3526, %v3920
        %v3922 = vsel %vm3609, %v3527, %v3921
        %v3923 = vsel %vm3611, %v3528, %v3922
        %v3924 = vsel %vm3613, %v3529, %v3923
        %v3925 = vsel %vm3615, %v3750, %v3924
        %v3926 = vsel %vm3617, %v3531, %v3530
        %v3927 = vsel %vm3605, %v3532, %v3926
        %v3928 = vsel %vm3607, %v3533, %v3927
        %v3929 = vsel %vm3609, %v3534, %v3928
        %v3930 = vsel %vm3611, %v3535, %v3929
        %v3931 = vsel %vm3613, %v3536, %v3930
        %v3932 = vsel %vm3615, %v3537, %v3931
        %v3933 = vsel %vm3617, %v3539, %v3538
        %v3934 = vsel %vm3605, %v3540, %v3933
        %v3935 = vsel %vm3607, %v3541, %v3934
        %v3936 = vsel %vm3609, %v3542, %v3935
        %v3937 = vsel %vm3611, %v3543, %v3936
        %v3938 = vsel %vm3613, %v3544, %v3937
        %v3939 = vsel %vm3615, %v3751, %v3938
        %v3940 = vsel %vm3617, %v3546, %v3545
        %v3941 = vsel %vm3605, %v3547, %v3940
        %v3942 = vsel %vm3607, %v3548, %v3941
        %v3943 = vsel %vm3609, %v3549, %v3942
        %v3944 = vsel %vm3611, %v3550, %v3943
        %v3945 = vsel %vm3613, %v3551, %v3944
        %v3946 = vsel %vm3615, %v3552, %v3945
        %v3947 = vsel %vm3617, %v3554, %v3553
        %v3948 = vsel %vm3605, %v3555, %v3947
        %v3949 = vsel %vm3607, %v3556, %v3948
        %v3950 = vsel %vm3609, %v3557, %v3949
        %v3951 = vsel %vm3611, %v3558, %v3950
        %v3952 = vsel %vm3613, %v3559, %v3951
        %v3953 = vsel %vm3615, %v3752, %v3952
        %v3954 = vsel %vm3617, %v3561, %v3560
        %v3955 = vsel %vm3605, %v3562, %v3954
        %v3956 = vsel %vm3607, %v3563, %v3955
        %v3957 = vsel %vm3609, %v3564, %v3956
        %v3958 = vsel %vm3611, %v3565, %v3957
        %v3959 = vsel %vm3613, %v3566, %v3958
        %v3960 = vsel %vm3615, %v3567, %v3959
        %v3961 = vsel %vm3617, %v3569, %v3568
        %v3962 = vsel %vm3605, %v3570, %v3961
        %v3963 = vsel %vm3607, %v3571, %v3962
        %v3964 = vsel %vm3609, %v3572, %v3963
        %v3965 = vsel %vm3611, %v3573, %v3964
        %v3966 = vsel %vm3613, %v3574, %v3965
        %v3967 = vsel %vm3615, %v3753, %v3966
        %v3968 = vsel %vm3617, %v3576, %v3575
        %v3969 = vsel %vm3605, %v3577, %v3968
        %v3970 = vsel %vm3607, %v3578, %v3969
        %v3971 = vsel %vm3609, %v3579, %v3970
        %v3972 = vsel %vm3611, %v3580, %v3971
        %v3973 = vsel %vm3613, %v3581, %v3972
        %v3974 = vsel %vm3615, %v3582, %v3973
        %v3975 = vsel %vm3617, %v3584, %v3583
        %v3976 = vsel %vm3605, %v3585, %v3975
        %v3977 = vsel %vm3607, %v3586, %v3976
        %v3978 = vsel %vm3609, %v3587, %v3977
        %v3979 = vsel %vm3611, %v3588, %v3978
        %v3980 = vsel %vm3613, %v3589, %v3979
        %v3981 = vsel %vm3615, %v3754, %v3980
        %v3982 = vsel %vm3617, %v3591, %v3590
        %v3983 = vsel %vm3605, %v3592, %v3982
        %v3984 = vsel %vm3607, %v3593, %v3983
        %v3985 = vsel %vm3609, %v3594, %v3984
        %v3986 = vsel %vm3611, %v3595, %v3985
        %v3987 = vsel %vm3613, %v3596, %v3986
        %v3988 = vsel %vm3615, %v3597, %v3987
        %v3989 = vsel %vm3617, %v3599, %v3598
        %v3990 = vsel %vm3605, %v3600, %v3989
        %v3991 = vsel %vm3607, %v3601, %v3990
        %v3992 = vsel %vm3609, %v3602, %v3991
        %v3993 = vsel %vm3611, %v3603, %v3992
        %v3994 = vsel %vm3613, %v3604, %v3993
        %v3995 = vsel %vm3615, %v3755, %v3994
        %v3996 = vpack.c.b16 %v3897, %v3890
        %v3997 = vpack.c.b16 %v3911, %v3904
        %v3998 = vpack.c.b16 %v3925, %v3918
        %v3999 = vpack.c.b16 %v3939, %v3932
        %v4000 = vpack.c.b16 %v3953, %v3946
        %v4001 = vpack.c.b16 %v3967, %v3960
        %v4002 = vpack.c.b16 %v3981, %v3974
        %v4003 = vpack.c.b16 %v3995, %v3988
        %4004 = vrot.lane.b32.xlu0 %v3996, 64
        %v4005 = vpop.permute.xlu0 %4004
        %4006 = vrot.lane.b32.xlu0 %v3997, 64
        %v4007 = vpop.permute.xlu0 %4006
        %4008 = vrot.lane.b32.xlu0 %v3998, 64
        %v4009 = vpop.permute.xlu0 %4008
        %4010 = vrot.lane.b32.xlu0 %v3999, 64
        %v4011 = vpop.permute.xlu0 %4010
        %4012 = vrot.lane.b32.xlu0 %v4000, 64
        %v4013 = vpop.permute.xlu0 %4012
        %4014 = vrot.lane.b32.xlu0 %v4001, 64
        %v4015 = vpop.permute.xlu0 %4014
        %4016 = vrot.lane.b32.xlu0 %v4002, 64
        %v4017 = vpop.permute.xlu0 %4016
        %4018 = vrot.lane.b32.xlu0 %v4003, 64
        %v4019 = vpop.permute.xlu0 %4018
        %vm4020 = vcmask 523264
        %v4023 = vsel %vm4020, %v3732, %v4005
        %v4027 = vsel %vm4020, %v3733, %v4007
        %v4031 = vsel %vm4020, %v3734, %v4009
        %v4035 = vsel %vm4020, %v3735, %v4011
        %v4039 = vsel %vm4020, %v3736, %v4013
        %v4043 = vsel %vm4020, %v3737, %v4015
        %v4047 = vsel %vm4020, %v3738, %v4017
        %v4051 = vsel %vm4020, %v3739, %v4019
        %v4054 = vlaneseq
        %v4055 = vshrl.u32 %v4054, 7
        %v4056 = vsub.s32 0, %v4055
        %v4057 = vrot.slane %v3236, %v4056
        %v4083 = vunpack.c.l.b16 %v3212
        %v4084 = vunpack.c.l.b16 %v3213
        %v4085 = vunpack.c.l.b16 %v3214
        %v4086 = vunpack.c.l.b16 %v3215
        %v4087 = vunpack.c.l.b16 %v3216
        %v4088 = vunpack.c.l.b16 %v3217
        %v4089 = vunpack.c.l.b16 %v3218
        %v4090 = vunpack.c.l.b16 %v3219
        %v4091 = vunpack.c.l.b16 %v3220
        %v4092 = vunpack.c.l.b16 %v3221
        %v4093 = vunpack.c.l.b16 %v3222
        %v4094 = vunpack.c.l.b16 %v3223
        %v4095 = vunpack.c.l.b16 %v3224
        %v4096 = vunpack.c.l.b16 %v3225
        %v4097 = vunpack.c.l.b16 %v3226
        %v4098 = vunpack.c.l.b16 %v3227
        %v4099 = vunpack.c.l.b16 %v3228
        %v4100 = vunpack.c.l.b16 %v3229
        %v4101 = vunpack.c.l.b16 %v3230
        %v4102 = vunpack.c.l.b16 %v3231
        %v4103 = vunpack.c.l.b16 %v3232
        %v4104 = vunpack.c.l.b16 %v3233
        %v4105 = vunpack.c.l.b16 %v3234
        %v4106 = vunpack.c.l.b16 %v3235
        %v4107 = vpack.c.b16 %v4084, %v4083
        %v4108 = vpack.c.b16 %v4086, %v4085
        %v4109 = vpack.c.b16 %v4088, %v4087
        %v4110 = vpack.c.b16 %v4090, %v4089
        %v4111 = vpack.c.b16 %v4092, %v4091
        %v4112 = vpack.c.b16 %v4094, %v4093
        %v4113 = vpack.c.b16 %v4096, %v4095
        %v4114 = vpack.c.b16 %v4098, %v4097
        %v4115 = vpack.c.b16 %v4100, %v4099
        %v4116 = vpack.c.b16 %v4102, %v4101
        %v4117 = vpack.c.b16 %v4104, %v4103
        %v4118 = vpack.c.b16 %v4106, %v4105
        %v4132 = vsel %vm4020, %v3876, 0
        %v4135 = vsel %vm4020, %v3877, 0
        %v4138 = vsel %vm4020, %v3878, 0
        %v4141 = vsel %vm4020, %v3879, 0
        %v4144 = vsel %vm4020, %v3880, 0
        %v4147 = vsel %vm4020, %v3881, 0
        %v4150 = vsel %vm4020, %v3882, 0
        %v4153 = vsel %vm4020, %v3883, 0
        %4155 = vmatprep.subr.bf16.mxu0 0
        %4156 = vmatpush1.bf16.msra.mxu0 %v4107
        %4157 = vmatprep.subr.bf16.mxu0 0
        %4158 = vmatpush1.bf16.msra.mxu0 %v4108
        %4159 = vmatprep.subr.bf16.mxu0 0
        %4160 = vmatpush1.bf16.msra.mxu0 %v4109
        %4161 = vmatprep.subr.bf16.mxu0 0
        %4162 = vmatpush1.bf16.msra.mxu0 %v4110
        %4163 = vmatprep.subr.bf16.mxu0 0
        %4164 = vmatpush1.bf16.msra.mxu0 %v4111
        %4165 = vmatprep.subr.bf16.mxu0 0
        %4166 = vmatpush1.bf16.msra.mxu0 %v4112
        %4167 = vmatprep.subr.bf16.mxu0 0
        %4168 = vmatpush1.bf16.msra.mxu0 %v4113
        %4169 = vmatprep.subr.bf16.mxu0 0
        %4170 = vmatpush1.bf16.msra.mxu0 %v4114
        %4171 = vmatprep.subr.bf16.mxu0 0
        %4172 = vmatpush1.bf16.msra.mxu0 %v4115
        %4173 = vmatprep.subr.bf16.mxu0 0
        %4174 = vmatpush1.bf16.msra.mxu0 %v4116
        %4175 = vmatprep.subr.bf16.mxu0 0
        %4176 = vmatpush1.bf16.msra.mxu0 %v4117
        %4177 = vmatprep.subr.bf16.mxu0 0
        %4178 = vmatpush1.bf16.msra.mxu0 %v4118
        %4179 = vmatprep.subr.bf16.mxu0 0
        %4180 = vmatpush1.bf16.msra.mxu0 0
        %4181 = vmatprep.subr.bf16.mxu0 0
        %4182 = vmatpush1.bf16.msra.mxu0 0
        %4183 = vmatprep.subr.bf16.mxu0 0
        %4184 = vmatpush1.bf16.msra.mxu0 0
        %4185 = vmatprep.subr.bf16.mxu0 0
        %4186 = vmatpush1.bf16.msra.mxu0 0
        %4187 = vmatprep.mubr.bf16.mxu0 %v4132
        %4188 = vmatmul.mubr.bf16.gmra.mrb[0].mxu0 %v4023
        %v4189 = vpop.f32.mrb[0].mxu0
        %v4190 = vadd.f32 %v4057, %v4189
        %v4191 = vpop.f32.mrb[0].mxu0
        %v4192 = vpop.f32.mrb[0].mxu0
        %v4193 = vadd.f32 %v4057, %v4192
        %v4194 = vpop.f32.mrb[0].mxu0
        %4195 = vmatprep.mubr.bf16.mxu0 %v4135
        %4196 = vmatmul.mubr.bf16.gmra.mrb[0].mxu0 %v4027
        %v4197 = vpop.f32.mrb[0].mxu0
        %v4198 = vadd.f32 %v4057, %v4197
        %v4199 = vpop.f32.mrb[0].mxu0
        %v4200 = vpop.f32.mrb[0].mxu0
        %v4201 = vadd.f32 %v4057, %v4200
        %v4202 = vpop.f32.mrb[0].mxu0
        %4203 = vmatprep.mubr.bf16.mxu0 %v4138
        %4204 = vmatmul.mubr.bf16.gmra.mrb[0].mxu0 %v4031
        %v4205 = vpop.f32.mrb[0].mxu0
        %v4206 = vadd.f32 %v4057, %v4205
        %v4207 = vpop.f32.mrb[0].mxu0
        %v4208 = vpop.f32.mrb[0].mxu0
        %v4209 = vadd.f32 %v4057, %v4208
        %v4210 = vpop.f32.mrb[0].mxu0
        %4211 = vmatprep.mubr.bf16.mxu0 %v4141
        %4212 = vmatmul.mubr.bf16.gmra.mrb[0].mxu0 %v4035
        %v4213 = vpop.f32.mrb[0].mxu0
        %v4214 = vadd.f32 %v4057, %v4213
        %v4215 = vpop.f32.mrb[0].mxu0
        %v4216 = vpop.f32.mrb[0].mxu0
        %v4217 = vadd.f32 %v4057, %v4216
        %v4218 = vpop.f32.mrb[0].mxu0
        %4219 = vmatprep.mubr.bf16.mxu0 %v4144
        %4220 = vmatmul.mubr.bf16.gmra.mrb[0].mxu0 %v4039
        %v4221 = vpop.f32.mrb[0].mxu0
        %v4222 = vadd.f32 %v4057, %v4221
        %v4223 = vpop.f32.mrb[0].mxu0
        %v4224 = vpop.f32.mrb[0].mxu0
        %v4225 = vadd.f32 %v4057, %v4224
        %v4226 = vpop.f32.mrb[0].mxu0
        %4227 = vmatprep.mubr.bf16.mxu0 %v4147
        %4228 = vmatmul.mubr.bf16.gmra.mrb[0].mxu0 %v4043
        %v4229 = vpop.f32.mrb[0].mxu0
        %v4230 = vadd.f32 %v4057, %v4229
        %v4231 = vpop.f32.mrb[0].mxu0
        %v4232 = vpop.f32.mrb[0].mxu0
        %v4233 = vadd.f32 %v4057, %v4232
        %v4234 = vpop.f32.mrb[0].mxu0
        %4235 = vmatprep.mubr.bf16.mxu0 %v4150
        %4236 = vmatmul.mubr.bf16.gmra.mrb[0].mxu0 %v4047
        %v4237 = vpop.f32.mrb[0].mxu0
        %v4238 = vadd.f32 %v4057, %v4237
        %v4239 = vpop.f32.mrb[0].mxu0
        %v4240 = vpop.f32.mrb[0].mxu0
        %v4241 = vadd.f32 %v4057, %v4240
        %v4242 = vpop.f32.mrb[0].mxu0
        %4243 = vmatprep.mubr.bf16.mxu0 %v4153
        %4244 = vmatmul.mubr.bf16.gmra.mrb[0].mxu0 %v4051
        %v4245 = vpop.f32.mrb[0].mxu0
        %v4246 = vadd.f32 %v4057, %v4245
        %v4247 = vpop.f32.mrb[0].mxu0
        %v4248 = vpop.f32.mrb[0].mxu0
        %v4249 = vadd.f32 %v4057, %v4248
        %v4250 = vpop.f32.mrb[0].mxu0
        %4251 = vdwg.mxu0
        %v4252 = vmax.f32 %v4190, 0.0
        %v4253 = vmax.f32 %v4193, 0.0
        %v4254 = vmax.f32 %v4198, 0.0
        %v4255 = vmax.f32 %v4201, 0.0
        %v4256 = vmax.f32 %v4206, 0.0
        %v4257 = vmax.f32 %v4209, 0.0
        %v4258 = vmax.f32 %v4214, 0.0
        %v4259 = vmax.f32 %v4217, 0.0
        %v4260 = vmax.f32 %v4222, 0.0
        %v4261 = vmax.f32 %v4225, 0.0
        %v4262 = vmax.f32 %v4230, 0.0
        %v4263 = vmax.f32 %v4233, 0.0
        %v4264 = vmax.f32 %v4238, 0.0
        %v4265 = vmax.f32 %v4241, 0.0
        %v4266 = vmax.f32 %v4246, 0.0
        %v4267 = vmax.f32 %v4249, 0.0
        %v4284 = vcombine.high %v4252, %v4252
        %v4286 = vunpack.c.l.s4 1983009808
        %v4287 = vunpack.c.0.s8 %v4286
        %v4288 = vlaneseq
        %v4289 = vshrl.u32 %v4288, 7
        %v4290 = vsub.s32 %v4287, %v4289
        %v4291 = vrot.slane %v4252, %v4290
        %v4293 = vunpack.c.l.s4 1983009808
        %v4294 = vunpack.c.0.s8 %v4293
        %v4295 = vlaneseq
        %v4296 = vshrl.u32 %v4295, 7
        %v4297 = vsub.s32 %v4294, %v4296
        %v4298 = vrot.slane %v4284, %v4297
        %v4299 = vcombine.high %v4291, %v4291
        %v4300 = vcombine.high %v4298, %v4298
        %v4301 = vcombine.high %v4253, %v4253
        %v4303 = vunpack.c.l.s4 1983009808
        %v4304 = vunpack.c.0.s8 %v4303
        %v4305 = vlaneseq
        %v4306 = vshrl.u32 %v4305, 7
        %v4307 = vsub.s32 %v4304, %v4306
        %v4308 = vrot.slane %v4253, %v4307
        %v4310 = vunpack.c.l.s4 1983009808
        %v4311 = vunpack.c.0.s8 %v4310
        %v4312 = vlaneseq
        %v4313 = vshrl.u32 %v4312, 7
        %v4314 = vsub.s32 %v4311, %v4313
        %v4315 = vrot.slane %v4301, %v4314
        %v4316 = vcombine.high %v4308, %v4308
        %v4317 = vcombine.high %v4315, %v4315
        %v4318 = vcombine.high %v4254, %v4254
        %v4320 = vunpack.c.l.s4 1983009808
        %v4321 = vunpack.c.0.s8 %v4320
        %v4322 = vlaneseq
        %v4323 = vshrl.u32 %v4322, 7
        %v4324 = vsub.s32 %v4321, %v4323
        %v4325 = vrot.slane %v4254, %v4324
        %v4327 = vunpack.c.l.s4 1983009808
        %v4328 = vunpack.c.0.s8 %v4327
        %v4329 = vlaneseq
        %v4330 = vshrl.u32 %v4329, 7
        %v4331 = vsub.s32 %v4328, %v4330
        %v4332 = vrot.slane %v4318, %v4331
        %v4333 = vcombine.high %v4325, %v4325
        %v4334 = vcombine.high %v4332, %v4332
        %v4335 = vcombine.high %v4255, %v4255
        %v4337 = vunpack.c.l.s4 1983009808
        %v4338 = vunpack.c.0.s8 %v4337
        %v4339 = vlaneseq
        %v4340 = vshrl.u32 %v4339, 7
        %v4341 = vsub.s32 %v4338, %v4340
        %v4342 = vrot.slane %v4255, %v4341
        %v4344 = vunpack.c.l.s4 1983009808
        %v4345 = vunpack.c.0.s8 %v4344
        %v4346 = vlaneseq
        %v4347 = vshrl.u32 %v4346, 7
        %v4348 = vsub.s32 %v4345, %v4347
        %v4349 = vrot.slane %v4335, %v4348
        %v4350 = vcombine.high %v4342, %v4342
        %v4351 = vcombine.high %v4349, %v4349
        %v4352 = vcombine.high %v4256, %v4256
        %v4354 = vunpack.c.l.s4 1983009808
        %v4355 = vunpack.c.0.s8 %v4354
        %v4356 = vlaneseq
        %v4357 = vshrl.u32 %v4356, 7
        %v4358 = vsub.s32 %v4355, %v4357
        %v4359 = vrot.slane %v4256, %v4358
        %v4361 = vunpack.c.l.s4 1983009808
        %v4362 = vunpack.c.0.s8 %v4361
        %v4363 = vlaneseq
        %v4364 = vshrl.u32 %v4363, 7
        %v4365 = vsub.s32 %v4362, %v4364
        %v4366 = vrot.slane %v4352, %v4365
        %v4367 = vcombine.high %v4359, %v4359
        %v4368 = vcombine.high %v4366, %v4366
        %v4369 = vcombine.high %v4257, %v4257
        %v4371 = vunpack.c.l.s4 1983009808
        %v4372 = vunpack.c.0.s8 %v4371
        %v4373 = vlaneseq
        %v4374 = vshrl.u32 %v4373, 7
        %v4375 = vsub.s32 %v4372, %v4374
        %v4376 = vrot.slane %v4257, %v4375
        %v4378 = vunpack.c.l.s4 1983009808
        %v4379 = vunpack.c.0.s8 %v4378
        %v4380 = vlaneseq
        %v4381 = vshrl.u32 %v4380, 7
        %v4382 = vsub.s32 %v4379, %v4381
        %v4383 = vrot.slane %v4369, %v4382
        %v4384 = vcombine.high %v4376, %v4376
        %v4385 = vcombine.high %v4383, %v4383
        %v4386 = vcombine.high %v4258, %v4258
        %v4388 = vunpack.c.l.s4 1983009808
        %v4389 = vunpack.c.0.s8 %v4388
        %v4390 = vlaneseq
        %v4391 = vshrl.u32 %v4390, 7
        %v4392 = vsub.s32 %v4389, %v4391
        %v4393 = vrot.slane %v4258, %v4392
        %v4395 = vunpack.c.l.s4 1983009808
        %v4396 = vunpack.c.0.s8 %v4395
        %v4397 = vlaneseq
        %v4398 = vshrl.u32 %v4397, 7
        %v4399 = vsub.s32 %v4396, %v4398
        %v4400 = vrot.slane %v4386, %v4399
        %v4401 = vcombine.high %v4393, %v4393
        %v4402 = vcombine.high %v4400, %v4400
        %v4403 = vcombine.high %v4259, %v4259
        %v4405 = vunpack.c.l.s4 1983009808
        %v4406 = vunpack.c.0.s8 %v4405
        %v4407 = vlaneseq
        %v4408 = vshrl.u32 %v4407, 7
        %v4409 = vsub.s32 %v4406, %v4408
        %v4410 = vrot.slane %v4259, %v4409
        %v4412 = vunpack.c.l.s4 1983009808
        %v4413 = vunpack.c.0.s8 %v4412
        %v4414 = vlaneseq
        %v4415 = vshrl.u32 %v4414, 7
        %v4416 = vsub.s32 %v4413, %v4415
        %v4417 = vrot.slane %v4403, %v4416
        %v4418 = vcombine.high %v4410, %v4410
        %v4419 = vcombine.high %v4417, %v4417
        %v4420 = vcombine.high %v4260, %v4260
        %v4422 = vunpack.c.l.s4 1983009808
        %v4423 = vunpack.c.0.s8 %v4422
        %v4424 = vlaneseq
        %v4425 = vshrl.u32 %v4424, 7
        %v4426 = vsub.s32 %v4423, %v4425
        %v4427 = vrot.slane %v4260, %v4426
        %v4429 = vunpack.c.l.s4 1983009808
        %v4430 = vunpack.c.0.s8 %v4429
        %v4431 = vlaneseq
        %v4432 = vshrl.u32 %v4431, 7
        %v4433 = vsub.s32 %v4430, %v4432
        %v4434 = vrot.slane %v4420, %v4433
        %v4435 = vcombine.high %v4427, %v4427
        %v4436 = vcombine.high %v4434, %v4434
        %v4437 = vcombine.high %v4261, %v4261
        %v4439 = vunpack.c.l.s4 1983009808
        %v4440 = vunpack.c.0.s8 %v4439
        %v4441 = vlaneseq
        %v4442 = vshrl.u32 %v4441, 7
        %v4443 = vsub.s32 %v4440, %v4442
        %v4444 = vrot.slane %v4261, %v4443
        %v4446 = vunpack.c.l.s4 1983009808
        %v4447 = vunpack.c.0.s8 %v4446
        %v4448 = vlaneseq
        %v4449 = vshrl.u32 %v4448, 7
        %v4450 = vsub.s32 %v4447, %v4449
        %v4451 = vrot.slane %v4437, %v4450
        %v4452 = vcombine.high %v4444, %v4444
        %v4453 = vcombine.high %v4451, %v4451
        %v4454 = vcombine.high %v4262, %v4262
        %v4456 = vunpack.c.l.s4 1983009808
        %v4457 = vunpack.c.0.s8 %v4456
        %v4458 = vlaneseq
        %v4459 = vshrl.u32 %v4458, 7
        %v4460 = vsub.s32 %v4457, %v4459
        %v4461 = vrot.slane %v4262, %v4460
        %v4463 = vunpack.c.l.s4 1983009808
        %v4464 = vunpack.c.0.s8 %v4463
        %v4465 = vlaneseq
        %v4466 = vshrl.u32 %v4465, 7
        %v4467 = vsub.s32 %v4464, %v4466
        %v4468 = vrot.slane %v4454, %v4467
        %v4469 = vcombine.high %v4461, %v4461
        %v4470 = vcombine.high %v4468, %v4468
        %v4471 = vcombine.high %v4263, %v4263
        %v4473 = vunpack.c.l.s4 1983009808
        %v4474 = vunpack.c.0.s8 %v4473
        %v4475 = vlaneseq
        %v4476 = vshrl.u32 %v4475, 7
        %v4477 = vsub.s32 %v4474, %v4476
        %v4478 = vrot.slane %v4263, %v4477
        %v4480 = vunpack.c.l.s4 1983009808
        %v4481 = vunpack.c.0.s8 %v4480
        %v4482 = vlaneseq
        %v4483 = vshrl.u32 %v4482, 7
        %v4484 = vsub.s32 %v4481, %v4483
        %v4485 = vrot.slane %v4471, %v4484
        %v4486 = vcombine.high %v4478, %v4478
        %v4487 = vcombine.high %v4485, %v4485
        %v4488 = vcombine.high %v4264, %v4264
        %v4490 = vunpack.c.l.s4 1983009808
        %v4491 = vunpack.c.0.s8 %v4490
        %v4492 = vlaneseq
        %v4493 = vshrl.u32 %v4492, 7
        %v4494 = vsub.s32 %v4491, %v4493
        %v4495 = vrot.slane %v4264, %v4494
        %v4497 = vunpack.c.l.s4 1983009808
        %v4498 = vunpack.c.0.s8 %v4497
        %v4499 = vlaneseq
        %v4500 = vshrl.u32 %v4499, 7
        %v4501 = vsub.s32 %v4498, %v4500
        %v4502 = vrot.slane %v4488, %v4501
        %v4503 = vcombine.high %v4495, %v4495
        %v4504 = vcombine.high %v4502, %v4502
        %v4505 = vcombine.high %v4265, %v4265
        %v4507 = vunpack.c.l.s4 1983009808
        %v4508 = vunpack.c.0.s8 %v4507
        %v4509 = vlaneseq
        %v4510 = vshrl.u32 %v4509, 7
        %v4511 = vsub.s32 %v4508, %v4510
        %v4512 = vrot.slane %v4265, %v4511
        %v4514 = vunpack.c.l.s4 1983009808
        %v4515 = vunpack.c.0.s8 %v4514
        %v4516 = vlaneseq
        %v4517 = vshrl.u32 %v4516, 7
        %v4518 = vsub.s32 %v4515, %v4517
        %v4519 = vrot.slane %v4505, %v4518
        %v4520 = vcombine.high %v4512, %v4512
        %v4521 = vcombine.high %v4519, %v4519
        %v4522 = vcombine.high %v4266, %v4266
        %v4524 = vunpack.c.l.s4 1983009808
        %v4525 = vunpack.c.0.s8 %v4524
        %v4526 = vlaneseq
        %v4527 = vshrl.u32 %v4526, 7
        %v4528 = vsub.s32 %v4525, %v4527
        %v4529 = vrot.slane %v4266, %v4528
        %v4531 = vunpack.c.l.s4 1983009808
        %v4532 = vunpack.c.0.s8 %v4531
        %v4533 = vlaneseq
        %v4534 = vshrl.u32 %v4533, 7
        %v4535 = vsub.s32 %v4532, %v4534
        %v4536 = vrot.slane %v4522, %v4535
        %v4537 = vcombine.high %v4529, %v4529
        %v4538 = vcombine.high %v4536, %v4536
        %v4539 = vcombine.high %v4267, %v4267
        %v4541 = vunpack.c.l.s4 1983009808
        %v4542 = vunpack.c.0.s8 %v4541
        %v4543 = vlaneseq
        %v4544 = vshrl.u32 %v4543, 7
        %v4545 = vsub.s32 %v4542, %v4544
        %v4546 = vrot.slane %v4267, %v4545
        %v4548 = vunpack.c.l.s4 1983009808
        %v4549 = vunpack.c.0.s8 %v4548
        %v4550 = vlaneseq
        %v4551 = vshrl.u32 %v4550, 7
        %v4552 = vsub.s32 %v4549, %v4551
        %v4553 = vrot.slane %v4539, %v4552
        %v4554 = vcombine.high %v4546, %v4546
        %v4555 = vcombine.high %v4553, %v4553
        %vm4620 = vcmask 1041408
        %v4621 = vsel %vm4620, %v4291, -inf
        %v4622 = vrot.slane %v4621, 4
        %v4623 = vmax.f32 %v4621, %v4622
        %v4624 = vrot.slane %v4623, 2
        %v4625 = vmax.f32 %v4623, %v4624
        %v4626 = vrot.slane %v4625, 1
        %v4627 = vmax.f32 %v4625, %v4626
        %v4628 = vsel %vm4620, %v4299, -inf
        %v4629 = vrot.slane %v4628, 4
        %v4630 = vmax.f32 %v4628, %v4629
        %v4631 = vrot.slane %v4630, 2
        %v4632 = vmax.f32 %v4630, %v4631
        %v4633 = vrot.slane %v4632, 1
        %v4634 = vmax.f32 %v4632, %v4633
        %v4635 = vsel %vm4620, %v4298, -inf
        %v4636 = vrot.slane %v4635, 4
        %v4637 = vmax.f32 %v4635, %v4636
        %v4638 = vrot.slane %v4637, 2
        %v4639 = vmax.f32 %v4637, %v4638
        %v4640 = vrot.slane %v4639, 1
        %v4641 = vmax.f32 %v4639, %v4640
        %v4642 = vsel %vm4620, %v4300, -inf
        %v4643 = vrot.slane %v4642, 4
        %v4644 = vmax.f32 %v4642, %v4643
        %v4645 = vrot.slane %v4644, 2
        %v4646 = vmax.f32 %v4644, %v4645
        %v4647 = vrot.slane %v4646, 1
        %v4648 = vmax.f32 %v4646, %v4647
        %v4649 = vsel %vm4620, %v4308, -inf
        %v4650 = vrot.slane %v4649, 4
        %v4651 = vmax.f32 %v4649, %v4650
        %v4652 = vrot.slane %v4651, 2
        %v4653 = vmax.f32 %v4651, %v4652
        %v4654 = vrot.slane %v4653, 1
        %v4655 = vmax.f32 %v4653, %v4654
        %v4656 = vsel %vm4620, %v4316, -inf
        %v4657 = vrot.slane %v4656, 4
        %v4658 = vmax.f32 %v4656, %v4657
        %v4659 = vrot.slane %v4658, 2
        %v4660 = vmax.f32 %v4658, %v4659
        %v4661 = vrot.slane %v4660, 1
        %v4662 = vmax.f32 %v4660, %v4661
        %v4663 = vsel %vm4620, %v4315, -inf
        %v4664 = vrot.slane %v4663, 4
        %v4665 = vmax.f32 %v4663, %v4664
        %v4666 = vrot.slane %v4665, 2
        %v4667 = vmax.f32 %v4665, %v4666
        %v4668 = vrot.slane %v4667, 1
        %v4669 = vmax.f32 %v4667, %v4668
        %v4670 = vsel %vm4620, %v4317, -inf
        %v4671 = vrot.slane %v4670, 4
        %v4672 = vmax.f32 %v4670, %v4671
        %v4673 = vrot.slane %v4672, 2
        %v4674 = vmax.f32 %v4672, %v4673
        %v4675 = vrot.slane %v4674, 1
        %v4676 = vmax.f32 %v4674, %v4675
        %v4677 = vsel %vm4620, %v4325, -inf
        %v4678 = vrot.slane %v4677, 4
        %v4679 = vmax.f32 %v4677, %v4678
        %v4680 = vrot.slane %v4679, 2
        %v4681 = vmax.f32 %v4679, %v4680
        %v4682 = vrot.slane %v4681, 1
        %v4683 = vmax.f32 %v4681, %v4682
        %v4684 = vsel %vm4620, %v4333, -inf
        %v4685 = vrot.slane %v4684, 4
        %v4686 = vmax.f32 %v4684, %v4685
        %v4687 = vrot.slane %v4686, 2
        %v4688 = vmax.f32 %v4686, %v4687
        %v4689 = vrot.slane %v4688, 1
        %v4690 = vmax.f32 %v4688, %v4689
        %v4691 = vsel %vm4620, %v4332, -inf
        %v4692 = vrot.slane %v4691, 4
        %v4693 = vmax.f32 %v4691, %v4692
        %v4694 = vrot.slane %v4693, 2
        %v4695 = vmax.f32 %v4693, %v4694
        %v4696 = vrot.slane %v4695, 1
        %v4697 = vmax.f32 %v4695, %v4696
        %v4698 = vsel %vm4620, %v4334, -inf
        %v4699 = vrot.slane %v4698, 4
        %v4700 = vmax.f32 %v4698, %v4699
        %v4701 = vrot.slane %v4700, 2
        %v4702 = vmax.f32 %v4700, %v4701
        %v4703 = vrot.slane %v4702, 1
        %v4704 = vmax.f32 %v4702, %v4703
        %v4705 = vsel %vm4620, %v4342, -inf
        %v4706 = vrot.slane %v4705, 4
        %v4707 = vmax.f32 %v4705, %v4706
        %v4708 = vrot.slane %v4707, 2
        %v4709 = vmax.f32 %v4707, %v4708
        %v4710 = vrot.slane %v4709, 1
        %v4711 = vmax.f32 %v4709, %v4710
        %v4712 = vsel %vm4620, %v4350, -inf
        %v4713 = vrot.slane %v4712, 4
        %v4714 = vmax.f32 %v4712, %v4713
        %v4715 = vrot.slane %v4714, 2
        %v4716 = vmax.f32 %v4714, %v4715
        %v4717 = vrot.slane %v4716, 1
        %v4718 = vmax.f32 %v4716, %v4717
        %v4719 = vsel %vm4620, %v4349, -inf
        %v4720 = vrot.slane %v4719, 4
        %v4721 = vmax.f32 %v4719, %v4720
        %v4722 = vrot.slane %v4721, 2
        %v4723 = vmax.f32 %v4721, %v4722
        %v4724 = vrot.slane %v4723, 1
        %v4725 = vmax.f32 %v4723, %v4724
        %v4726 = vsel %vm4620, %v4351, -inf
        %v4727 = vrot.slane %v4726, 4
        %v4728 = vmax.f32 %v4726, %v4727
        %v4729 = vrot.slane %v4728, 2
        %v4730 = vmax.f32 %v4728, %v4729
        %v4731 = vrot.slane %v4730, 1
        %v4732 = vmax.f32 %v4730, %v4731
        %v4733 = vsel %vm4620, %v4359, -inf
        %v4734 = vrot.slane %v4733, 4
        %v4735 = vmax.f32 %v4733, %v4734
        %v4736 = vrot.slane %v4735, 2
        %v4737 = vmax.f32 %v4735, %v4736
        %v4738 = vrot.slane %v4737, 1
        %v4739 = vmax.f32 %v4737, %v4738
        %v4740 = vsel %vm4620, %v4367, -inf
        %v4741 = vrot.slane %v4740, 4
        %v4742 = vmax.f32 %v4740, %v4741
        %v4743 = vrot.slane %v4742, 2
        %v4744 = vmax.f32 %v4742, %v4743
        %v4745 = vrot.slane %v4744, 1
        %v4746 = vmax.f32 %v4744, %v4745
        %v4747 = vsel %vm4620, %v4366, -inf
        %v4748 = vrot.slane %v4747, 4
        %v4749 = vmax.f32 %v4747, %v4748
        %v4750 = vrot.slane %v4749, 2
        %v4751 = vmax.f32 %v4749, %v4750
        %v4752 = vrot.slane %v4751, 1
        %v4753 = vmax.f32 %v4751, %v4752
        %v4754 = vsel %vm4620, %v4368, -inf
        %v4755 = vrot.slane %v4754, 4
        %v4756 = vmax.f32 %v4754, %v4755
        %v4757 = vrot.slane %v4756, 2
        %v4758 = vmax.f32 %v4756, %v4757
        %v4759 = vrot.slane %v4758, 1
        %v4760 = vmax.f32 %v4758, %v4759
        %v4761 = vsel %vm4620, %v4376, -inf
        %v4762 = vrot.slane %v4761, 4
        %v4763 = vmax.f32 %v4761, %v4762
        %v4764 = vrot.slane %v4763, 2
        %v4765 = vmax.f32 %v4763, %v4764
        %v4766 = vrot.slane %v4765, 1
        %v4767 = vmax.f32 %v4765, %v4766
        %v4768 = vsel %vm4620, %v4384, -inf
        %v4769 = vrot.slane %v4768, 4
        %v4770 = vmax.f32 %v4768, %v4769
        %v4771 = vrot.slane %v4770, 2
        %v4772 = vmax.f32 %v4770, %v4771
        %v4773 = vrot.slane %v4772, 1
        %v4774 = vmax.f32 %v4772, %v4773
        %v4775 = vsel %vm4620, %v4383, -inf
        %v4776 = vrot.slane %v4775, 4
        %v4777 = vmax.f32 %v4775, %v4776
        %v4778 = vrot.slane %v4777, 2
        %v4779 = vmax.f32 %v4777, %v4778
        %v4780 = vrot.slane %v4779, 1
        %v4781 = vmax.f32 %v4779, %v4780
        %v4782 = vsel %vm4620, %v4385, -inf
        %v4783 = vrot.slane %v4782, 4
        %v4784 = vmax.f32 %v4782, %v4783
        %v4785 = vrot.slane %v4784, 2
        %v4786 = vmax.f32 %v4784, %v4785
        %v4787 = vrot.slane %v4786, 1
        %v4788 = vmax.f32 %v4786, %v4787
        %v4789 = vsel %vm4620, %v4393, -inf
        %v4790 = vrot.slane %v4789, 4
        %v4791 = vmax.f32 %v4789, %v4790
        %v4792 = vrot.slane %v4791, 2
        %v4793 = vmax.f32 %v4791, %v4792
        %v4794 = vrot.slane %v4793, 1
        %v4795 = vmax.f32 %v4793, %v4794
        %v4796 = vsel %vm4620, %v4401, -inf
        %v4797 = vrot.slane %v4796, 4
        %v4798 = vmax.f32 %v4796, %v4797
        %v4799 = vrot.slane %v4798, 2
        %v4800 = vmax.f32 %v4798, %v4799
        %v4801 = vrot.slane %v4800, 1
        %v4802 = vmax.f32 %v4800, %v4801
        %v4803 = vsel %vm4620, %v4400, -inf
        %v4804 = vrot.slane %v4803, 4
        %v4805 = vmax.f32 %v4803, %v4804
        %v4806 = vrot.slane %v4805, 2
        %v4807 = vmax.f32 %v4805, %v4806
        %v4808 = vrot.slane %v4807, 1
        %v4809 = vmax.f32 %v4807, %v4808
        %v4810 = vsel %vm4620, %v4402, -inf
        %v4811 = vrot.slane %v4810, 4
        %v4812 = vmax.f32 %v4810, %v4811
        %v4813 = vrot.slane %v4812, 2
        %v4814 = vmax.f32 %v4812, %v4813
        %v4815 = vrot.slane %v4814, 1
        %v4816 = vmax.f32 %v4814, %v4815
        %v4817 = vsel %vm4620, %v4410, -inf
        %v4818 = vrot.slane %v4817, 4
        %v4819 = vmax.f32 %v4817, %v4818
        %v4820 = vrot.slane %v4819, 2
        %v4821 = vmax.f32 %v4819, %v4820
        %v4822 = vrot.slane %v4821, 1
        %v4823 = vmax.f32 %v4821, %v4822
        %v4824 = vsel %vm4620, %v4418, -inf
        %v4825 = vrot.slane %v4824, 4
        %v4826 = vmax.f32 %v4824, %v4825
        %v4827 = vrot.slane %v4826, 2
        %v4828 = vmax.f32 %v4826, %v4827
        %v4829 = vrot.slane %v4828, 1
        %v4830 = vmax.f32 %v4828, %v4829
        %v4831 = vsel %vm4620, %v4417, -inf
        %v4832 = vrot.slane %v4831, 4
        %v4833 = vmax.f32 %v4831, %v4832
        %v4834 = vrot.slane %v4833, 2
        %v4835 = vmax.f32 %v4833, %v4834
        %v4836 = vrot.slane %v4835, 1
        %v4837 = vmax.f32 %v4835, %v4836
        %v4838 = vsel %vm4620, %v4419, -inf
        %v4839 = vrot.slane %v4838, 4
        %v4840 = vmax.f32 %v4838, %v4839
        %v4841 = vrot.slane %v4840, 2
        %v4842 = vmax.f32 %v4840, %v4841
        %v4843 = vrot.slane %v4842, 1
        %v4844 = vmax.f32 %v4842, %v4843
        %v4845 = vsel %vm4620, %v4427, -inf
        %v4846 = vrot.slane %v4845, 4
        %v4847 = vmax.f32 %v4845, %v4846
        %v4848 = vrot.slane %v4847, 2
        %v4849 = vmax.f32 %v4847, %v4848
        %v4850 = vrot.slane %v4849, 1
        %v4851 = vmax.f32 %v4849, %v4850
        %v4852 = vsel %vm4620, %v4435, -inf
        %v4853 = vrot.slane %v4852, 4
        %v4854 = vmax.f32 %v4852, %v4853
        %v4855 = vrot.slane %v4854, 2
        %v4856 = vmax.f32 %v4854, %v4855
        %v4857 = vrot.slane %v4856, 1
        %v4858 = vmax.f32 %v4856, %v4857
        %v4859 = vsel %vm4620, %v4434, -inf
        %v4860 = vrot.slane %v4859, 4
        %v4861 = vmax.f32 %v4859, %v4860
        %v4862 = vrot.slane %v4861, 2
        %v4863 = vmax.f32 %v4861, %v4862
        %v4864 = vrot.slane %v4863, 1
        %v4865 = vmax.f32 %v4863, %v4864
        %v4866 = vsel %vm4620, %v4436, -inf
        %v4867 = vrot.slane %v4866, 4
        %v4868 = vmax.f32 %v4866, %v4867
        %v4869 = vrot.slane %v4868, 2
        %v4870 = vmax.f32 %v4868, %v4869
        %v4871 = vrot.slane %v4870, 1
        %v4872 = vmax.f32 %v4870, %v4871
        %v4873 = vsel %vm4620, %v4444, -inf
        %v4874 = vrot.slane %v4873, 4
        %v4875 = vmax.f32 %v4873, %v4874
        %v4876 = vrot.slane %v4875, 2
        %v4877 = vmax.f32 %v4875, %v4876
        %v4878 = vrot.slane %v4877, 1
        %v4879 = vmax.f32 %v4877, %v4878
        %v4880 = vsel %vm4620, %v4452, -inf
        %v4881 = vrot.slane %v4880, 4
        %v4882 = vmax.f32 %v4880, %v4881
        %v4883 = vrot.slane %v4882, 2
        %v4884 = vmax.f32 %v4882, %v4883
        %v4885 = vrot.slane %v4884, 1
        %v4886 = vmax.f32 %v4884, %v4885
        %v4887 = vsel %vm4620, %v4451, -inf
        %v4888 = vrot.slane %v4887, 4
        %v4889 = vmax.f32 %v4887, %v4888
        %v4890 = vrot.slane %v4889, 2
        %v4891 = vmax.f32 %v4889, %v4890
        %v4892 = vrot.slane %v4891, 1
        %v4893 = vmax.f32 %v4891, %v4892
        %v4894 = vsel %vm4620, %v4453, -inf
        %v4895 = vrot.slane %v4894, 4
        %v4896 = vmax.f32 %v4894, %v4895
        %v4897 = vrot.slane %v4896, 2
        %v4898 = vmax.f32 %v4896, %v4897
        %v4899 = vrot.slane %v4898, 1
        %v4900 = vmax.f32 %v4898, %v4899
        %v4901 = vsel %vm4620, %v4461, -inf
        %v4902 = vrot.slane %v4901, 4
        %v4903 = vmax.f32 %v4901, %v4902
        %v4904 = vrot.slane %v4903, 2
        %v4905 = vmax.f32 %v4903, %v4904
        %v4906 = vrot.slane %v4905, 1
        %v4907 = vmax.f32 %v4905, %v4906
        %v4908 = vsel %vm4620, %v4469, -inf
        %v4909 = vrot.slane %v4908, 4
        %v4910 = vmax.f32 %v4908, %v4909
        %v4911 = vrot.slane %v4910, 2
        %v4912 = vmax.f32 %v4910, %v4911
        %v4913 = vrot.slane %v4912, 1
        %v4914 = vmax.f32 %v4912, %v4913
        %v4915 = vsel %vm4620, %v4468, -inf
        %v4916 = vrot.slane %v4915, 4
        %v4917 = vmax.f32 %v4915, %v4916
        %v4918 = vrot.slane %v4917, 2
        %v4919 = vmax.f32 %v4917, %v4918
        %v4920 = vrot.slane %v4919, 1
        %v4921 = vmax.f32 %v4919, %v4920
        %v4922 = vsel %vm4620, %v4470, -inf
        %v4923 = vrot.slane %v4922, 4
        %v4924 = vmax.f32 %v4922, %v4923
        %v4925 = vrot.slane %v4924, 2
        %v4926 = vmax.f32 %v4924, %v4925
        %v4927 = vrot.slane %v4926, 1
        %v4928 = vmax.f32 %v4926, %v4927
        %v4929 = vsel %vm4620, %v4478, -inf
        %v4930 = vrot.slane %v4929, 4
        %v4931 = vmax.f32 %v4929, %v4930
        %v4932 = vrot.slane %v4931, 2
        %v4933 = vmax.f32 %v4931, %v4932
        %v4934 = vrot.slane %v4933, 1
        %v4935 = vmax.f32 %v4933, %v4934
        %v4936 = vsel %vm4620, %v4486, -inf
        %v4937 = vrot.slane %v4936, 4
        %v4938 = vmax.f32 %v4936, %v4937
        %v4939 = vrot.slane %v4938, 2
        %v4940 = vmax.f32 %v4938, %v4939
        %v4941 = vrot.slane %v4940, 1
        %v4942 = vmax.f32 %v4940, %v4941
        %v4943 = vsel %vm4620, %v4485, -inf
        %v4944 = vrot.slane %v4943, 4
        %v4945 = vmax.f32 %v4943, %v4944
        %v4946 = vrot.slane %v4945, 2
        %v4947 = vmax.f32 %v4945, %v4946
        %v4948 = vrot.slane %v4947, 1
        %v4949 = vmax.f32 %v4947, %v4948
        %v4950 = vsel %vm4620, %v4487, -inf
        %v4951 = vrot.slane %v4950, 4
        %v4952 = vmax.f32 %v4950, %v4951
        %v4953 = vrot.slane %v4952, 2
        %v4954 = vmax.f32 %v4952, %v4953
        %v4955 = vrot.slane %v4954, 1
        %v4956 = vmax.f32 %v4954, %v4955
        %v4957 = vsel %vm4620, %v4495, -inf
        %v4958 = vrot.slane %v4957, 4
        %v4959 = vmax.f32 %v4957, %v4958
        %v4960 = vrot.slane %v4959, 2
        %v4961 = vmax.f32 %v4959, %v4960
        %v4962 = vrot.slane %v4961, 1
        %v4963 = vmax.f32 %v4961, %v4962
        %v4964 = vsel %vm4620, %v4503, -inf
        %v4965 = vrot.slane %v4964, 4
        %v4966 = vmax.f32 %v4964, %v4965
        %v4967 = vrot.slane %v4966, 2
        %v4968 = vmax.f32 %v4966, %v4967
        %v4969 = vrot.slane %v4968, 1
        %v4970 = vmax.f32 %v4968, %v4969
        %v4971 = vsel %vm4620, %v4502, -inf
        %v4972 = vrot.slane %v4971, 4
        %v4973 = vmax.f32 %v4971, %v4972
        %v4974 = vrot.slane %v4973, 2
        %v4975 = vmax.f32 %v4973, %v4974
        %v4976 = vrot.slane %v4975, 1
        %v4977 = vmax.f32 %v4975, %v4976
        %v4978 = vsel %vm4620, %v4504, -inf
        %v4979 = vrot.slane %v4978, 4
        %v4980 = vmax.f32 %v4978, %v4979
        %v4981 = vrot.slane %v4980, 2
        %v4982 = vmax.f32 %v4980, %v4981
        %v4983 = vrot.slane %v4982, 1
        %v4984 = vmax.f32 %v4982, %v4983
        %v4985 = vsel %vm4620, %v4512, -inf
        %v4986 = vrot.slane %v4985, 4
        %v4987 = vmax.f32 %v4985, %v4986
        %v4988 = vrot.slane %v4987, 2
        %v4989 = vmax.f32 %v4987, %v4988
        %v4990 = vrot.slane %v4989, 1
        %v4991 = vmax.f32 %v4989, %v4990
        %v4992 = vsel %vm4620, %v4520, -inf
        %v4993 = vrot.slane %v4992, 4
        %v4994 = vmax.f32 %v4992, %v4993
        %v4995 = vrot.slane %v4994, 2
        %v4996 = vmax.f32 %v4994, %v4995
        %v4997 = vrot.slane %v4996, 1
        %v4998 = vmax.f32 %v4996, %v4997
        %v4999 = vsel %vm4620, %v4519, -inf
        %v5000 = vrot.slane %v4999, 4
        %v5001 = vmax.f32 %v4999, %v5000
        %v5002 = vrot.slane %v5001, 2
        %v5003 = vmax.f32 %v5001, %v5002
        %v5004 = vrot.slane %v5003, 1
        %v5005 = vmax.f32 %v5003, %v5004
        %v5006 = vsel %vm4620, %v4521, -inf
        %v5007 = vrot.slane %v5006, 4
        %v5008 = vmax.f32 %v5006, %v5007
        %v5009 = vrot.slane %v5008, 2
        %v5010 = vmax.f32 %v5008, %v5009
        %v5011 = vrot.slane %v5010, 1
        %v5012 = vmax.f32 %v5010, %v5011
        %v5013 = vsel %vm4620, %v4529, -inf
        %v5014 = vrot.slane %v5013, 4
        %v5015 = vmax.f32 %v5013, %v5014
        %v5016 = vrot.slane %v5015, 2
        %v5017 = vmax.f32 %v5015, %v5016
        %v5018 = vrot.slane %v5017, 1
        %v5019 = vmax.f32 %v5017, %v5018
        %v5020 = vsel %vm4620, %v4537, -inf
        %v5021 = vrot.slane %v5020, 4
        %v5022 = vmax.f32 %v5020, %v5021
        %v5023 = vrot.slane %v5022, 2
        %v5024 = vmax.f32 %v5022, %v5023
        %v5025 = vrot.slane %v5024, 1
        %v5026 = vmax.f32 %v5024, %v5025
        %v5027 = vsel %vm4620, %v4536, -inf
        %v5028 = vrot.slane %v5027, 4
        %v5029 = vmax.f32 %v5027, %v5028
        %v5030 = vrot.slane %v5029, 2
        %v5031 = vmax.f32 %v5029, %v5030
        %v5032 = vrot.slane %v5031, 1
        %v5033 = vmax.f32 %v5031, %v5032
        %v5034 = vsel %vm4620, %v4538, -inf
        %v5035 = vrot.slane %v5034, 4
        %v5036 = vmax.f32 %v5034, %v5035
        %v5037 = vrot.slane %v5036, 2
        %v5038 = vmax.f32 %v5036, %v5037
        %v5039 = vrot.slane %v5038, 1
        %v5040 = vmax.f32 %v5038, %v5039
        %v5041 = vsel %vm4620, %v4546, -inf
        %v5042 = vrot.slane %v5041, 4
        %v5043 = vmax.f32 %v5041, %v5042
        %v5044 = vrot.slane %v5043, 2
        %v5045 = vmax.f32 %v5043, %v5044
        %v5046 = vrot.slane %v5045, 1
        %v5047 = vmax.f32 %v5045, %v5046
        %v5048 = vsel %vm4620, %v4554, -inf
        %v5049 = vrot.slane %v5048, 4
        %v5050 = vmax.f32 %v5048, %v5049
        %v5051 = vrot.slane %v5050, 2
        %v5052 = vmax.f32 %v5050, %v5051
        %v5053 = vrot.slane %v5052, 1
        %v5054 = vmax.f32 %v5052, %v5053
        %v5055 = vsel %vm4620, %v4553, -inf
        %v5056 = vrot.slane %v5055, 4
        %v5057 = vmax.f32 %v5055, %v5056
        %v5058 = vrot.slane %v5057, 2
        %v5059 = vmax.f32 %v5057, %v5058
        %v5060 = vrot.slane %v5059, 1
        %v5061 = vmax.f32 %v5059, %v5060
        %v5062 = vsel %vm4620, %v4555, -inf
        %v5063 = vrot.slane %v5062, 4
        %v5064 = vmax.f32 %v5062, %v5063
        %v5065 = vrot.slane %v5064, 2
        %v5066 = vmax.f32 %v5064, %v5065
        %v5067 = vrot.slane %v5066, 1
        %v5068 = vmax.f32 %v5066, %v5067
        %v5133 = vsel %vm3617, %v4634, %v4627
        %v5134 = vsel %vm3605, %v4641, %v5133
        %v5135 = vsel %vm3607, %v4648, %v5134
        %v5136 = vsel %vm3609, %v4655, %v5135
        %v5137 = vsel %vm3611, %v4662, %v5136
        %v5138 = vsel %vm3613, %v4669, %v5137
        %v5139 = vsel %vm3615, %v4676, %v5138
        %v5140 = vsel %vm3617, %v4690, %v4683
        %v5141 = vsel %vm3605, %v4697, %v5140
        %v5142 = vsel %vm3607, %v4704, %v5141
        %v5143 = vsel %vm3609, %v4711, %v5142
        %v5144 = vsel %vm3611, %v4718, %v5143
        %v5145 = vsel %vm3613, %v4725, %v5144
        %v5146 = vsel %vm3615, %v4732, %v5145
        %v5147 = vsel %vm3617, %v4746, %v4739
        %v5148 = vsel %vm3605, %v4753, %v5147
        %v5149 = vsel %vm3607, %v4760, %v5148
        %v5150 = vsel %vm3609, %v4767, %v5149
        %v5151 = vsel %vm3611, %v4774, %v5150
        %v5152 = vsel %vm3613, %v4781, %v5151
        %v5153 = vsel %vm3615, %v4788, %v5152
        %v5154 = vsel %vm3617, %v4802, %v4795
        %v5155 = vsel %vm3605, %v4809, %v5154
        %v5156 = vsel %vm3607, %v4816, %v5155
        %v5157 = vsel %vm3609, %v4823, %v5156
        %v5158 = vsel %vm3611, %v4830, %v5157
        %v5159 = vsel %vm3613, %v4837, %v5158
        %v5160 = vsel %vm3615, %v4844, %v5159
        %v5161 = vsel %vm3617, %v4858, %v4851
        %v5162 = vsel %vm3605, %v4865, %v5161
        %v5163 = vsel %vm3607, %v4872, %v5162
        %v5164 = vsel %vm3609, %v4879, %v5163
        %v5165 = vsel %vm3611, %v4886, %v5164
        %v5166 = vsel %vm3613, %v4893, %v5165
        %v5167 = vsel %vm3615, %v4900, %v5166
        %v5168 = vsel %vm3617, %v4914, %v4907
        %v5169 = vsel %vm3605, %v4921, %v5168
        %v5170 = vsel %vm3607, %v4928, %v5169
        %v5171 = vsel %vm3609, %v4935, %v5170
        %v5172 = vsel %vm3611, %v4942, %v5171
        %v5173 = vsel %vm3613, %v4949, %v5172
        %v5174 = vsel %vm3615, %v4956, %v5173
        %v5175 = vsel %vm3617, %v4970, %v4963
        %v5176 = vsel %vm3605, %v4977, %v5175
        %v5177 = vsel %vm3607, %v4984, %v5176
        %v5178 = vsel %vm3609, %v4991, %v5177
        %v5179 = vsel %vm3611, %v4998, %v5178
        %v5180 = vsel %vm3613, %v5005, %v5179
        %v5181 = vsel %vm3615, %v5012, %v5180
        %v5182 = vsel %vm3617, %v5026, %v5019
        %v5183 = vsel %vm3605, %v5033, %v5182
        %v5184 = vsel %vm3607, %v5040, %v5183
        %v5185 = vsel %vm3609, %v5047, %v5184
        %v5186 = vsel %vm3611, %v5054, %v5185
        %v5187 = vsel %vm3613, %v5061, %v5186
        %v5188 = vsel %vm3615, %v5068, %v5187
        %v5197 = vcombine.low %v5139, %v5153
        %v5198 = vcombine.high %v5139, %v5153
        %v5200 = vunpack.c.l.s4 1983009808
        %v5201 = vunpack.c.0.s8 %v5200
        %v5202 = vlaneseq
        %v5203 = vshrl.u32 %v5202, 7
        %v5204 = vsub.s32 %v5201, %v5203
        %v5205 = vrot.slane %v5197, %v5204
        %v5207 = vunpack.c.l.s4 1983009808
        %v5208 = vunpack.c.0.s8 %v5207
        %v5209 = vlaneseq
        %v5210 = vshrl.u32 %v5209, 7
        %v5211 = vsub.s32 %v5208, %v5210
        %v5212 = vrot.slane %v5198, %v5211
        %v5213 = vcombine.low %v5146, %v5160
        %v5214 = vcombine.high %v5146, %v5160
        %v5216 = vunpack.c.l.s4 1983009808
        %v5217 = vunpack.c.0.s8 %v5216
        %v5218 = vlaneseq
        %v5219 = vshrl.u32 %v5218, 7
        %v5220 = vsub.s32 %v5217, %v5219
        %v5221 = vrot.slane %v5213, %v5220
        %v5223 = vunpack.c.l.s4 1983009808
        %v5224 = vunpack.c.0.s8 %v5223
        %v5225 = vlaneseq
        %v5226 = vshrl.u32 %v5225, 7
        %v5227 = vsub.s32 %v5224, %v5226
        %v5228 = vrot.slane %v5214, %v5227
        %v5229 = vcombine.low %v5167, %v5181
        %v5230 = vcombine.high %v5167, %v5181
        %v5232 = vunpack.c.l.s4 1983009808
        %v5233 = vunpack.c.0.s8 %v5232
        %v5234 = vlaneseq
        %v5235 = vshrl.u32 %v5234, 7
        %v5236 = vsub.s32 %v5233, %v5235
        %v5237 = vrot.slane %v5229, %v5236
        %v5239 = vunpack.c.l.s4 1983009808
        %v5240 = vunpack.c.0.s8 %v5239
        %v5241 = vlaneseq
        %v5242 = vshrl.u32 %v5241, 7
        %v5243 = vsub.s32 %v5240, %v5242
        %v5244 = vrot.slane %v5230, %v5243
        %v5245 = vcombine.low %v5174, %v5188
        %v5246 = vcombine.high %v5174, %v5188
        %v5248 = vunpack.c.l.s4 1983009808
        %v5249 = vunpack.c.0.s8 %v5248
        %v5250 = vlaneseq
        %v5251 = vshrl.u32 %v5250, 7
        %v5252 = vsub.s32 %v5249, %v5251
        %v5253 = vrot.slane %v5245, %v5252
        %v5255 = vunpack.c.l.s4 1983009808
        %v5256 = vunpack.c.0.s8 %v5255
        %v5257 = vlaneseq
        %v5258 = vshrl.u32 %v5257, 7
        %v5259 = vsub.s32 %v5256, %v5258
        %v5260 = vrot.slane %v5246, %v5259
        %v5261 = vcombine.low %v5205, %v5221
        %v5262 = vcombine.high %v5205, %v5221
        %v5264 = vunpack.c.l.s4 1934713408
        %v5265 = vunpack.c.0.s8 %v5264
        %v5266 = vlaneseq
        %v5267 = vshrl.u32 %v5266, 7
        %v5268 = vsub.s32 %v5265, %v5267
        %v5269 = vrot.slane %v5261, %v5268
        %v5271 = vunpack.c.l.s4 1934713408
        %v5272 = vunpack.c.0.s8 %v5271
        %v5273 = vlaneseq
        %v5274 = vshrl.u32 %v5273, 7
        %v5275 = vsub.s32 %v5272, %v5274
        %v5276 = vrot.slane %v5262, %v5275
        %v5277 = vcombine.low %v5212, %v5228
        %v5278 = vcombine.high %v5212, %v5228
        %v5280 = vunpack.c.l.s4 1934713408
        %v5281 = vunpack.c.0.s8 %v5280
        %v5282 = vlaneseq
        %v5283 = vshrl.u32 %v5282, 7
        %v5284 = vsub.s32 %v5281, %v5283
        %v5285 = vrot.slane %v5277, %v5284
        %v5287 = vunpack.c.l.s4 1934713408
        %v5288 = vunpack.c.0.s8 %v5287
        %v5289 = vlaneseq
        %v5290 = vshrl.u32 %v5289, 7
        %v5291 = vsub.s32 %v5288, %v5290
        %v5292 = vrot.slane %v5278, %v5291
        %v5293 = vcombine.low %v5237, %v5253
        %v5294 = vcombine.high %v5237, %v5253
        %v5296 = vunpack.c.l.s4 1934713408
        %v5297 = vunpack.c.0.s8 %v5296
        %v5298 = vlaneseq
        %v5299 = vshrl.u32 %v5298, 7
        %v5300 = vsub.s32 %v5297, %v5299
        %v5301 = vrot.slane %v5293, %v5300
        %v5303 = vunpack.c.l.s4 1934713408
        %v5304 = vunpack.c.0.s8 %v5303
        %v5305 = vlaneseq
        %v5306 = vshrl.u32 %v5305, 7
        %v5307 = vsub.s32 %v5304, %v5306
        %v5308 = vrot.slane %v5294, %v5307
        %v5309 = vcombine.low %v5244, %v5260
        %v5310 = vcombine.high %v5244, %v5260
        %v5312 = vunpack.c.l.s4 1934713408
        %v5313 = vunpack.c.0.s8 %v5312
        %v5314 = vlaneseq
        %v5315 = vshrl.u32 %v5314, 7
        %v5316 = vsub.s32 %v5313, %v5315
        %v5317 = vrot.slane %v5309, %v5316
        %v5319 = vunpack.c.l.s4 1934713408
        %v5320 = vunpack.c.0.s8 %v5319
        %v5321 = vlaneseq
        %v5322 = vshrl.u32 %v5321, 7
        %v5323 = vsub.s32 %v5320, %v5322
        %v5324 = vrot.slane %v5310, %v5323
        %v5325 = vcombine.low %v5269, %v5301
        %v5326 = vcombine.high %v5269, %v5301
        %v5327 = vcombine.low %v5276, %v5308
        %v5328 = vcombine.high %v5276, %v5308
        %v5329 = vcombine.low %v5285, %v5317
        %v5330 = vcombine.high %v5285, %v5317
        %v5331 = vcombine.low %v5292, %v5324
        %v5332 = vcombine.high %v5292, %v5324
        %v5333 = vld [vmem:[#allocation2] sm:$0xff]
        %v5334 = vld [vmem:[#allocation2 + $0x8] sm:$0xff]
        %v5335 = vld [vmem:[#allocation2 + $0x10] sm:$0xff]
        %v5336 = vld [vmem:[#allocation2 + $0x18] sm:$0xff]
        %v5337 = vld [vmem:[#allocation2 + $0x20] sm:$0xff]
        %v5338 = vld [vmem:[#allocation2 + $0x28] sm:$0xff]
        %v5339 = vld [vmem:[#allocation2 + $0x30] sm:$0xff]
        %v5340 = vld [vmem:[#allocation2 + $0x38] sm:$0xff]
        %v5341 = vld [vmem:[#allocation2 + $0x40] sm:$0xff]
        %v5342 = vld [vmem:[#allocation2 + $0x48] sm:$0xff]
        %v5343 = vld [vmem:[#allocation2 + $0x50] sm:$0xff]
        %v5344 = vld [vmem:[#allocation2 + $0x58] sm:$0xff]
        %v5345 = vld [vmem:[#allocation2 + $0x60] sm:$0xff]
        %v5346 = vld [vmem:[#allocation2 + $0x68] sm:$0xff]
        %v5347 = vld [vmem:[#allocation2 + $0x70] sm:$0xff]
        %v5348 = vld [vmem:[#allocation2 + $0x78] sm:$0xff]
        %v5349 = vld [vmem:[#allocation2 + $0x80] sm:$0xff]
        %v5350 = vld [vmem:[#allocation2 + $0x88] sm:$0xff]
        %v5351 = vld [vmem:[#allocation2 + $0x90] sm:$0xff]
        %v5352 = vld [vmem:[#allocation2 + $0x98] sm:$0xff]
        %v5353 = vld [vmem:[#allocation2 + $0xa0] sm:$0xff]
        %v5354 = vld [vmem:[#allocation2 + $0xa8] sm:$0xff]
        %v5355 = vld [vmem:[#allocation2 + $0xb0] sm:$0xff]
        %v5356 = vld [vmem:[#allocation2 + $0xb8] sm:$0xff]
        %v5357 = vld [vmem:[#allocation2 + $0xc0] sm:$0xff]
        %v5358 = vld [vmem:[#allocation2 + $0xc8] sm:$0xff]
        %v5359 = vld [vmem:[#allocation2 + $0xd0] sm:$0xff]
        %v5360 = vld [vmem:[#allocation2 + $0xd8] sm:$0xff]
        %v5361 = vld [vmem:[#allocation2 + $0xe0] sm:$0xff]
        %v5362 = vld [vmem:[#allocation2 + $0xe8] sm:$0xff]
        %v5363 = vld [vmem:[#allocation2 + $0xf0] sm:$0xff]
        %v5364 = vld [vmem:[#allocation2 + $0xf8] sm:$0xff]
        %v5365 = vld [vmem:[#allocation2 + $0x100] sm:$0xff]
        %v5366 = vld [vmem:[#allocation2 + $0x108] sm:$0xff]
        %v5367 = vld [vmem:[#allocation2 + $0x110] sm:$0xff]
        %v5368 = vld [vmem:[#allocation2 + $0x118] sm:$0xff]
        %v5369 = vld [vmem:[#allocation2 + $0x120] sm:$0xff]
        %v5370 = vld [vmem:[#allocation2 + $0x128] sm:$0xff]
        %v5371 = vld [vmem:[#allocation2 + $0x130] sm:$0xff]
        %v5372 = vld [vmem:[#allocation2 + $0x138] sm:$0xff]
        %v5373 = vld [vmem:[#allocation2 + $0x140] sm:$0xff]
        %v5374 = vld [vmem:[#allocation2 + $0x148] sm:$0xff]
        %v5375 = vld [vmem:[#allocation2 + $0x150] sm:$0xff]
        %v5376 = vld [vmem:[#allocation2 + $0x158] sm:$0xff]
        %v5377 = vld [vmem:[#allocation2 + $0x160] sm:$0xff]
        %v5378 = vld [vmem:[#allocation2 + $0x168] sm:$0xff]
        %v5379 = vld [vmem:[#allocation2 + $0x170] sm:$0xff]
        %v5380 = vld [vmem:[#allocation2 + $0x178] sm:$0xff]
        %v5381 = vld [vmem:[#allocation2 + $0x180] sm:$0xff]
        %v5382 = vld [vmem:[#allocation2 + $0x188] sm:$0xff]
        %v5383 = vld [vmem:[#allocation2 + $0x190] sm:$0xff]
        %v5384 = vld [vmem:[#allocation2 + $0x198] sm:$0xff]
        %v5385 = vld [vmem:[#allocation2 + $0x1a0] sm:$0xff]
        %v5386 = vld [vmem:[#allocation2 + $0x1a8] sm:$0xff]
        %v5387 = vld [vmem:[#allocation2 + $0x1b0] sm:$0xff]
        %v5388 = vld [vmem:[#allocation2 + $0x1b8] sm:$0xff]
        %v5389 = vld [vmem:[#allocation2 + $0x1c0] sm:$0xff]
        %v5390 = vld [vmem:[#allocation2 + $0x1c8] sm:$0xff]
        %v5391 = vld [vmem:[#allocation2 + $0x1d0] sm:$0xff]
        %v5392 = vld [vmem:[#allocation2 + $0x1d8] sm:$0xff]
        %v5393 = vld [vmem:[#allocation2 + $0x1e0] sm:$0xff]
        %v5394 = vld [vmem:[#allocation2 + $0x1e8] sm:$0xff]
        %v5395 = vld [vmem:[#allocation2 + $0x1f0] sm:$0xff]
        %v5396 = vld [vmem:[#allocation2 + $0x1f8] sm:$0xff]
        %v5397 = vld [vmem:[#allocation2 + $0x200] sm:$0xff]
        %v5398 = vld [vmem:[#allocation2 + $0x208] sm:$0xff]
        %v5399 = vld [vmem:[#allocation2 + $0x210] sm:$0xff]
        %v5400 = vld [vmem:[#allocation2 + $0x218] sm:$0xff]
        %v5401 = vld [vmem:[#allocation2 + $0x220] sm:$0xff]
        %v5402 = vld [vmem:[#allocation2 + $0x228] sm:$0xff]
        %v5403 = vld [vmem:[#allocation2 + $0x230] sm:$0xff]
        %v5404 = vld [vmem:[#allocation2 + $0x238] sm:$0xff]
        %v5405 = vld [vmem:[#allocation2 + $0x240] sm:$0xff]
        %v5406 = vld [vmem:[#allocation2 + $0x248] sm:$0xff]
        %v5407 = vld [vmem:[#allocation2 + $0x250] sm:$0xff]
        %v5408 = vld [vmem:[#allocation2 + $0x258] sm:$0xff]
        %v5409 = vld [vmem:[#allocation2 + $0x260] sm:$0xff]
        %v5410 = vld [vmem:[#allocation2 + $0x268] sm:$0xff]
        %v5411 = vld [vmem:[#allocation2 + $0x270] sm:$0xff]
        %v5412 = vld [vmem:[#allocation2 + $0x278] sm:$0xff]
        %v5413 = vld [vmem:[#allocation2 + $0x280] sm:$0xff]
        %v5414 = vld [vmem:[#allocation2 + $0x288] sm:$0xff]
        %v5415 = vld [vmem:[#allocation2 + $0x290] sm:$0xff]
        %v5416 = vld [vmem:[#allocation2 + $0x298] sm:$0xff]
        %v5417 = vld [vmem:[#allocation2 + $0x2a0] sm:$0xff]
        %v5418 = vld [vmem:[#allocation2 + $0x2a8] sm:$0xff]
        %v5419 = vld [vmem:[#allocation2 + $0x2b0] sm:$0xff]
        %v5420 = vld [vmem:[#allocation2 + $0x2b8] sm:$0xff]
        %v5421 = vld [vmem:[#allocation2 + $0x2c0] sm:$0xff]
        %v5422 = vld [vmem:[#allocation2 + $0x2c8] sm:$0xff]
        %v5423 = vld [vmem:[#allocation2 + $0x2d0] sm:$0xff]
        %v5424 = vld [vmem:[#allocation2 + $0x2d8] sm:$0xff]
        %v5425 = vld [vmem:[#allocation2 + $0x2e0] sm:$0xff]
        %v5426 = vld [vmem:[#allocation2 + $0x2e8] sm:$0xff]
        %v5427 = vld [vmem:[#allocation2 + $0x2f0] sm:$0xff]
        %v5428 = vld [vmem:[#allocation2 + $0x2f8] sm:$0xff]
        %v5429 = vld [vmem:[#allocation2 + $0x300] sm:$0xff]
        %v5430 = vld [vmem:[#allocation2 + $0x308] sm:$0xff]
        %v5431 = vld [vmem:[#allocation2 + $0x310] sm:$0xff]
        %v5432 = vld [vmem:[#allocation2 + $0x318] sm:$0xff]
        %v5433 = vld [vmem:[#allocation2 + $0x320] sm:$0xff]
        %v5434 = vld [vmem:[#allocation2 + $0x328] sm:$0xff]
        %v5435 = vld [vmem:[#allocation2 + $0x330] sm:$0xff]
        %v5436 = vld [vmem:[#allocation2 + $0x338] sm:$0xff]
        %v5437 = vld [vmem:[#allocation2 + $0x340] sm:$0xff]
        %v5438 = vld [vmem:[#allocation2 + $0x348] sm:$0xff]
        %v5439 = vld [vmem:[#allocation2 + $0x350] sm:$0xff]
        %v5440 = vld [vmem:[#allocation2 + $0x358] sm:$0xff]
        %v5441 = vld [vmem:[#allocation2 + $0x360] sm:$0xff]
        %v5442 = vld [vmem:[#allocation2 + $0x368] sm:$0xff]
        %v5443 = vld [vmem:[#allocation2 + $0x370] sm:$0xff]
        %v5444 = vld [vmem:[#allocation2 + $0x378] sm:$0xff]
        %v5445 = vld [vmem:[#allocation2 + $0x380] sm:$0xff]
        %v5446 = vld [vmem:[#allocation2 + $0x388] sm:$0xff]
        %v5447 = vld [vmem:[#allocation2 + $0x390] sm:$0xff]
        %v5448 = vld [vmem:[#allocation2 + $0x398] sm:$0xff]
        %v5449 = vld [vmem:[#allocation2 + $0x3a0] sm:$0xff]
        %v5450 = vld [vmem:[#allocation2 + $0x3a8] sm:$0xff]
        %v5451 = vld [vmem:[#allocation2 + $0x3b0] sm:$0xff]
        %v5452 = vld [vmem:[#allocation2 + $0x3b8] sm:$0xff]
        %v5453 = vld [vmem:[#allocation2 + $0x3c0] sm:$0xff]
        %v5454 = vld [vmem:[#allocation2 + $0x3c8] sm:$0xff]
        %v5455 = vld [vmem:[#allocation2 + $0x3d0] sm:$0xff]
        %v5456 = vld [vmem:[#allocation2 + $0x3d8] sm:$0xff]
        %v5457 = vld [vmem:[#allocation2 + $0x3e0] sm:$0xff]
        %v5458 = vld [vmem:[#allocation2 + $0x3e8] sm:$0xff]
        %v5459 = vld [vmem:[#allocation2 + $0x3f0] sm:$0xff]
        %v5460 = vld [vmem:[#allocation2 + $0x3f8] sm:$0xff]
        %v5461 = vpack.c.bf16 %v5325, %v5325
        %v5462 = vpack.c.bf16 %v5326, %v5326
        %v5463 = vpack.c.bf16 %v5327, %v5327
        %v5464 = vpack.c.bf16 %v5328, %v5328
        %v5465 = vpack.c.bf16 %v5329, %v5329
        %v5466 = vpack.c.bf16 %v5330, %v5330
        %v5467 = vpack.c.bf16 %v5331, %v5331
        %v5468 = vpack.c.bf16 %v5332, %v5332
        %v5469 = vld [vmem:[%s6] sm:$0x3]
        %v5471 = vlaneseq
        %v5472 = vshrl.u32 %v5471, 7
        %v5473 = vsub.s32 0, %v5472
        %v5474 = vrot.slane %v5469, %v5473
        %v5475 = vlaneseq
        %v5476 = vshrl.u32 %v5475, 7
        %v5477 = vsub.s32 1, %v5476
        %v5478 = vrot.slane %v5469, %v5477
        %v5609 = vunpack.c.l.b16 %v5333
        %v5610 = vunpack.c.h.b16 %v5333
        %v5611 = vunpack.c.l.b16 %v5334
        %v5612 = vunpack.c.h.b16 %v5334
        %v5613 = vunpack.c.l.b16 %v5335
        %v5614 = vunpack.c.h.b16 %v5335
        %v5615 = vunpack.c.l.b16 %v5336
        %v5616 = vunpack.c.h.b16 %v5336
        %v5617 = vunpack.c.l.b16 %v5337
        %v5618 = vunpack.c.h.b16 %v5337
        %v5619 = vunpack.c.l.b16 %v5338
        %v5620 = vunpack.c.h.b16 %v5338
        %v5621 = vunpack.c.l.b16 %v5339
        %v5622 = vunpack.c.h.b16 %v5339
        %v5623 = vunpack.c.l.b16 %v5340
        %v5624 = vunpack.c.h.b16 %v5340
        %v5625 = vunpack.c.l.b16 %v5341
        %v5626 = vunpack.c.h.b16 %v5341
        %v5627 = vunpack.c.l.b16 %v5342
        %v5628 = vunpack.c.h.b16 %v5342
        %v5629 = vunpack.c.l.b16 %v5343
        %v5630 = vunpack.c.h.b16 %v5343
        %v5631 = vunpack.c.l.b16 %v5344
        %v5632 = vunpack.c.h.b16 %v5344
        %v5633 = vunpack.c.l.b16 %v5345
        %v5634 = vunpack.c.h.b16 %v5345
        %v5635 = vunpack.c.l.b16 %v5346
        %v5636 = vunpack.c.h.b16 %v5346
        %v5637 = vunpack.c.l.b16 %v5347
        %v5638 = vunpack.c.h.b16 %v5347
        %v5639 = vunpack.c.l.b16 %v5348
        %v5640 = vunpack.c.h.b16 %v5348
        %v5641 = vunpack.c.l.b16 %v5349
        %v5642 = vunpack.c.h.b16 %v5349
        %v5643 = vunpack.c.l.b16 %v5350
        %v5644 = vunpack.c.h.b16 %v5350
        %v5645 = vunpack.c.l.b16 %v5351
        %v5646 = vunpack.c.h.b16 %v5351
        %v5647 = vunpack.c.l.b16 %v5352
        %v5648 = vunpack.c.h.b16 %v5352
        %v5649 = vunpack.c.l.b16 %v5353
        %v5650 = vunpack.c.h.b16 %v5353
        %v5651 = vunpack.c.l.b16 %v5354
        %v5652 = vunpack.c.h.b16 %v5354
        %v5653 = vunpack.c.l.b16 %v5355
        %v5654 = vunpack.c.h.b16 %v5355
        %v5655 = vunpack.c.l.b16 %v5356
        %v5656 = vunpack.c.h.b16 %v5356
        %v5657 = vunpack.c.l.b16 %v5357
        %v5658 = vunpack.c.h.b16 %v5357
        %v5659 = vunpack.c.l.b16 %v5358
        %v5660 = vunpack.c.h.b16 %v5358
        %v5661 = vunpack.c.l.b16 %v5359
        %v5662 = vunpack.c.h.b16 %v5359
        %v5663 = vunpack.c.l.b16 %v5360
        %v5664 = vunpack.c.h.b16 %v5360
        %v5665 = vunpack.c.l.b16 %v5361
        %v5666 = vunpack.c.h.b16 %v5361
        %v5667 = vunpack.c.l.b16 %v5362
        %v5668 = vunpack.c.h.b16 %v5362
        %v5669 = vunpack.c.l.b16 %v5363
        %v5670 = vunpack.c.h.b16 %v5363
        %v5671 = vunpack.c.l.b16 %v5364
        %v5672 = vunpack.c.h.b16 %v5364
        %v5673 = vunpack.c.l.b16 %v5365
        %v5674 = vunpack.c.h.b16 %v5365
        %v5675 = vunpack.c.l.b16 %v5366
        %v5676 = vunpack.c.h.b16 %v5366
        %v5677 = vunpack.c.l.b16 %v5367
        %v5678 = vunpack.c.h.b16 %v5367
        %v5679 = vunpack.c.l.b16 %v5368
        %v5680 = vunpack.c.h.b16 %v5368
        %v5681 = vunpack.c.l.b16 %v5369
        %v5682 = vunpack.c.h.b16 %v5369
        %v5683 = vunpack.c.l.b16 %v5370
        %v5684 = vunpack.c.h.b16 %v5370
        %v5685 = vunpack.c.l.b16 %v5371
        %v5686 = vunpack.c.h.b16 %v5371
        %v5687 = vunpack.c.l.b16 %v5372
        %v5688 = vunpack.c.h.b16 %v5372
        %v5689 = vunpack.c.l.b16 %v5373
        %v5690 = vunpack.c.h.b16 %v5373
        %v5691 = vunpack.c.l.b16 %v5374
        %v5692 = vunpack.c.h.b16 %v5374
        %v5693 = vunpack.c.l.b16 %v5375
        %v5694 = vunpack.c.h.b16 %v5375
        %v5695 = vunpack.c.l.b16 %v5376
        %v5696 = vunpack.c.h.b16 %v5376
        %v5697 = vunpack.c.l.b16 %v5377
        %v5698 = vunpack.c.h.b16 %v5377
        %v5699 = vunpack.c.l.b16 %v5378
        %v5700 = vunpack.c.h.b16 %v5378
        %v5701 = vunpack.c.l.b16 %v5379
        %v5702 = vunpack.c.h.b16 %v5379
        %v5703 = vunpack.c.l.b16 %v5380
        %v5704 = vunpack.c.h.b16 %v5380
        %v5705 = vunpack.c.l.b16 %v5381
        %v5706 = vunpack.c.h.b16 %v5381
        %v5707 = vunpack.c.l.b16 %v5382
        %v5708 = vunpack.c.h.b16 %v5382
        %v5709 = vunpack.c.l.b16 %v5383
        %v5710 = vunpack.c.h.b16 %v5383
        %v5711 = vunpack.c.l.b16 %v5384
        %v5712 = vunpack.c.h.b16 %v5384
        %v5713 = vunpack.c.l.b16 %v5385
        %v5714 = vunpack.c.h.b16 %v5385
        %v5715 = vunpack.c.l.b16 %v5386
        %v5716 = vunpack.c.h.b16 %v5386
        %v5717 = vunpack.c.l.b16 %v5387
        %v5718 = vunpack.c.h.b16 %v5387
        %v5719 = vunpack.c.l.b16 %v5388
        %v5720 = vunpack.c.h.b16 %v5388
        %v5721 = vunpack.c.l.b16 %v5389
        %v5722 = vunpack.c.h.b16 %v5389
        %v5723 = vunpack.c.l.b16 %v5390
        %v5724 = vunpack.c.h.b16 %v5390
        %v5725 = vunpack.c.l.b16 %v5391
        %v5726 = vunpack.c.h.b16 %v5391
        %v5727 = vunpack.c.l.b16 %v5392
        %v5728 = vunpack.c.h.b16 %v5392
        %v5729 = vunpack.c.l.b16 %v5393
        %v5730 = vunpack.c.h.b16 %v5393
        %v5731 = vunpack.c.l.b16 %v5394
        %v5732 = vunpack.c.h.b16 %v5394
        %v5733 = vunpack.c.l.b16 %v5395
        %v5734 = vunpack.c.h.b16 %v5395
        %v5735 = vunpack.c.l.b16 %v5396
        %v5736 = vunpack.c.h.b16 %v5396
        %v5737 = vunpack.c.l.b16 %v5397
        %v5738 = vunpack.c.h.b16 %v5397
        %v5739 = vunpack.c.l.b16 %v5398
        %v5740 = vunpack.c.h.b16 %v5398
        %v5741 = vunpack.c.l.b16 %v5399
        %v5742 = vunpack.c.h.b16 %v5399
        %v5743 = vunpack.c.l.b16 %v5400
        %v5744 = vunpack.c.h.b16 %v5400
        %v5745 = vunpack.c.l.b16 %v5401
        %v5746 = vunpack.c.h.b16 %v5401
        %v5747 = vunpack.c.l.b16 %v5402
        %v5748 = vunpack.c.h.b16 %v5402
        %v5749 = vunpack.c.l.b16 %v5403
        %v5750 = vunpack.c.h.b16 %v5403
        %v5751 = vunpack.c.l.b16 %v5404
        %v5752 = vunpack.c.h.b16 %v5404
        %v5753 = vunpack.c.l.b16 %v5405
        %v5754 = vunpack.c.h.b16 %v5405
        %v5755 = vunpack.c.l.b16 %v5406
        %v5756 = vunpack.c.h.b16 %v5406
        %v5757 = vunpack.c.l.b16 %v5407
        %v5758 = vunpack.c.h.b16 %v5407
        %v5759 = vunpack.c.l.b16 %v5408
        %v5760 = vunpack.c.h.b16 %v5408
        %v5761 = vunpack.c.l.b16 %v5409
        %v5762 = vunpack.c.h.b16 %v5409
        %v5763 = vunpack.c.l.b16 %v5410
        %v5764 = vunpack.c.h.b16 %v5410
        %v5765 = vunpack.c.l.b16 %v5411
        %v5766 = vunpack.c.h.b16 %v5411
        %v5767 = vunpack.c.l.b16 %v5412
        %v5768 = vunpack.c.h.b16 %v5412
        %v5769 = vunpack.c.l.b16 %v5413
        %v5770 = vunpack.c.h.b16 %v5413
        %v5771 = vunpack.c.l.b16 %v5414
        %v5772 = vunpack.c.h.b16 %v5414
        %v5773 = vunpack.c.l.b16 %v5415
        %v5774 = vunpack.c.h.b16 %v5415
        %v5775 = vunpack.c.l.b16 %v5416
        %v5776 = vunpack.c.h.b16 %v5416
        %v5777 = vunpack.c.l.b16 %v5417
        %v5778 = vunpack.c.h.b16 %v5417
        %v5779 = vunpack.c.l.b16 %v5418
        %v5780 = vunpack.c.h.b16 %v5418
        %v5781 = vunpack.c.l.b16 %v5419
        %v5782 = vunpack.c.h.b16 %v5419
        %v5783 = vunpack.c.l.b16 %v5420
        %v5784 = vunpack.c.h.b16 %v5420
        %v5785 = vunpack.c.l.b16 %v5421
        %v5786 = vunpack.c.h.b16 %v5421
        %v5787 = vunpack.c.l.b16 %v5422
        %v5788 = vunpack.c.h.b16 %v5422
        %v5789 = vunpack.c.l.b16 %v5423
        %v5790 = vunpack.c.h.b16 %v5423
        %v5791 = vunpack.c.l.b16 %v5424
        %v5792 = vunpack.c.h.b16 %v5424
        %v5793 = vunpack.c.l.b16 %v5425
        %v5794 = vunpack.c.h.b16 %v5425
        %v5795 = vunpack.c.l.b16 %v5426
        %v5796 = vunpack.c.h.b16 %v5426
        %v5797 = vunpack.c.l.b16 %v5427
        %v5798 = vunpack.c.h.b16 %v5427
        %v5799 = vunpack.c.l.b16 %v5428
        %v5800 = vunpack.c.h.b16 %v5428
        %v5801 = vunpack.c.l.b16 %v5429
        %v5802 = vunpack.c.h.b16 %v5429
        %v5803 = vunpack.c.l.b16 %v5430
        %v5804 = vunpack.c.h.b16 %v5430
        %v5805 = vunpack.c.l.b16 %v5431
        %v5806 = vunpack.c.h.b16 %v5431
        %v5807 = vunpack.c.l.b16 %v5432
        %v5808 = vunpack.c.h.b16 %v5432
        %v5809 = vunpack.c.l.b16 %v5433
        %v5810 = vunpack.c.h.b16 %v5433
        %v5811 = vunpack.c.l.b16 %v5434
        %v5812 = vunpack.c.h.b16 %v5434
        %v5813 = vunpack.c.l.b16 %v5435
        %v5814 = vunpack.c.h.b16 %v5435
        %v5815 = vunpack.c.l.b16 %v5436
        %v5816 = vunpack.c.h.b16 %v5436
        %v5817 = vunpack.c.l.b16 %v5437
        %v5818 = vunpack.c.h.b16 %v5437
        %v5819 = vunpack.c.l.b16 %v5438
        %v5820 = vunpack.c.h.b16 %v5438
        %v5821 = vunpack.c.l.b16 %v5439
        %v5822 = vunpack.c.h.b16 %v5439
        %v5823 = vunpack.c.l.b16 %v5440
        %v5824 = vunpack.c.h.b16 %v5440
        %v5825 = vunpack.c.l.b16 %v5441
        %v5826 = vunpack.c.h.b16 %v5441
        %v5827 = vunpack.c.l.b16 %v5442
        %v5828 = vunpack.c.h.b16 %v5442
        %v5829 = vunpack.c.l.b16 %v5443
        %v5830 = vunpack.c.h.b16 %v5443
        %v5831 = vunpack.c.l.b16 %v5444
        %v5832 = vunpack.c.h.b16 %v5444
        %v5833 = vunpack.c.l.b16 %v5445
        %v5834 = vunpack.c.h.b16 %v5445
        %v5835 = vunpack.c.l.b16 %v5446
        %v5836 = vunpack.c.h.b16 %v5446
        %v5837 = vunpack.c.l.b16 %v5447
        %v5838 = vunpack.c.h.b16 %v5447
        %v5839 = vunpack.c.l.b16 %v5448
        %v5840 = vunpack.c.h.b16 %v5448
        %v5841 = vunpack.c.l.b16 %v5449
        %v5842 = vunpack.c.h.b16 %v5449
        %v5843 = vunpack.c.l.b16 %v5450
        %v5844 = vunpack.c.h.b16 %v5450
        %v5845 = vunpack.c.l.b16 %v5451
        %v5846 = vunpack.c.h.b16 %v5451
        %v5847 = vunpack.c.l.b16 %v5452
        %v5848 = vunpack.c.h.b16 %v5452
        %v5849 = vunpack.c.l.b16 %v5453
        %v5850 = vunpack.c.h.b16 %v5453
        %v5851 = vunpack.c.l.b16 %v5454
        %v5852 = vunpack.c.h.b16 %v5454
        %v5853 = vunpack.c.l.b16 %v5455
        %v5854 = vunpack.c.h.b16 %v5455
        %v5855 = vunpack.c.l.b16 %v5456
        %v5856 = vunpack.c.h.b16 %v5456
        %v5857 = vunpack.c.l.b16 %v5457
        %v5858 = vunpack.c.h.b16 %v5457
        %v5859 = vunpack.c.l.b16 %v5458
        %v5860 = vunpack.c.h.b16 %v5458
        %v5861 = vunpack.c.l.b16 %v5459
        %v5862 = vunpack.c.h.b16 %v5459
        %v5863 = vunpack.c.l.b16 %v5460
        %v5864 = vunpack.c.h.b16 %v5460
        %v5865 = vpack.c.b16 %v5611, %v5609
        %v5866 = vpack.c.b16 %v5612, %v5610
        %v5867 = vpack.c.b16 %v5615, %v5613
        %v5868 = vpack.c.b16 %v5616, %v5614
        %v5869 = vpack.c.b16 %v5619, %v5617
        %v5870 = vpack.c.b16 %v5620, %v5618
        %v5871 = vpack.c.b16 %v5623, %v5621
        %v5872 = vpack.c.b16 %v5624, %v5622
        %v5873 = vpack.c.b16 %v5627, %v5625
        %v5874 = vpack.c.b16 %v5628, %v5626
        %v5875 = vpack.c.b16 %v5631, %v5629
        %v5876 = vpack.c.b16 %v5632, %v5630
        %v5877 = vpack.c.b16 %v5635, %v5633
        %v5878 = vpack.c.b16 %v5636, %v5634
        %v5879 = vpack.c.b16 %v5639, %v5637
        %v5880 = vpack.c.b16 %v5640, %v5638
        %v5881 = vpack.c.b16 %v5643, %v5641
        %v5882 = vpack.c.b16 %v5644, %v5642
        %v5883 = vpack.c.b16 %v5647, %v5645
        %v5884 = vpack.c.b16 %v5648, %v5646
        %v5885 = vpack.c.b16 %v5651, %v5649
        %v5886 = vpack.c.b16 %v5652, %v5650
        %v5887 = vpack.c.b16 %v5655, %v5653
        %v5888 = vpack.c.b16 %v5656, %v5654
        %v5889 = vpack.c.b16 %v5659, %v5657
        %v5890 = vpack.c.b16 %v5660, %v5658
        %v5891 = vpack.c.b16 %v5663, %v5661
        %v5892 = vpack.c.b16 %v5664, %v5662
        %v5893 = vpack.c.b16 %v5667, %v5665
        %v5894 = vpack.c.b16 %v5668, %v5666
        %v5895 = vpack.c.b16 %v5671, %v5669
        %v5896 = vpack.c.b16 %v5672, %v5670
        %v5897 = vpack.c.b16 %v5675, %v5673
        %v5898 = vpack.c.b16 %v5676, %v5674
        %v5899 = vpack.c.b16 %v5679, %v5677
        %v5900 = vpack.c.b16 %v5680, %v5678
        %v5901 = vpack.c.b16 %v5683, %v5681
        %v5902 = vpack.c.b16 %v5684, %v5682
        %v5903 = vpack.c.b16 %v5687, %v5685
        %v5904 = vpack.c.b16 %v5688, %v5686
        %v5905 = vpack.c.b16 %v5691, %v5689
        %v5906 = vpack.c.b16 %v5692, %v5690
        %v5907 = vpack.c.b16 %v5695, %v5693
        %v5908 = vpack.c.b16 %v5696, %v5694
        %v5909 = vpack.c.b16 %v5699, %v5697
        %v5910 = vpack.c.b16 %v5700, %v5698
        %v5911 = vpack.c.b16 %v5703, %v5701
        %v5912 = vpack.c.b16 %v5704, %v5702
        %v5913 = vpack.c.b16 %v5707, %v5705
        %v5914 = vpack.c.b16 %v5708, %v5706
        %v5915 = vpack.c.b16 %v5711, %v5709
        %v5916 = vpack.c.b16 %v5712, %v5710
        %v5917 = vpack.c.b16 %v5715, %v5713
        %v5918 = vpack.c.b16 %v5716, %v5714
        %v5919 = vpack.c.b16 %v5719, %v5717
        %v5920 = vpack.c.b16 %v5720, %v5718
        %v5921 = vpack.c.b16 %v5723, %v5721
        %v5922 = vpack.c.b16 %v5724, %v5722
        %v5923 = vpack.c.b16 %v5727, %v5725
        %v5924 = vpack.c.b16 %v5728, %v5726
        %v5925 = vpack.c.b16 %v5731, %v5729
        %v5926 = vpack.c.b16 %v5732, %v5730
        %v5927 = vpack.c.b16 %v5735, %v5733
        %v5928 = vpack.c.b16 %v5736, %v5734
        %v5929 = vpack.c.b16 %v5739, %v5737
        %v5930 = vpack.c.b16 %v5740, %v5738
        %v5931 = vpack.c.b16 %v5743, %v5741
        %v5932 = vpack.c.b16 %v5744, %v5742
        %v5933 = vpack.c.b16 %v5747, %v5745
        %v5934 = vpack.c.b16 %v5748, %v5746
        %v5935 = vpack.c.b16 %v5751, %v5749
        %v5936 = vpack.c.b16 %v5752, %v5750
        %v5937 = vpack.c.b16 %v5755, %v5753
        %v5938 = vpack.c.b16 %v5756, %v5754
        %v5939 = vpack.c.b16 %v5759, %v5757
        %v5940 = vpack.c.b16 %v5760, %v5758
        %v5941 = vpack.c.b16 %v5763, %v5761
        %v5942 = vpack.c.b16 %v5764, %v5762
        %v5943 = vpack.c.b16 %v5767, %v5765
        %v5944 = vpack.c.b16 %v5768, %v5766
        %v5945 = vpack.c.b16 %v5771, %v5769
        %v5946 = vpack.c.b16 %v5772, %v5770
        %v5947 = vpack.c.b16 %v5775, %v5773
        %v5948 = vpack.c.b16 %v5776, %v5774
        %v5949 = vpack.c.b16 %v5779, %v5777
        %v5950 = vpack.c.b16 %v5780, %v5778
        %v5951 = vpack.c.b16 %v5783, %v5781
        %v5952 = vpack.c.b16 %v5784, %v5782
        %v5953 = vpack.c.b16 %v5787, %v5785
        %v5954 = vpack.c.b16 %v5788, %v5786
        %v5955 = vpack.c.b16 %v5791, %v5789
        %v5956 = vpack.c.b16 %v5792, %v5790
        %v5957 = vpack.c.b16 %v5795, %v5793
        %v5958 = vpack.c.b16 %v5796, %v5794
        %v5959 = vpack.c.b16 %v5799, %v5797
        %v5960 = vpack.c.b16 %v5800, %v5798
        %v5961 = vpack.c.b16 %v5803, %v5801
        %v5962 = vpack.c.b16 %v5804, %v5802
        %v5963 = vpack.c.b16 %v5807, %v5805
        %v5964 = vpack.c.b16 %v5808, %v5806
        %v5965 = vpack.c.b16 %v5811, %v5809
        %v5966 = vpack.c.b16 %v5812, %v5810
        %v5967 = vpack.c.b16 %v5815, %v5813
        %v5968 = vpack.c.b16 %v5816, %v5814
        %v5969 = vpack.c.b16 %v5819, %v5817
        %v5970 = vpack.c.b16 %v5820, %v5818
        %v5971 = vpack.c.b16 %v5823, %v5821
        %v5972 = vpack.c.b16 %v5824, %v5822
        %v5973 = vpack.c.b16 %v5827, %v5825
        %v5974 = vpack.c.b16 %v5828, %v5826
        %v5975 = vpack.c.b16 %v5831, %v5829
        %v5976 = vpack.c.b16 %v5832, %v5830
        %v5977 = vpack.c.b16 %v5835, %v5833
        %v5978 = vpack.c.b16 %v5836, %v5834
        %v5979 = vpack.c.b16 %v5839, %v5837
        %v5980 = vpack.c.b16 %v5840, %v5838
        %v5981 = vpack.c.b16 %v5843, %v5841
        %v5982 = vpack.c.b16 %v5844, %v5842
        %v5983 = vpack.c.b16 %v5847, %v5845
        %v5984 = vpack.c.b16 %v5848, %v5846
        %v5985 = vpack.c.b16 %v5851, %v5849
        %v5986 = vpack.c.b16 %v5852, %v5850
        %v5987 = vpack.c.b16 %v5855, %v5853
        %v5988 = vpack.c.b16 %v5856, %v5854
        %v5989 = vpack.c.b16 %v5859, %v5857
        %v5990 = vpack.c.b16 %v5860, %v5858
        %v5991 = vpack.c.b16 %v5863, %v5861
        %v5992 = vpack.c.b16 %v5864, %v5862
        %6121 = vmatprep.subr.bf16.mxu0 %v5866
        %6122 = vmatpush1.bf16.msra.mxu0 %v5865
        %6123 = vmatprep.subr.bf16.mxu0 %v5868
        %6124 = vmatpush1.bf16.msra.mxu0 %v5867
        %6125 = vmatprep.subr.bf16.mxu0 %v5870
        %6126 = vmatpush1.bf16.msra.mxu0 %v5869
        %6127 = vmatprep.subr.bf16.mxu0 %v5872
        %6128 = vmatpush1.bf16.msra.mxu0 %v5871
        %6129 = vmatprep.subr.bf16.mxu0 %v5874
        %6130 = vmatpush1.bf16.msra.mxu0 %v5873
        %6131 = vmatprep.subr.bf16.mxu0 %v5876
        %6132 = vmatpush1.bf16.msra.mxu0 %v5875
        %6133 = vmatprep.subr.bf16.mxu0 %v5878
        %6134 = vmatpush1.bf16.msra.mxu0 %v5877
        %6135 = vmatprep.subr.bf16.mxu0 %v5880
        %6136 = vmatpush1.bf16.msra.mxu0 %v5879
        %6137 = vmatprep.subr.bf16.mxu0 %v5882
        %6138 = vmatpush1.bf16.msra.mxu0 %v5881
        %6139 = vmatprep.subr.bf16.mxu0 %v5884
        %6140 = vmatpush1.bf16.msra.mxu0 %v5883
        %6141 = vmatprep.subr.bf16.mxu0 %v5886
        %6142 = vmatpush1.bf16.msra.mxu0 %v5885
        %6143 = vmatprep.subr.bf16.mxu0 %v5888
        %6144 = vmatpush1.bf16.msra.mxu0 %v5887
        %6145 = vmatprep.subr.bf16.mxu0 %v5890
        %6146 = vmatpush1.bf16.msra.mxu0 %v5889
        %6147 = vmatprep.subr.bf16.mxu0 %v5892
        %6148 = vmatpush1.bf16.msra.mxu0 %v5891
        %6149 = vmatprep.subr.bf16.mxu0 %v5894
        %6150 = vmatpush1.bf16.msra.mxu0 %v5893
        %6151 = vmatprep.subr.bf16.mxu0 %v5896
        %6152 = vmatpush1.bf16.msra.mxu0 %v5895
        %6153 = vmatprep.mubr.bf16.mxu0 %v5462
        %6154 = vmatmul.mubr.bf16.gmra.mrb[0].mxu0 %v5461
        %v6155 = vpop.f32.mrb[0].mxu0
        %v6156 = vadd.f32 %v5474, %v6155
        %v6157 = vpop.f32.mrb[0].mxu0
        %v6158 = vadd.f32 %v5478, %v6157
        %v6159 = vpop.f32.mrb[0].mxu0
        %v6160 = vpop.f32.mrb[0].mxu0
        %6161 = vdwg.mxu0
        %6162 = vmatprep.subr.bf16.mxu0 %v5898
        %6163 = vmatpush1.bf16.msra.mxu0 %v5897
        %6164 = vmatprep.subr.bf16.mxu0 %v5900
        %6165 = vmatpush1.bf16.msra.mxu0 %v5899
        %6166 = vmatprep.subr.bf16.mxu0 %v5902
        %6167 = vmatpush1.bf16.msra.mxu0 %v5901
        %6168 = vmatprep.subr.bf16.mxu0 %v5904
        %6169 = vmatpush1.bf16.msra.mxu0 %v5903
        %6170 = vmatprep.subr.bf16.mxu0 %v5906
        %6171 = vmatpush1.bf16.msra.mxu0 %v5905
        %6172 = vmatprep.subr.bf16.mxu0 %v5908
        %6173 = vmatpush1.bf16.msra.mxu0 %v5907
        %6174 = vmatprep.subr.bf16.mxu0 %v5910
        %6175 = vmatpush1.bf16.msra.mxu0 %v5909
        %6176 = vmatprep.subr.bf16.mxu0 %v5912
        %6177 = vmatpush1.bf16.msra.mxu0 %v5911
        %6178 = vmatprep.subr.bf16.mxu0 %v5914
        %6179 = vmatpush1.bf16.msra.mxu0 %v5913
        %6180 = vmatprep.subr.bf16.mxu0 %v5916
        %6181 = vmatpush1.bf16.msra.mxu0 %v5915
        %6182 = vmatprep.subr.bf16.mxu0 %v5918
        %6183 = vmatpush1.bf16.msra.mxu0 %v5917
        %6184 = vmatprep.subr.bf16.mxu0 %v5920
        %6185 = vmatpush1.bf16.msra.mxu0 %v5919
        %6186 = vmatprep.subr.bf16.mxu0 %v5922
        %6187 = vmatpush1.bf16.msra.mxu0 %v5921
        %6188 = vmatprep.subr.bf16.mxu0 %v5924
        %6189 = vmatpush1.bf16.msra.mxu0 %v5923
        %6190 = vmatprep.subr.bf16.mxu0 %v5926
        %6191 = vmatpush1.bf16.msra.mxu0 %v5925
        %6192 = vmatprep.subr.bf16.mxu0 %v5928
        %6193 = vmatpush1.bf16.msra.mxu0 %v5927
        %6194 = vmatprep.mubr.bf16.mxu0 %v5464
        %6195 = vmatmul.mubr.bf16.gmra.mrb[0].mxu0 %v5463
        %v6196 = vpop.f32.mrb[0].mxu0
        %v6197 = vadd.f32 %v6156, %v6196
        %v6198 = vpop.f32.mrb[0].mxu0
        %v6199 = vadd.f32 %v6158, %v6198
        %v6200 = vpop.f32.mrb[0].mxu0
        %v6201 = vpop.f32.mrb[0].mxu0
        %6202 = vdwg.mxu0
        %6203 = vmatprep.subr.bf16.mxu0 %v5930
        %6204 = vmatpush1.bf16.msra.mxu0 %v5929
        %6205 = vmatprep.subr.bf16.mxu0 %v5932
        %6206 = vmatpush1.bf16.msra.mxu0 %v5931
        %6207 = vmatprep.subr.bf16.mxu0 %v5934
        %6208 = vmatpush1.bf16.msra.mxu0 %v5933
        %6209 = vmatprep.subr.bf16.mxu0 %v5936
        %6210 = vmatpush1.bf16.msra.mxu0 %v5935
        %6211 = vmatprep.subr.bf16.mxu0 %v5938
        %6212 = vmatpush1.bf16.msra.mxu0 %v5937
        %6213 = vmatprep.subr.bf16.mxu0 %v5940
        %6214 = vmatpush1.bf16.msra.mxu0 %v5939
        %6215 = vmatprep.subr.bf16.mxu0 %v5942
        %6216 = vmatpush1.bf16.msra.mxu0 %v5941
        %6217 = vmatprep.subr.bf16.mxu0 %v5944
        %6218 = vmatpush1.bf16.msra.mxu0 %v5943
        %6219 = vmatprep.subr.bf16.mxu0 %v5946
        %6220 = vmatpush1.bf16.msra.mxu0 %v5945
        %6221 = vmatprep.subr.bf16.mxu0 %v5948
        %6222 = vmatpush1.bf16.msra.mxu0 %v5947
        %6223 = vmatprep.subr.bf16.mxu0 %v5950
        %6224 = vmatpush1.bf16.msra.mxu0 %v5949
        %6225 = vmatprep.subr.bf16.mxu0 %v5952
        %6226 = vmatpush1.bf16.msra.mxu0 %v5951
        %6227 = vmatprep.subr.bf16.mxu0 %v5954
        %6228 = vmatpush1.bf16.msra.mxu0 %v5953
        %6229 = vmatprep.subr.bf16.mxu0 %v5956
        %6230 = vmatpush1.bf16.msra.mxu0 %v5955
        %6231 = vmatprep.subr.bf16.mxu0 %v5958
        %6232 = vmatpush1.bf16.msra.mxu0 %v5957
        %6233 = vmatprep.subr.bf16.mxu0 %v5960
        %6234 = vmatpush1.bf16.msra.mxu0 %v5959
        %6235 = vmatprep.mubr.bf16.mxu0 %v5466
        %6236 = vmatmul.mubr.bf16.gmra.mrb[0].mxu0 %v5465
        %v6237 = vpop.f32.mrb[0].mxu0
        %v6238 = vadd.f32 %v6197, %v6237
        %v6239 = vpop.f32.mrb[0].mxu0
        %v6240 = vadd.f32 %v6199, %v6239
        %v6241 = vpop.f32.mrb[0].mxu0
        %v6242 = vpop.f32.mrb[0].mxu0
        %6243 = vdwg.mxu0
        %6244 = vmatprep.subr.bf16.mxu0 %v5962
        %6245 = vmatpush1.bf16.msra.mxu0 %v5961
        %6246 = vmatprep.subr.bf16.mxu0 %v5964
        %6247 = vmatpush1.bf16.msra.mxu0 %v5963
        %6248 = vmatprep.subr.bf16.mxu0 %v5966
        %6249 = vmatpush1.bf16.msra.mxu0 %v5965
        %6250 = vmatprep.subr.bf16.mxu0 %v5968
        %6251 = vmatpush1.bf16.msra.mxu0 %v5967
        %6252 = vmatprep.subr.bf16.mxu0 %v5970
        %6253 = vmatpush1.bf16.msra.mxu0 %v5969
        %6254 = vmatprep.subr.bf16.mxu0 %v5972
        %6255 = vmatpush1.bf16.msra.mxu0 %v5971
        %6256 = vmatprep.subr.bf16.mxu0 %v5974
        %6257 = vmatpush1.bf16.msra.mxu0 %v5973
        %6258 = vmatprep.subr.bf16.mxu0 %v5976
        %6259 = vmatpush1.bf16.msra.mxu0 %v5975
        %6260 = vmatprep.subr.bf16.mxu0 %v5978
        %6261 = vmatpush1.bf16.msra.mxu0 %v5977
        %6262 = vmatprep.subr.bf16.mxu0 %v5980
        %6263 = vmatpush1.bf16.msra.mxu0 %v5979
        %6264 = vmatprep.subr.bf16.mxu0 %v5982
        %6265 = vmatpush1.bf16.msra.mxu0 %v5981
        %6266 = vmatprep.subr.bf16.mxu0 %v5984
        %6267 = vmatpush1.bf16.msra.mxu0 %v5983
        %6268 = vmatprep.subr.bf16.mxu0 %v5986
        %6269 = vmatpush1.bf16.msra.mxu0 %v5985
        %6270 = vmatprep.subr.bf16.mxu0 %v5988
        %6271 = vmatpush1.bf16.msra.mxu0 %v5987
        %6272 = vmatprep.subr.bf16.mxu0 %v5990
        %6273 = vmatpush1.bf16.msra.mxu0 %v5989
        %6274 = vmatprep.subr.bf16.mxu0 %v5992
        %6275 = vmatpush1.bf16.msra.mxu0 %v5991
        %6276 = vmatprep.mubr.bf16.mxu0 %v5468
        %6277 = vmatmul.mubr.bf16.gmra.mrb[0].mxu0 %v5467
        %v6278 = vpop.f32.mrb[0].mxu0
        %v6279 = vadd.f32 %v6238, %v6278
        %v6280 = vpop.f32.mrb[0].mxu0
        %v6281 = vadd.f32 %v6240, %v6280
        %v6282 = vpop.f32.mrb[0].mxu0
        %v6283 = vpop.f32.mrb[0].mxu0
        %6284 = vdwg.mxu0
        %v6285 = vmax.f32 %v6279, 0.0
        %v6286 = vmax.f32 %v6281, 0.0
        %v6287 = vld [vmem:[%s7] sm:$0xf]
        %v6288 = vld [vmem:[%s7 + $0x4] sm:$0xf]
        %v6289 = vld [vmem:[%s7 + $0x8] sm:$0xf]
        %v6290 = vld [vmem:[%s7 + $0xc] sm:$0xf]
        %v6291 = vld [vmem:[%s7 + $0x10] sm:$0xf]
        %v6292 = vld [vmem:[%s7 + $0x14] sm:$0xf]
        %v6293 = vld [vmem:[%s7 + $0x18] sm:$0xf]
        %v6294 = vld [vmem:[%s7 + $0x1c] sm:$0xf]
        %v6295 = vld [vmem:[%s7 + $0x20] sm:$0xf]
        %v6296 = vld [vmem:[%s7 + $0x24] sm:$0xf]
        %v6297 = vld [vmem:[%s7 + $0x28] sm:$0xf]
        %v6298 = vld [vmem:[%s7 + $0x2c] sm:$0xf]
        %v6299 = vld [vmem:[%s7 + $0x30] sm:$0xf]
        %v6300 = vld [vmem:[%s7 + $0x34] sm:$0xf]
        %v6301 = vld [vmem:[%s7 + $0x38] sm:$0xf]
        %v6302 = vld [vmem:[%s7 + $0x3c] sm:$0xf]
        %v6303 = vld [vmem:[%s7 + $0x40] sm:$0xf]
        %v6304 = vld [vmem:[%s7 + $0x44] sm:$0xf]
        %v6305 = vld [vmem:[%s7 + $0x48] sm:$0xf]
        %v6306 = vld [vmem:[%s7 + $0x4c] sm:$0xf]
        %v6307 = vld [vmem:[%s7 + $0x50] sm:$0xf]
        %v6308 = vld [vmem:[%s7 + $0x54] sm:$0xf]
        %v6309 = vld [vmem:[%s7 + $0x58] sm:$0xf]
        %v6310 = vld [vmem:[%s7 + $0x5c] sm:$0xf]
        %v6311 = vld [vmem:[%s7 + $0x60] sm:$0xf]
        %v6312 = vld [vmem:[%s7 + $0x64] sm:$0xf]
        %v6313 = vld [vmem:[%s7 + $0x68] sm:$0xf]
        %v6314 = vld [vmem:[%s7 + $0x6c] sm:$0xf]
        %v6315 = vld [vmem:[%s7 + $0x70] sm:$0xf]
        %v6316 = vld [vmem:[%s7 + $0x74] sm:$0xf]
        %v6317 = vld [vmem:[%s7 + $0x78] sm:$0xf]
        %v6318 = vld [vmem:[%s7 + $0x7c] sm:$0xf]
        %v6319 = vpack.c.bf16 %v6285, %v6285
        %v6320 = vpack.c.bf16 %v6286, %v6286
        %v6321 = vld [vmem:[%s8] sm:$0x1]
        %v6323 = vlaneseq
        %v6324 = vshrl.u32 %v6323, 7
        %v6325 = vsub.s32 0, %v6324
        %v6326 = vrot.slane %v6321, %v6325
        %v6360 = vunpack.c.l.b16 %v6287
        %v6361 = vunpack.c.l.b16 %v6288
        %v6362 = vunpack.c.l.b16 %v6289
        %v6363 = vunpack.c.l.b16 %v6290
        %v6364 = vunpack.c.l.b16 %v6291
        %v6365 = vunpack.c.l.b16 %v6292
        %v6366 = vunpack.c.l.b16 %v6293
        %v6367 = vunpack.c.l.b16 %v6294
        %v6368 = vunpack.c.l.b16 %v6295
        %v6369 = vunpack.c.l.b16 %v6296
        %v6370 = vunpack.c.l.b16 %v6297
        %v6371 = vunpack.c.l.b16 %v6298
        %v6372 = vunpack.c.l.b16 %v6299
        %v6373 = vunpack.c.l.b16 %v6300
        %v6374 = vunpack.c.l.b16 %v6301
        %v6375 = vunpack.c.l.b16 %v6302
        %v6376 = vunpack.c.l.b16 %v6303
        %v6377 = vunpack.c.l.b16 %v6304
        %v6378 = vunpack.c.l.b16 %v6305
        %v6379 = vunpack.c.l.b16 %v6306
        %v6380 = vunpack.c.l.b16 %v6307
        %v6381 = vunpack.c.l.b16 %v6308
        %v6382 = vunpack.c.l.b16 %v6309
        %v6383 = vunpack.c.l.b16 %v6310
        %v6384 = vunpack.c.l.b16 %v6311
        %v6385 = vunpack.c.l.b16 %v6312
        %v6386 = vunpack.c.l.b16 %v6313
        %v6387 = vunpack.c.l.b16 %v6314
        %v6388 = vunpack.c.l.b16 %v6315
        %v6389 = vunpack.c.l.b16 %v6316
        %v6390 = vunpack.c.l.b16 %v6317
        %v6391 = vunpack.c.l.b16 %v6318
        %v6392 = vpack.c.b16 %v6361, %v6360
        %v6393 = vpack.c.b16 %v6363, %v6362
        %v6394 = vpack.c.b16 %v6365, %v6364
        %v6395 = vpack.c.b16 %v6367, %v6366
        %v6396 = vpack.c.b16 %v6369, %v6368
        %v6397 = vpack.c.b16 %v6371, %v6370
        %v6398 = vpack.c.b16 %v6373, %v6372
        %v6399 = vpack.c.b16 %v6375, %v6374
        %v6400 = vpack.c.b16 %v6377, %v6376
        %v6401 = vpack.c.b16 %v6379, %v6378
        %v6402 = vpack.c.b16 %v6381, %v6380
        %v6403 = vpack.c.b16 %v6383, %v6382
        %v6404 = vpack.c.b16 %v6385, %v6384
        %v6405 = vpack.c.b16 %v6387, %v6386
        %v6406 = vpack.c.b16 %v6389, %v6388
        %v6407 = vpack.c.b16 %v6391, %v6390
        %6424 = vmatprep.subr.bf16.mxu0 0
        %6425 = vmatpush1.bf16.msra.mxu0 %v6392
        %6426 = vmatprep.subr.bf16.mxu0 0
        %6427 = vmatpush1.bf16.msra.mxu0 %v6393
        %6428 = vmatprep.subr.bf16.mxu0 0
        %6429 = vmatpush1.bf16.msra.mxu0 %v6394
        %6430 = vmatprep.subr.bf16.mxu0 0
        %6431 = vmatpush1.bf16.msra.mxu0 %v6395
        %6432 = vmatprep.subr.bf16.mxu0 0
        %6433 = vmatpush1.bf16.msra.mxu0 %v6396
        %6434 = vmatprep.subr.bf16.mxu0 0
        %6435 = vmatpush1.bf16.msra.mxu0 %v6397
        %6436 = vmatprep.subr.bf16.mxu0 0
        %6437 = vmatpush1.bf16.msra.mxu0 %v6398
        %6438 = vmatprep.subr.bf16.mxu0 0
        %6439 = vmatpush1.bf16.msra.mxu0 %v6399
        %6440 = vmatprep.subr.bf16.mxu0 0
        %6441 = vmatpush1.bf16.msra.mxu0 %v6400
        %6442 = vmatprep.subr.bf16.mxu0 0
        %6443 = vmatpush1.bf16.msra.mxu0 %v6401
        %6444 = vmatprep.subr.bf16.mxu0 0
        %6445 = vmatpush1.bf16.msra.mxu0 %v6402
        %6446 = vmatprep.subr.bf16.mxu0 0
        %6447 = vmatpush1.bf16.msra.mxu0 %v6403
        %6448 = vmatprep.subr.bf16.mxu0 0
        %6449 = vmatpush1.bf16.msra.mxu0 %v6404
        %6450 = vmatprep.subr.bf16.mxu0 0
        %6451 = vmatpush1.bf16.msra.mxu0 %v6405
        %6452 = vmatprep.subr.bf16.mxu0 0
        %6453 = vmatpush1.bf16.msra.mxu0 %v6406
        %6454 = vmatprep.subr.bf16.mxu0 0
        %6455 = vmatpush1.bf16.msra.mxu0 %v6407
        %6456 = vmatprep.mubr.bf16.mxu0 %v6320
        %6457 = vmatmul.mubr.bf16.gmra.mrb[0].mxu0 %v6319
        %v6458 = vpop.f32.mrb[0].mxu0
        %v6459 = vadd.f32 %v6326, %v6458
        %v6460 = vpop.f32.mrb[0].mxu0
        %v6461 = vpop.f32.mrb[0].mxu0
        %v6462 = vpop.f32.mrb[0].mxu0
        %6463 = vdwg.mxu0
        %6464 = vst.msk [vmem:[%s342] sm:$0xff] %vm1337, %v6459
        %p6465 = scmp.lt.s32.totalorder %s21, 1
        %s6466 = scalar_select %p6465, %s21, 1
        %s6467 = smul.addr %s6466, 8
        %s6468 = scalar_lea.vmem %s9, %s6467
        // Predicated region
        $region61: #{eeg_cnn_forward.1} parent=55 // pred_check
          %p6469 = pneg %p233
        $region62: #{eeg_cnn_forward.1} parent=55 // pred_check_branch
          %6471 = sbr.rel (%p6469) target = $region64
        $region63: #{eeg_cnn_forward.1} parent=55 // pred_region
          _
        $region64: #{eeg_cnn_forward.1} parent=55 // pred_fallthru
          _
      $region56: #{eeg_cnn_forward.1} parent=5 // pred_fallthru
        _
      %p6472 = scmp.le.s32.totalorder 2, %s16
      // Predicated region
      $region65: #{eeg_cnn_forward.1} parent=5 // pred_check
        %p6473 = pneg %p6472
      $region66: #{eeg_cnn_forward.1} parent=5 // pred_check_branch
        %6475 = sbr.rel (%p6473) target = $region68
      $region67: #{eeg_cnn_forward.1} parent=5 // pred_region
        %s6476 = ssub.s32 %s16, 2
        // Predicated region
        $region69: #{eeg_cnn_forward.1} parent=67 // pred_check
          %p6477 = pneg %p239
        $region70: #{eeg_cnn_forward.1} parent=67 // pred_check_branch
          %6479 = sbr.rel (%p6477) target = $region72
        $region71: #{eeg_cnn_forward.1} parent=67 // pred_region
          %p6480 = scmp.lt.s32.totalorder %s22, 1
          %s6481 = scalar_select %p6480, %s22, 1
          %s6482 = smul.addr %s6481, 8
          %s6483 = scalar_lea.vmem %s9, %s6482
        $region72: #{eeg_cnn_forward.1} parent=67 // pred_fallthru
          _
      $region68: #{eeg_cnn_forward.1} parent=5 // pred_fallthru
        _
    $region6: #{eeg_cnn_forward.1} parent=1 // loop_footer
      %s20 = sadd.s32 1, %s16
    $region7: #{eeg_cnn_forward.1} parent=1 // loop_footer_branch
      %15 = sbr.rel target = $region3
    $region8: #{eeg_cnn_forward.1} parent=1 // loop_exit
      _
    %6484 = vsyncpa [#allocation3], 1
    %s6485 = scalar_lea.sflag [#allocation3], 1
    %6486 = vsyncpa %s6485, 1

</llo_original>
